<compile_context>
chip_gen: v5e
topology: v5e:2x2
jax: 0.10.0
libtpu: 0.0.40
codegen_flags: <defaults>
</compile_context>

<pallas_src>
import functools

import jax
import jax.numpy as jnp
from jax.experimental import pallas as pl
from jax.experimental.pallas import tpu as pltpu


# ----------------------------------------------------------------------------
# Fused kernel: [optional BN-affine+ReLU on the input] -> zero-pad (halo=1) ->
# im2col -> single MXU matmul -> conv output + per-image BN partial statistics.
# One grid step per batch element.
# ----------------------------------------------------------------------------
def _conv_bn_stats_kernel(*refs, H, W, Cin, Cout, fuse_bn_relu):
    if fuse_bn_relu:
        (x_ref, w_ref, scale_ref, shift_ref,
         y_ref, sum_ref, sq_ref, xpad_scr, slab_scr) = refs
    else:
        (x_ref, w_ref,
         y_ref, sum_ref, sq_ref, xpad_scr, slab_scr) = refs

    x = x_ref[...].astype(jnp.float32)                       # (H, W, Cin)
    if fuse_bn_relu:
        # Previous layer's BatchNorm affine + ReLU, fused into this conv's input.
        scale = scale_ref[...][:, None, :]                    # (1, 1, Cin)
        shift = shift_ref[...][:, None, :]                    # (1, 1, Cin)
        x = jnp.maximum(x * scale + shift, 0.0)

    # In-kernel zero padding (pad=1). The scratch border stays zero.
    xpad_scr[...] = jnp.zeros_like(xpad_scr)
    xpad_scr[1:H + 1, 1:W + 1, :] = x

    # im2col: pack the 9 shifted windows along the channel axis of a VMEM slab,
    # then issue ONE matmul with K = 9*Cin (instead of nine K=Cin matmuls).
    for kh in range(3):
        for kw in range(3):
            j = kh * 3 + kw
            slab_scr[:, :, j * Cin:(j + 1) * Cin] = xpad_scr[kh:kh + H, kw:kw + W, :]
    slab = slab_scr[...].reshape(H * W, 9 * Cin)
    y = jnp.dot(slab, w_ref[...], preferred_element_type=jnp.float32)   # (H*W, Cout)

    # Conv output (pre-BN) + fused per-image BatchNorm partial statistics.
    y_ref[...] = y.reshape(H, W, Cout).astype(y_ref.dtype)
    sum_ref[...] = jnp.sum(y, axis=0, keepdims=True)          # (1, Cout)
    sq_ref[...] = jnp.sum(y * y, axis=0, keepdims=True)       # (1, Cout)


def conv3x3_bn_stats(x_nhwc, w, scale=None, shift=None):
    """3x3 conv (stride 1, pad 1, no bias) with optional fused input BN+ReLU.

    Returns (y, per_image_channel_sum, per_image_channel_sumsq)."""
    N, H, W, Cin = x_nhwc.shape
    Cout = w.shape[-1]
    w2d = w.reshape(9 * Cin, Cout)        # (kh,kw,Cin,Cout) -> (9*Cin, Cout), matches slab order
    fuse = scale is not None

    kern = functools.partial(_conv_bn_stats_kernel, H=H, W=W, Cin=Cin,
                             Cout=Cout, fuse_bn_relu=fuse)

    in_arrays = [x_nhwc, w2d]
    in_specs = [
        pl.BlockSpec((pl.Squeezed(), H, W, Cin), lambda n: (n, 0, 0, 0)),
        pl.BlockSpec((9 * Cin, Cout), lambda n: (0, 0)),
    ]
    if fuse:
        in_arrays += [scale, shift]
        in_specs += [pl.BlockSpec((1, Cin), lambda n: (0, 0)),
                     pl.BlockSpec((1, Cin), lambda n: (0, 0))]

    return pl.pallas_call(
        kern,
        out_shape=(jax.ShapeDtypeStruct((N, H, W, Cout), jnp.float32),
                   jax.ShapeDtypeStruct((N, 1, Cout), jnp.float32),
                   jax.ShapeDtypeStruct((N, 1, Cout), jnp.float32)),
        grid=(N,),
        in_specs=in_specs,
        out_specs=(pl.BlockSpec((pl.Squeezed(), H, W, Cout), lambda n: (n, 0, 0, 0)),
                   pl.BlockSpec((pl.Squeezed(), 1, Cout), lambda n: (n, 0, 0)),
                   pl.BlockSpec((pl.Squeezed(), 1, Cout), lambda n: (n, 0, 0))),
        scratch_shapes=[pltpu.VMEM((H + 2, W + 2, Cin), jnp.float32),
                        pltpu.VMEM((H, W, 9 * Cin), jnp.float32)],
        compiler_params=pltpu.CompilerParams(
            dimension_semantics=("parallel",)),
    )(*in_arrays)


# ----------------------------------------------------------------------------
# Final pass: BN2-affine (scale/shift precomputed from batch stats) + ReLU,
# fused with the output write.
# ----------------------------------------------------------------------------
def _bn_relu_kernel(x_ref, scale_ref, shift_ref, o_ref):
    x = x_ref[...].astype(jnp.float32)
    y = x * scale_ref[...][:, None, :] + shift_ref[...][:, None, :]
    o_ref[...] = jnp.maximum(y, 0.0).astype(o_ref.dtype)


def bn_relu(x_nhwc, scale, shift):
    N, H, W, C = x_nhwc.shape
    return pl.pallas_call(
        _bn_relu_kernel,
        out_shape=jax.ShapeDtypeStruct((N, H, W, C), jnp.float32),
        grid=(N,),
        in_specs=[
            pl.BlockSpec((pl.Squeezed(), H, W, C), lambda n: (n, 0, 0, 0)),
            pl.BlockSpec((1, C), lambda n: (0, 0)),
            pl.BlockSpec((1, C), lambda n: (0, 0)),
        ],
        out_specs=pl.BlockSpec((pl.Squeezed(), H, W, C), lambda n: (n, 0, 0, 0)),
        compiler_params=pltpu.CompilerParams(
            dimension_semantics=("parallel",)),
    )(x_nhwc, scale, shift)


# ----------------------------------------------------------------------------
# Wrapper-side epilogue: fold (sum, sumsq) into the BN scale/shift (tiny, O(C)).
# ----------------------------------------------------------------------------
def _bn_scale_shift(psum, psq, count, gamma, beta, eps):
    s = jnp.sum(psum, axis=(0, 1))                         # (C,)
    q = jnp.sum(psq, axis=(0, 1))                          # (C,)
    mean = s / count
    var = jnp.maximum(q / count - mean * mean, 0.0)        # biased var, clamped
    scale = gamma * jax.lax.rsqrt(var + eps)
    shift = beta - mean * scale
    return scale.reshape(1, -1), shift.reshape(1, -1)


# ----------------------------------------------------------------------------
# DoubleConv forward: (conv -> BN(batch stats) -> ReLU) x 2 in 3 fused passes.
# ----------------------------------------------------------------------------
def double_conv(x_nchw, params, eps=1e-5):
    x = jnp.transpose(x_nchw, (0, 2, 3, 1))                 # NCHW -> NHWC
    N, H, W, _ = x.shape
    count = N * H * W

    # Pass 1: conv1 + fused BN1 statistics.
    y1, s1, q1 = conv3x3_bn_stats(x, params["w1"])
    scale1, shift1 = _bn_scale_shift(s1, q1, count,
                                     params["gamma1"], params["beta1"], eps)

    # Pass 2: BN1+ReLU fused into conv2's input, conv2 + fused BN2 statistics.
    y2, s2, q2 = conv3x3_bn_stats(y1, params["w2"], scale=scale1, shift=shift1)
    scale2, shift2 = _bn_scale_shift(s2, q2, count,
                                     params["gamma2"], params["beta2"], eps)

    # Pass 3: BN2-affine + ReLU fused with the output write.
    out = bn_relu(y2, scale2, shift2)
    return jnp.transpose(out, (0, 3, 1, 2))                 # NHWC -> NCHW


def init_params(key, in_channels, out_channels):
    k1, k2, k3, k4, k5, k6 = jax.random.split(key, 6)
    # Conv weights stored as (kh, kw, Cin, Cout); PyTorch would be (Cout, Cin, kh, kw).
    # No conv bias: training-mode BatchNorm cancels any per-channel bias exactly.
    w1 = 0.1 * jax.random.normal(k1, (3, 3, in_channels, out_channels), jnp.float32)
    w2 = 0.1 * jax.random.normal(k2, (3, 3, out_channels, out_channels), jnp.float32)
    gamma1 = 1.0 + 0.1 * jax.random.normal(k3, (out_channels,), jnp.float32)
    beta1 = 0.1 * jax.random.normal(k4, (out_channels,), jnp.float32)
    gamma2 = 1.0 + 0.1 * jax.random.normal(k5, (out_channels,), jnp.float32)
    beta2 = 0.1 * jax.random.normal(k6, (out_channels,), jnp.float32)
    return dict(w1=w1, gamma1=gamma1, beta1=beta1,
                w2=w2, gamma2=gamma2, beta2=beta2)


# Pure-JAX reference (same math as the PyTorch module in training mode).
def _reference_double_conv(x_nchw, params, eps=1e-5):
    def conv(x, w):
        w_oihw = jnp.transpose(w, (3, 2, 0, 1))
        return jax.lax.conv_general_dilated(
            x, w_oihw, window_strides=(1, 1), padding=((1, 1), (1, 1)),
            dimension_numbers=("NCHW", "OIHW", "NCHW"),
            precision=jax.lax.Precision.HIGHEST)

    def bn_relu_ref(y, gamma, beta):
        mean = jnp.mean(y, axis=(0, 2, 3), keepdims=True)
        var = jnp.mean(jnp.square(y - mean), axis=(0, 2, 3), keepdims=True)
        yhat = (y - mean) * jax.lax.rsqrt(var + eps)
        return jnp.maximum(yhat * gamma.reshape(1, -1, 1, 1)
                           + beta.reshape(1, -1, 1, 1), 0.0)

    y = bn_relu_ref(conv(x_nchw, params["w1"]), params["gamma1"], params["beta1"])
    return bn_relu_ref(conv(y, params["w2"]), params["gamma2"], params["beta2"])


if __name__ == "__main__":
    key = jax.random.PRNGKey(0)
    kx, kp = jax.random.split(key)

    N, Cin, H, W = 2, 4, 16, 16
    Cout = 8
    x = jax.random.normal(kx, (N, Cin, H, W), jnp.float32)   # NCHW like PyTorch
    params = init_params(kp, Cin, Cout)

    out = jax.jit(double_conv)(x, params)
    out = jax.block_until_ready(out)

    assert out.shape == (N, Cout, H, W), out.shape
    assert bool(jnp.all(out >= 0.0))                          # post-ReLU

    ref = _reference_double_conv(x, params)
    assert bool(jnp.allclose(out, ref, atol=2e-2, rtol=2e-2)), \
        float(jnp.max(jnp.abs(out - ref)))

    print("KERNEL_OK")
</pallas_src>

<mosaic_0001>
module attributes {stable_mosaic.version = 11 : i64} {
  func.func @_conv_bn_stats_kernel(%arg0: i32, %arg1: memref<1x16x16x4xf32, #tpu.memory_space<vmem>>, %arg2: memref<36x8xf32, #tpu.memory_space<vmem>>, %arg3: memref<1x16x16x8xf32, #tpu.memory_space<vmem>>, %arg4: memref<1x1x8xf32, #tpu.memory_space<vmem>>, %arg5: memref<1x1x8xf32, #tpu.memory_space<vmem>>, %arg6: memref<18x18x4xf32, #tpu.memory_space<vmem>>, %arg7: memref<16x16x36xf32, #tpu.memory_space<vmem>>) attributes {dimension_semantics = [#tpu.dimension_semantics<parallel>], iteration_bounds = array<i64: 2>, scalar_prefetch = 0 : i64, scratch_operands = 2 : i64, tpu.core_type = #tpu.core_type<tc>, window_params = [{transform_indices = @transform_0, window_bounds = array<i64: 1, 16, 16, 4>}, {pipeline_mode = #tpu.pipeline_mode<synchronous>, transform_indices = @transform_1, window_bounds = array<i64: 36, 8>}, {transform_indices = @transform_2, window_bounds = array<i64: 1, 16, 16, 8>}, {transform_indices = @transform_3, window_bounds = array<i64: 1, 1, 8>}, {transform_indices = @transform_4, window_bounds = array<i64: 1, 1, 8>}]} {
    %c0 = arith.constant 0 : index
    %c0_0 = arith.constant 0 : index
    %c0_1 = arith.constant 0 : index
    %c0_2 = arith.constant 0 : index
    %0 = vector.load %arg1[%c0, %c0_0, %c0_1, %c0_2] : memref<1x16x16x4xf32, #tpu.memory_space<vmem>>, vector<1x16x16x4xf32>
    %1 = vector.shape_cast %0 : vector<1x16x16x4xf32> to vector<16x16x4xf32>
    %cst = arith.constant 0.000000e+00 : f32
    %2 = vector.broadcast %cst : f32 to vector<18x18x4xf32>
    %c0_3 = arith.constant 0 : index
    %c0_4 = arith.constant 0 : index
    %c0_5 = arith.constant 0 : index
    %3 = vector.load %arg6[%c0_3, %c0_4, %c0_5] : memref<18x18x4xf32, #tpu.memory_space<vmem>>, vector<18x18x4xf32>
    tpu.vector_store %arg6[%c0_3, %c0_4, %c0_5], %2 {strides = array<i32>} : memref<18x18x4xf32, #tpu.memory_space<vmem>>, vector<18x18x4xf32>,
    %c1 = arith.constant 1 : index
    %c1_6 = arith.constant 1 : index
    %c0_7 = arith.constant 0 : index
    %4 = vector.load %arg6[%c1, %c1_6, %c0_7] : memref<18x18x4xf32, #tpu.memory_space<vmem>>, vector<16x16x4xf32>
    tpu.vector_store %arg6[%c1, %c1_6, %c0_7], %1 {strides = array<i32>} : memref<18x18x4xf32, #tpu.memory_space<vmem>>, vector<16x16x4xf32>,
    %c0_8 = arith.constant 0 : index
    %c0_9 = arith.constant 0 : index
    %c0_10 = arith.constant 0 : index
    %5 = vector.load %arg6[%c0_8, %c0_9, %c0_10] : memref<18x18x4xf32, #tpu.memory_space<vmem>>, vector<16x16x4xf32>
    %c0_11 = arith.constant 0 : index
    %c0_12 = arith.constant 0 : index
    %c0_13 = arith.constant 0 : index
    %6 = vector.load %arg7[%c0_11, %c0_12, %c0_13] : memref<16x16x36xf32, #tpu.memory_space<vmem>>, vector<16x16x4xf32>
    tpu.vector_store %arg7[%c0_11, %c0_12, %c0_13], %5 {strides = array<i32>} : memref<16x16x36xf32, #tpu.memory_space<vmem>>, vector<16x16x4xf32>,
    %c0_14 = arith.constant 0 : index
    %c1_15 = arith.constant 1 : index
    %c0_16 = arith.constant 0 : index
    %7 = vector.load %arg6[%c0_14, %c1_15, %c0_16] : memref<18x18x4xf32, #tpu.memory_space<vmem>>, vector<16x16x4xf32>
    %c0_17 = arith.constant 0 : index
    %c0_18 = arith.constant 0 : index
    %c4 = arith.constant 4 : index
    %8 = vector.load %arg7[%c0_17, %c0_18, %c4] : memref<16x16x36xf32, #tpu.memory_space<vmem>>, vector<16x16x4xf32>
    tpu.vector_store %arg7[%c0_17, %c0_18, %c4], %7 {strides = array<i32>} : memref<16x16x36xf32, #tpu.memory_space<vmem>>, vector<16x16x4xf32>,
    %c0_19 = arith.constant 0 : index
    %c2 = arith.constant 2 : index
    %c0_20 = arith.constant 0 : index
    %9 = vector.load %arg6[%c0_19, %c2, %c0_20] : memref<18x18x4xf32, #tpu.memory_space<vmem>>, vector<16x16x4xf32>
    %c0_21 = arith.constant 0 : index
    %c0_22 = arith.constant 0 : index
    %c8 = arith.constant 8 : index
    %10 = vector.load %arg7[%c0_21, %c0_22, %c8] : memref<16x16x36xf32, #tpu.memory_space<vmem>>, vector<16x16x4xf32>
    tpu.vector_store %arg7[%c0_21, %c0_22, %c8], %9 {strides = array<i32>} : memref<16x16x36xf32, #tpu.memory_space<vmem>>, vector<16x16x4xf32>,
    %c1_23 = arith.constant 1 : index
    %c0_24 = arith.constant 0 : index
    %c0_25 = arith.constant 0 : index
    %11 = vector.load %arg6[%c1_23, %c0_24, %c0_25] : memref<18x18x4xf32, #tpu.memory_space<vmem>>, vector<16x16x4xf32>
    %c0_26 = arith.constant 0 : index
    %c0_27 = arith.constant 0 : index
    %c12 = arith.constant 12 : index
    %12 = vector.load %arg7[%c0_26, %c0_27, %c12] : memref<16x16x36xf32, #tpu.memory_space<vmem>>, vector<16x16x4xf32>
    tpu.vector_store %arg7[%c0_26, %c0_27, %c12], %11 {strides = array<i32>} : memref<16x16x36xf32, #tpu.memory_space<vmem>>, vector<16x16x4xf32>,
    %c1_28 = arith.constant 1 : index
    %c1_29 = arith.constant 1 : index
    %c0_30 = arith.constant 0 : index
    %13 = vector.load %arg6[%c1_28, %c1_29, %c0_30] : memref<18x18x4xf32, #tpu.memory_space<vmem>>, vector<16x16x4xf32>
    %c0_31 = arith.constant 0 : index
    %c0_32 = arith.constant 0 : index
    %c16 = arith.constant 16 : index
    %14 = vector.load %arg7[%c0_31, %c0_32, %c16] : memref<16x16x36xf32, #tpu.memory_space<vmem>>, vector<16x16x4xf32>
    tpu.vector_store %arg7[%c0_31, %c0_32, %c16], %13 {strides = array<i32>} : memref<16x16x36xf32, #tpu.memory_space<vmem>>, vector<16x16x4xf32>,
    %c1_33 = arith.constant 1 : index
    %c2_34 = arith.constant 2 : index
    %c0_35 = arith.constant 0 : index
    %15 = vector.load %arg6[%c1_33, %c2_34, %c0_35] : memref<18x18x4xf32, #tpu.memory_space<vmem>>, vector<16x16x4xf32>
    %c0_36 = arith.constant 0 : index
    %c0_37 = arith.constant 0 : index
    %c20 = arith.constant 20 : index
    %16 = vector.load %arg7[%c0_36, %c0_37, %c20] : memref<16x16x36xf32, #tpu.memory_space<vmem>>, vector<16x16x4xf32>
    tpu.vector_store %arg7[%c0_36, %c0_37, %c20], %15 {strides = array<i32>} : memref<16x16x36xf32, #tpu.memory_space<vmem>>, vector<16x16x4xf32>,
    %c2_38 = arith.constant 2 : index
    %c0_39 = arith.constant 0 : index
    %c0_40 = arith.constant 0 : index
    %17 = vector.load %arg6[%c2_38, %c0_39, %c0_40] : memref<18x18x4xf32, #tpu.memory_space<vmem>>, vector<16x16x4xf32>
    %c0_41 = arith.constant 0 : index
    %c0_42 = arith.constant 0 : index
    %c24 = arith.constant 24 : index
    %18 = vector.load %arg7[%c0_41, %c0_42, %c24] : memref<16x16x36xf32, #tpu.memory_space<vmem>>, vector<16x16x4xf32>
    tpu.vector_store %arg7[%c0_41, %c0_42, %c24], %17 {strides = array<i32>} : memref<16x16x36xf32, #tpu.memory_space<vmem>>, vector<16x16x4xf32>,
    %c2_43 = arith.constant 2 : index
    %c1_44 = arith.constant 1 : index
    %c0_45 = arith.constant 0 : index
    %19 = vector.load %arg6[%c2_43, %c1_44, %c0_45] : memref<18x18x4xf32, #tpu.memory_space<vmem>>, vector<16x16x4xf32>
    %c0_46 = arith.constant 0 : index
    %c0_47 = arith.constant 0 : index
    %c28 = arith.constant 28 : index
    %20 = vector.load %arg7[%c0_46, %c0_47, %c28] : memref<16x16x36xf32, #tpu.memory_space<vmem>>, vector<16x16x4xf32>
    tpu.vector_store %arg7[%c0_46, %c0_47, %c28], %19 {strides = array<i32>} : memref<16x16x36xf32, #tpu.memory_space<vmem>>, vector<16x16x4xf32>,
    %c2_48 = arith.constant 2 : index
    %c2_49 = arith.constant 2 : index
    %c0_50 = arith.constant 0 : index
    %21 = vector.load %arg6[%c2_48, %c2_49, %c0_50] : memref<18x18x4xf32, #tpu.memory_space<vmem>>, vector<16x16x4xf32>
    %c0_51 = arith.constant 0 : index
    %c0_52 = arith.constant 0 : index
    %c32 = arith.constant 32 : index
    %22 = vector.load %arg7[%c0_51, %c0_52, %c32] : memref<16x16x36xf32, #tpu.memory_space<vmem>>, vector<16x16x4xf32>
    tpu.vector_store %arg7[%c0_51, %c0_52, %c32], %21 {strides = array<i32>} : memref<16x16x36xf32, #tpu.memory_space<vmem>>, vector<16x16x4xf32>,
    %c0_53 = arith.constant 0 : index
    %c0_54 = arith.constant 0 : index
    %c0_55 = arith.constant 0 : index
    %23 = vector.load %arg7[%c0_53, %c0_54, %c0_55] : memref<16x16x36xf32, #tpu.memory_space<vmem>>, vector<16x16x36xf32>
    %24 = vector.shape_cast %23 : vector<16x16x36xf32> to vector<256x36xf32>
    %c0_56 = arith.constant 0 : index
    %c0_57 = arith.constant 0 : index
    %25 = vector.load %arg2[%c0_56, %c0_57] : memref<36x8xf32, #tpu.memory_space<vmem>>, vector<36x8xf32>
    %cst_58 = arith.constant dense<0.000000e+00> : vector<256x8xf32>
    %26 = tpu.matmul %24, %25, %cst_58 {dimension_numbers = #tpu.dot_dimension_numbers<[1], [0], [0], [1], [0, 0, 1, 1], [], []>} : vector<256x36xf32>, vector<36x8xf32>, vector<256x8xf32> -> vector<256x8xf32>
    %27 = vector.shape_cast %26 : vector<256x8xf32> to vector<16x16x8xf32>
    %c0_59 = arith.constant 0 : index
    %c0_60 = arith.constant 0 : index
    %c0_61 = arith.constant 0 : index
    %c0_62 = arith.constant 0 : index
    %28 = vector.load %arg3[%c0_59, %c0_60, %c0_61, %c0_62] : memref<1x16x16x8xf32, #tpu.memory_space<vmem>>, vector<1x16x16x8xf32>
    %29 = vector.shape_cast %28 : vector<1x16x16x8xf32> to vector<16x16x8xf32>
    %30 = vector.shape_cast %27 : vector<16x16x8xf32> to vector<1x16x16x8xf32>
    tpu.vector_store %arg3[%c0_59, %c0_60, %c0_61, %c0_62], %30 {strides = array<i32>} : memref<1x16x16x8xf32, #tpu.memory_space<vmem>>, vector<1x16x16x8xf32>,
    %cst_63 = arith.constant dense<0.000000e+00> : vector<8xf32>
    %31 = vector.multi_reduction <add>, %26, %cst_63 [0] : vector<256x8xf32> to vector<8xf32>
    %32 = vector.shape_cast %31 : vector<8xf32> to vector<1x8xf32>
    %c0_64 = arith.constant 0 : index
    %c0_65 = arith.constant 0 : index
    %c0_66 = arith.constant 0 : index
    %33 = vector.load %arg4[%c0_64, %c0_65, %c0_66] : memref<1x1x8xf32, #tpu.memory_space<vmem>>, vector<1x1x8xf32>
    %34 = vector.shape_cast %33 : vector<1x1x8xf32> to vector<1x8xf32>
    %35 = vector.shape_cast %32 : vector<1x8xf32> to vector<1x1x8xf32>
    tpu.vector_store %arg4[%c0_64, %c0_65, %c0_66], %35 {strides = array<i32>} : memref<1x1x8xf32, #tpu.memory_space<vmem>>, vector<1x1x8xf32>,
    %36 = arith.mulf %26, %26 : vector<256x8xf32>
    %cst_67 = arith.constant dense<0.000000e+00> : vector<8xf32>
    %37 = vector.multi_reduction <add>, %36, %cst_67 [0] : vector<256x8xf32> to vector<8xf32>
    %38 = vector.shape_cast %37 : vector<8xf32> to vector<1x8xf32>
    %c0_68 = arith.constant 0 : index
    %c0_69 = arith.constant 0 : index
    %c0_70 = arith.constant 0 : index
    %39 = vector.load %arg5[%c0_68, %c0_69, %c0_70] : memref<1x1x8xf32, #tpu.memory_space<vmem>>, vector<1x1x8xf32>
    %40 = vector.shape_cast %39 : vector<1x1x8xf32> to vector<1x8xf32>
    %41 = vector.shape_cast %38 : vector<1x8xf32> to vector<1x1x8xf32>
    tpu.vector_store %arg5[%c0_68, %c0_69, %c0_70], %41 {strides = array<i32>} : memref<1x1x8xf32, #tpu.memory_space<vmem>>, vector<1x1x8xf32>,
    return
  }
  func.func @transform_0(%arg0: i32) -> (i32, i32, i32, i32) {
    %c0_i32 = arith.constant 0 : i32
    %c0_i32_0 = arith.constant 0 : i32
    %c0_i32_1 = arith.constant 0 : i32
    %c0_i32_2 = arith.constant 0 : i32
    return %arg0, %c0_i32, %c0_i32_0, %c0_i32_1 : i32, i32, i32, i32
  }
  func.func @transform_1(%arg0: i32) -> (i32, i32) {
    %c0_i32 = arith.constant 0 : i32
    %c0_i32_0 = arith.constant 0 : i32
    %c0_i32_1 = arith.constant 0 : i32
    return %c0_i32, %c0_i32_0 : i32, i32
  }
  func.func @transform_2(%arg0: i32) -> (i32, i32, i32, i32) {
    %c0_i32 = arith.constant 0 : i32
    %c0_i32_0 = arith.constant 0 : i32
    %c0_i32_1 = arith.constant 0 : i32
    %c0_i32_2 = arith.constant 0 : i32
    return %arg0, %c0_i32, %c0_i32_0, %c0_i32_1 : i32, i32, i32, i32
  }
  func.func @transform_3(%arg0: i32) -> (i32, i32, i32) {
    %c0_i32 = arith.constant 0 : i32
    %c0_i32_0 = arith.constant 0 : i32
    %c0_i32_1 = arith.constant 0 : i32
    return %arg0, %c0_i32, %c0_i32_0 : i32, i32, i32
  }
  func.func @transform_4(%arg0: i32) -> (i32, i32, i32) {
    %c0_i32 = arith.constant 0 : i32
    %c0_i32_0 = arith.constant 0 : i32
    %c0_i32_1 = arith.constant 0 : i32
    return %arg0, %c0_i32, %c0_i32_0 : i32, i32, i32
  }
}

module attributes {stable_mosaic.version = 11 : i64} {
  func.func @_conv_bn_stats_kernel(%arg0: i32, %arg1: memref<1x16x16x8xf32, #tpu.memory_space<vmem>>, %arg2: memref<72x8xf32, #tpu.memory_space<vmem>>, %arg3: memref<1x8xf32, #tpu.memory_space<vmem>>, %arg4: memref<1x8xf32, #tpu.memory_space<vmem>>, %arg5: memref<1x16x16x8xf32, #tpu.memory_space<vmem>>, %arg6: memref<1x1x8xf32, #tpu.memory_space<vmem>>, %arg7: memref<1x1x8xf32, #tpu.memory_space<vmem>>, %arg8: memref<18x18x8xf32, #tpu.memory_space<vmem>>, %arg9: memref<16x16x72xf32, #tpu.memory_space<vmem>>) attributes {dimension_semantics = [#tpu.dimension_semantics<parallel>], iteration_bounds = array<i64: 2>, scalar_prefetch = 0 : i64, scratch_operands = 2 : i64, tpu.core_type = #tpu.core_type<tc>, window_params = [{transform_indices = @transform_0, window_bounds = array<i64: 1, 16, 16, 8>}, {pipeline_mode = #tpu.pipeline_mode<synchronous>, transform_indices = @transform_1, window_bounds = array<i64: 72, 8>}, {pipeline_mode = #tpu.pipeline_mode<synchronous>, transform_indices = @transform_2, window_bounds = array<i64: 1, 8>}, {pipeline_mode = #tpu.pipeline_mode<synchronous>, transform_indices = @transform_3, window_bounds = array<i64: 1, 8>}, {transform_indices = @transform_4, window_bounds = array<i64: 1, 16, 16, 8>}, {transform_indices = @transform_5, window_bounds = array<i64: 1, 1, 8>}, {transform_indices = @transform_6, window_bounds = array<i64: 1, 1, 8>}]} {
    %c0 = arith.constant 0 : index
    %c0_0 = arith.constant 0 : index
    %c0_1 = arith.constant 0 : index
    %c0_2 = arith.constant 0 : index
    %0 = vector.load %arg1[%c0, %c0_0, %c0_1, %c0_2] : memref<1x16x16x8xf32, #tpu.memory_space<vmem>>, vector<1x16x16x8xf32>
    %1 = vector.shape_cast %0 : vector<1x16x16x8xf32> to vector<16x16x8xf32>
    %c0_3 = arith.constant 0 : index
    %c0_4 = arith.constant 0 : index
    %2 = vector.load %arg3[%c0_3, %c0_4] : memref<1x8xf32, #tpu.memory_space<vmem>>, vector<1x8xf32>
    %3 = vector.shape_cast %2 : vector<1x8xf32> to vector<1x1x8xf32>
    %c0_5 = arith.constant 0 : index
    %c0_6 = arith.constant 0 : index
    %4 = vector.load %arg4[%c0_5, %c0_6] : memref<1x8xf32, #tpu.memory_space<vmem>>, vector<1x8xf32>
    %5 = vector.shape_cast %4 : vector<1x8xf32> to vector<1x1x8xf32>
    %6 = vector.broadcast %3 : vector<1x1x8xf32> to vector<16x16x8xf32>
    %7 = arith.mulf %1, %6 : vector<16x16x8xf32>
    %8 = vector.broadcast %5 : vector<1x1x8xf32> to vector<16x16x8xf32>
    %9 = arith.addf %7, %8 : vector<16x16x8xf32>
    %cst = arith.constant 0.000000e+00 : f32
    %10 = vector.broadcast %cst : f32 to vector<16x16x8xf32>
    %11 = arith.maximumf %9, %10 : vector<16x16x8xf32>
    %cst_7 = arith.constant 0.000000e+00 : f32
    %12 = vector.broadcast %cst_7 : f32 to vector<18x18x8xf32>
    %c0_8 = arith.constant 0 : index
    %c0_9 = arith.constant 0 : index
    %c0_10 = arith.constant 0 : index
    %13 = vector.load %arg8[%c0_8, %c0_9, %c0_10] : memref<18x18x8xf32, #tpu.memory_space<vmem>>, vector<18x18x8xf32>
    tpu.vector_store %arg8[%c0_8, %c0_9, %c0_10], %12 {strides = array<i32>} : memref<18x18x8xf32, #tpu.memory_space<vmem>>, vector<18x18x8xf32>,
    %c1 = arith.constant 1 : index
    %c1_11 = arith.constant 1 : index
    %c0_12 = arith.constant 0 : index
    %14 = vector.load %arg8[%c1, %c1_11, %c0_12] : memref<18x18x8xf32, #tpu.memory_space<vmem>>, vector<16x16x8xf32>
    tpu.vector_store %arg8[%c1, %c1_11, %c0_12], %11 {strides = array<i32>} : memref<18x18x8xf32, #tpu.memory_space<vmem>>, vector<16x16x8xf32>,
    %c0_13 = arith.constant 0 : index
    %c0_14 = arith.constant 0 : index
    %c0_15 = arith.constant 0 : index
    %15 = vector.load %arg8[%c0_13, %c0_14, %c0_15] : memref<18x18x8xf32, #tpu.memory_space<vmem>>, vector<16x16x8xf32>
    %c0_16 = arith.constant 0 : index
    %c0_17 = arith.constant 0 : index
    %c0_18 = arith.constant 0 : index
    %16 = vector.load %arg9[%c0_16, %c0_17, %c0_18] : memref<16x16x72xf32, #tpu.memory_space<vmem>>, vector<16x16x8xf32>
    tpu.vector_store %arg9[%c0_16, %c0_17, %c0_18], %15 {strides = array<i32>} : memref<16x16x72xf32, #tpu.memory_space<vmem>>, vector<16x16x8xf32>,
    %c0_19 = arith.constant 0 : index
    %c1_20 = arith.constant 1 : index
    %c0_21 = arith.constant 0 : index
    %17 = vector.load %arg8[%c0_19, %c1_20, %c0_21] : memref<18x18x8xf32, #tpu.memory_space<vmem>>, vector<16x16x8xf32>
    %c0_22 = arith.constant 0 : index
    %c0_23 = arith.constant 0 : index
    %c8 = arith.constant 8 : index
    %18 = vector.load %arg9[%c0_22, %c0_23, %c8] : memref<16x16x72xf32, #tpu.memory_space<vmem>>, vector<16x16x8xf32>
    tpu.vector_store %arg9[%c0_22, %c0_23, %c8], %17 {strides = array<i32>} : memref<16x16x72xf32, #tpu.memory_space<vmem>>, vector<16x16x8xf32>,
    %c0_24 = arith.constant 0 : index
    %c2 = arith.constant 2 : index
    %c0_25 = arith.constant 0 : index
    %19 = vector.load %arg8[%c0_24, %c2, %c0_25] : memref<18x18x8xf32, #tpu.memory_space<vmem>>, vector<16x16x8xf32>
    %c0_26 = arith.constant 0 : index
    %c0_27 = arith.constant 0 : index
    %c16 = arith.constant 16 : index
    %20 = vector.load %arg9[%c0_26, %c0_27, %c16] : memref<16x16x72xf32, #tpu.memory_space<vmem>>, vector<16x16x8xf32>
    tpu.vector_store %arg9[%c0_26, %c0_27, %c16], %19 {strides = array<i32>} : memref<16x16x72xf32, #tpu.memory_space<vmem>>, vector<16x16x8xf32>,
    %c1_28 = arith.constant 1 : index
    %c0_29 = arith.constant 0 : index
    %c0_30 = arith.constant 0 : index
    %21 = vector.load %arg8[%c1_28, %c0_29, %c0_30] : memref<18x18x8xf32, #tpu.memory_space<vmem>>, vector<16x16x8xf32>
    %c0_31 = arith.constant 0 : index
    %c0_32 = arith.constant 0 : index
    %c24 = arith.constant 24 : index
    %22 = vector.load %arg9[%c0_31, %c0_32, %c24] : memref<16x16x72xf32, #tpu.memory_space<vmem>>, vector<16x16x8xf32>
    tpu.vector_store %arg9[%c0_31, %c0_32, %c24], %21 {strides = array<i32>} : memref<16x16x72xf32, #tpu.memory_space<vmem>>, vector<16x16x8xf32>,
    %c1_33 = arith.constant 1 : index
    %c1_34 = arith.constant 1 : index
    %c0_35 = arith.constant 0 : index
    %23 = vector.load %arg8[%c1_33, %c1_34, %c0_35] : memref<18x18x8xf32, #tpu.memory_space<vmem>>, vector<16x16x8xf32>
    %c0_36 = arith.constant 0 : index
    %c0_37 = arith.constant 0 : index
    %c32 = arith.constant 32 : index
    %24 = vector.load %arg9[%c0_36, %c0_37, %c32] : memref<16x16x72xf32, #tpu.memory_space<vmem>>, vector<16x16x8xf32>
    tpu.vector_store %arg9[%c0_36, %c0_37, %c32], %23 {strides = array<i32>} : memref<16x16x72xf32, #tpu.memory_space<vmem>>, vector<16x16x8xf32>,
    %c1_38 = arith.constant 1 : index
    %c2_39 = arith.constant 2 : index
    %c0_40 = arith.constant 0 : index
    %25 = vector.load %arg8[%c1_38, %c2_39, %c0_40] : memref<18x18x8xf32, #tpu.memory_space<vmem>>, vector<16x16x8xf32>
    %c0_41 = arith.constant 0 : index
    %c0_42 = arith.constant 0 : index
    %c40 = arith.constant 40 : index
    %26 = vector.load %arg9[%c0_41, %c0_42, %c40] : memref<16x16x72xf32, #tpu.memory_space<vmem>>, vector<16x16x8xf32>
    tpu.vector_store %arg9[%c0_41, %c0_42, %c40], %25 {strides = array<i32>} : memref<16x16x72xf32, #tpu.memory_space<vmem>>, vector<16x16x8xf32>,
    %c2_43 = arith.constant 2 : index
    %c0_44 = arith.constant 0 : index
    %c0_45 = arith.constant 0 : index
    %27 = vector.load %arg8[%c2_43, %c0_44, %c0_45] : memref<18x18x8xf32, #tpu.memory_space<vmem>>, vector<16x16x8xf32>
    %c0_46 = arith.constant 0 : index
    %c0_47 = arith.constant 0 : index
    %c48 = arith.constant 48 : index
    %28 = vector.load %arg9[%c0_46, %c0_47, %c48] : memref<16x16x72xf32, #tpu.memory_space<vmem>>, vector<16x16x8xf32>
    tpu.vector_store %arg9[%c0_46, %c0_47, %c48], %27 {strides = array<i32>} : memref<16x16x72xf32, #tpu.memory_space<vmem>>, vector<16x16x8xf32>,
    %c2_48 = arith.constant 2 : index
    %c1_49 = arith.constant 1 : index
    %c0_50 = arith.constant 0 : index
    %29 = vector.load %arg8[%c2_48, %c1_49, %c0_50] : memref<18x18x8xf32, #tpu.memory_space<vmem>>, vector<16x16x8xf32>
    %c0_51 = arith.constant 0 : index
    %c0_52 = arith.constant 0 : index
    %c56 = arith.constant 56 : index
    %30 = vector.load %arg9[%c0_51, %c0_52, %c56] : memref<16x16x72xf32, #tpu.memory_space<vmem>>, vector<16x16x8xf32>
    tpu.vector_store %arg9[%c0_51, %c0_52, %c56], %29 {strides = array<i32>} : memref<16x16x72xf32, #tpu.memory_space<vmem>>, vector<16x16x8xf32>,
    %c2_53 = arith.constant 2 : index
    %c2_54 = arith.constant 2 : index
    %c0_55 = arith.constant 0 : index
    %31 = vector.load %arg8[%c2_53, %c2_54, %c0_55] : memref<18x18x8xf32, #tpu.memory_space<vmem>>, vector<16x16x8xf32>
    %c0_56 = arith.constant 0 : index
    %c0_57 = arith.constant 0 : index
    %c64 = arith.constant 64 : index
    %32 = vector.load %arg9[%c0_56, %c0_57, %c64] : memref<16x16x72xf32, #tpu.memory_space<vmem>>, vector<16x16x8xf32>
    tpu.vector_store %arg9[%c0_56, %c0_57, %c64], %31 {strides = array<i32>} : memref<16x16x72xf32, #tpu.memory_space<vmem>>, vector<16x16x8xf32>,
    %c0_58 = arith.constant 0 : index
    %c0_59 = arith.constant 0 : index
    %c0_60 = arith.constant 0 : index
    %33 = vector.load %arg9[%c0_58, %c0_59, %c0_60] : memref<16x16x72xf32, #tpu.memory_space<vmem>>, vector<16x16x72xf32>
    %34 = vector.shape_cast %33 : vector<16x16x72xf32> to vector<256x72xf32>
    %c0_61 = arith.constant 0 : index
    %c0_62 = arith.constant 0 : index
    %35 = vector.load %arg2[%c0_61, %c0_62] : memref<72x8xf32, #tpu.memory_space<vmem>>, vector<72x8xf32>
    %cst_63 = arith.constant dense<0.000000e+00> : vector<256x8xf32>
    %36 = tpu.matmul %34, %35, %cst_63 {dimension_numbers = #tpu.dot_dimension_numbers<[1], [0], [0], [1], [0, 0, 1, 1], [], []>} : vector<256x72xf32>, vector<72x8xf32>, vector<256x8xf32> -> vector<256x8xf32>
    %37 = vector.shape_cast %36 : vector<256x8xf32> to vector<16x16x8xf32>
    %c0_64 = arith.constant 0 : index
    %c0_65 = arith.constant 0 : index
    %c0_66 = arith.constant 0 : index
    %c0_67 = arith.constant 0 : index
    %38 = vector.load %arg5[%c0_64, %c0_65, %c0_66, %c0_67] : memref<1x16x16x8xf32, #tpu.memory_space<vmem>>, vector<1x16x16x8xf32>
    %39 = vector.shape_cast %38 : vector<1x16x16x8xf32> to vector<16x16x8xf32>
    %40 = vector.shape_cast %37 : vector<16x16x8xf32> to vector<1x16x16x8xf32>
    tpu.vector_store %arg5[%c0_64, %c0_65, %c0_66, %c0_67], %40 {strides = array<i32>} : memref<1x16x16x8xf32, #tpu.memory_space<vmem>>, vector<1x16x16x8xf32>,
    %cst_68 = arith.constant dense<0.000000e+00> : vector<8xf32>
    %41 = vector.multi_reduction <add>, %36, %cst_68 [0] : vector<256x8xf32> to vector<8xf32>
    %42 = vector.shape_cast %41 : vector<8xf32> to vector<1x8xf32>
    %c0_69 = arith.constant 0 : index
    %c0_70 = arith.constant 0 : index
    %c0_71 = arith.constant 0 : index
    %43 = vector.load %arg6[%c0_69, %c0_70, %c0_71] : memref<1x1x8xf32, #tpu.memory_space<vmem>>, vector<1x1x8xf32>
    %44 = vector.shape_cast %43 : vector<1x1x8xf32> to vector<1x8xf32>
    %45 = vector.shape_cast %42 : vector<1x8xf32> to vector<1x1x8xf32>
    tpu.vector_store %arg6[%c0_69, %c0_70, %c0_71], %45 {strides = array<i32>} : memref<1x1x8xf32, #tpu.memory_space<vmem>>, vector<1x1x8xf32>,
    %46 = arith.mulf %36, %36 : vector<256x8xf32>
    %cst_72 = arith.constant dense<0.000000e+00> : vector<8xf32>
    %47 = vector.multi_reduction <add>, %46, %cst_72 [0] : vector<256x8xf32> to vector<8xf32>
    %48 = vector.shape_cast %47 : vector<8xf32> to vector<1x8xf32>
    %c0_73 = arith.constant 0 : index
    %c0_74 = arith.constant 0 : index
    %c0_75 = arith.constant 0 : index
    %49 = vector.load %arg7[%c0_73, %c0_74, %c0_75] : memref<1x1x8xf32, #tpu.memory_space<vmem>>, vector<1x1x8xf32>
    %50 = vector.shape_cast %49 : vector<1x1x8xf32> to vector<1x8xf32>
    %51 = vector.shape_cast %48 : vector<1x8xf32> to vector<1x1x8xf32>
    tpu.vector_store %arg7[%c0_73, %c0_74, %c0_75], %51 {strides = array<i32>} : memref<1x1x8xf32, #tpu.memory_space<vmem>>, vector<1x1x8xf32>,
    return
  }
  func.func @transform_0(%arg0: i32) -> (i32, i32, i32, i32) {
    %c0_i32 = arith.constant 0 : i32
    %c0_i32_0 = arith.constant 0 : i32
    %c0_i32_1 = arith.constant 0 : i32
    %c0_i32_2 = arith.constant 0 : i32
    return %arg0, %c0_i32, %c0_i32_0, %c0_i32_1 : i32, i32, i32, i32
  }
  func.func @transform_1(%arg0: i32) -> (i32, i32) {
    %c0_i32 = arith.constant 0 : i32
    %c0_i32_0 = arith.constant 0 : i32
    %c0_i32_1 = arith.constant 0 : i32
    return %c0_i32, %c0_i32_0 : i32, i32
  }
  func.func @transform_2(%arg0: i32) -> (i32, i32) {
    %c0_i32 = arith.constant 0 : i32
    %c0_i32_0 = arith.constant 0 : i32
    %c0_i32_1 = arith.constant 0 : i32
    return %c0_i32, %c0_i32_0 : i32, i32
  }
  func.func @transform_3(%arg0: i32) -> (i32, i32) {
    %c0_i32 = arith.constant 0 : i32
    %c0_i32_0 = arith.constant 0 : i32
    %c0_i32_1 = arith.constant 0 : i32
    return %c0_i32, %c0_i32_0 : i32, i32
  }
  func.func @transform_4(%arg0: i32) -> (i32, i32, i32, i32) {
    %c0_i32 = arith.constant 0 : i32
    %c0_i32_0 = arith.constant 0 : i32
    %c0_i32_1 = arith.constant 0 : i32
    %c0_i32_2 = arith.constant 0 : i32
    return %arg0, %c0_i32, %c0_i32_0, %c0_i32_1 : i32, i32, i32, i32
  }
  func.func @transform_5(%arg0: i32) -> (i32, i32, i32) {
    %c0_i32 = arith.constant 0 : i32
    %c0_i32_0 = arith.constant 0 : i32
    %c0_i32_1 = arith.constant 0 : i32
    return %arg0, %c0_i32, %c0_i32_0 : i32, i32, i32
  }
  func.func @transform_6(%arg0: i32) -> (i32, i32, i32) {
    %c0_i32 = arith.constant 0 : i32
    %c0_i32_0 = arith.constant 0 : i32
    %c0_i32_1 = arith.constant 0 : i32
    return %arg0, %c0_i32, %c0_i32_0 : i32, i32, i32
  }
}

module attributes {stable_mosaic.version = 11 : i64} {
  func.func @_bn_relu_kernel(%arg0: i32, %arg1: memref<1x16x16x8xf32, #tpu.memory_space<vmem>>, %arg2: memref<1x8xf32, #tpu.memory_space<vmem>>, %arg3: memref<1x8xf32, #tpu.memory_space<vmem>>, %arg4: memref<1x16x16x8xf32, #tpu.memory_space<vmem>>) attributes {dimension_semantics = [#tpu.dimension_semantics<parallel>], iteration_bounds = array<i64: 2>, scalar_prefetch = 0 : i64, scratch_operands = 0 : i64, tpu.core_type = #tpu.core_type<tc>, window_params = [{transform_indices = @transform_0, window_bounds = array<i64: 1, 16, 16, 8>}, {pipeline_mode = #tpu.pipeline_mode<synchronous>, transform_indices = @transform_1, window_bounds = array<i64: 1, 8>}, {pipeline_mode = #tpu.pipeline_mode<synchronous>, transform_indices = @transform_2, window_bounds = array<i64: 1, 8>}, {transform_indices = @transform_3, window_bounds = array<i64: 1, 16, 16, 8>}]} {
    %c0 = arith.constant 0 : index
    %c0_0 = arith.constant 0 : index
    %c0_1 = arith.constant 0 : index
    %c0_2 = arith.constant 0 : index
    %0 = vector.load %arg1[%c0, %c0_0, %c0_1, %c0_2] : memref<1x16x16x8xf32, #tpu.memory_space<vmem>>, vector<1x16x16x8xf32>
    %1 = vector.shape_cast %0 : vector<1x16x16x8xf32> to vector<16x16x8xf32>
    %c0_3 = arith.constant 0 : index
    %c0_4 = arith.constant 0 : index
    %2 = vector.load %arg2[%c0_3, %c0_4] : memref<1x8xf32, #tpu.memory_space<vmem>>, vector<1x8xf32>
    %3 = vector.shape_cast %2 : vector<1x8xf32> to vector<1x1x8xf32>
    %4 = vector.broadcast %3 : vector<1x1x8xf32> to vector<16x16x8xf32>
    %5 = arith.mulf %1, %4 : vector<16x16x8xf32>
    %c0_5 = arith.constant 0 : index
    %c0_6 = arith.constant 0 : index
    %6 = vector.load %arg3[%c0_5, %c0_6] : memref<1x8xf32, #tpu.memory_space<vmem>>, vector<1x8xf32>
    %7 = vector.shape_cast %6 : vector<1x8xf32> to vector<1x1x8xf32>
    %8 = vector.broadcast %7 : vector<1x1x8xf32> to vector<16x16x8xf32>
    %9 = arith.addf %5, %8 : vector<16x16x8xf32>
    %cst = arith.constant 0.000000e+00 : f32
    %10 = vector.broadcast %cst : f32 to vector<16x16x8xf32>
    %11 = arith.maximumf %9, %10 : vector<16x16x8xf32>
    %c0_7 = arith.constant 0 : index
    %c0_8 = arith.constant 0 : index
    %c0_9 = arith.constant 0 : index
    %c0_10 = arith.constant 0 : index
    %12 = vector.load %arg4[%c0_7, %c0_8, %c0_9, %c0_10] : memref<1x16x16x8xf32, #tpu.memory_space<vmem>>, vector<1x16x16x8xf32>
    %13 = vector.shape_cast %12 : vector<1x16x16x8xf32> to vector<16x16x8xf32>
    %14 = vector.shape_cast %11 : vector<16x16x8xf32> to vector<1x16x16x8xf32>
    tpu.vector_store %arg4[%c0_7, %c0_8, %c0_9, %c0_10], %14 {strides = array<i32>} : memref<1x16x16x8xf32, #tpu.memory_space<vmem>>, vector<1x16x16x8xf32>,
    return
  }
  func.func @transform_0(%arg0: i32) -> (i32, i32, i32, i32) {
    %c0_i32 = arith.constant 0 : i32
    %c0_i32_0 = arith.constant 0 : i32
    %c0_i32_1 = arith.constant 0 : i32
    %c0_i32_2 = arith.constant 0 : i32
    return %arg0, %c0_i32, %c0_i32_0, %c0_i32_1 : i32, i32, i32, i32
  }
  func.func @transform_1(%arg0: i32) -> (i32, i32) {
    %c0_i32 = arith.constant 0 : i32
    %c0_i32_0 = arith.constant 0 : i32
    %c0_i32_1 = arith.constant 0 : i32
    return %c0_i32, %c0_i32_0 : i32, i32
  }
  func.func @transform_2(%arg0: i32) -> (i32, i32) {
    %c0_i32 = arith.constant 0 : i32
    %c0_i32_0 = arith.constant 0 : i32
    %c0_i32_1 = arith.constant 0 : i32
    return %c0_i32, %c0_i32_0 : i32, i32
  }
  func.func @transform_3(%arg0: i32) -> (i32, i32, i32, i32) {
    %c0_i32 = arith.constant 0 : i32
    %c0_i32_0 = arith.constant 0 : i32
    %c0_i32_1 = arith.constant 0 : i32
    %c0_i32_2 = arith.constant 0 : i32
    return %arg0, %c0_i32, %c0_i32_0, %c0_i32_1 : i32, i32, i32, i32
  }
}

</mosaic_0001>

<llo_original>
// kernel: double_conv.5
$region0: #{double_conv.5}
  #allocation0 [shape = 'u32[]', space=smem, size = 0x4, offset = 0x4, fixed_abs, tag = 'smem constant byte address 0x4 - core index']
  #allocation1 [shape = 'u32[72,128]{1,0:T(1,128)}', space=vmem, size = 0x9000, scoped, tag = 'internal scratch']
  %s0 = inlined_call_operand.vmem [shape: f32[2,16,16,8], index: 0, kind: input, shape index: {}]
  %s1 = inlined_call_operand.vmem [shape: f32[1,8], index: 1, kind: input, shape index: {}]
  %s2 = inlined_call_operand.vmem [shape: f32[1,8], index: 2, kind: input, shape index: {}]
  %s3 = inlined_call_operand.vmem [shape: f32[2,16,16,8], index: 3, kind: output, shape index: {}]
  %s4 = sld [smem:[#allocation0]]
  $region45: #{double_conv.5} parent=0
    _
  %s6 = ssub.s32 1, %s4
  %s7 = scalar_select 0, %s6, %s4
  loop: start=0, step=1, limit=4
  $region2: #{double_conv.5} parent=0 // loop_pre_header
    _
  $region3: #{double_conv.5} parent=0 // loop_header
    %s9 = sphi 0, %s13
    %p10 = scmp.ge.s32.totalorder %s9, 4
    %s19 = sphi 0, %s21
    %s22 = sphi 0, %s19
    %s23 = sphi 0, %s22
    %s39 = sphi 0, %s23
    %s43 = sphi 0, %s43
    %s45 = sphi 0, %s43
    %s46 = sphi 0, %s45
    %s60 = sphi 0, %s46
    %s64 = sphi 0, %s64
    %s66 = sphi 0, %s64
    %s67 = sphi 0, %s66
    %s81 = sphi 0, %s67
    %s87 = sphi 0, %s89
    %s90 = sphi 0, %s87
    %s91 = sphi 0, %s90
    %s107 = sphi 0, %s91
  $region4: #{double_conv.5} parent=0 // loop_header_branch
    %12 = sbr.rel (%p10) target = $region8
  $region5: #{double_conv.5} parent=0 // loop_body
    %s14 = ssub.s32 %s9, 1
    %s15 = ssub.s32 %s9, 2
    %s16 = sadd.s32 %s9, 1
    %s17 = ssub.s32 %s9, %s16
    %p18 = scmp.eq.s32.totalorder %s17, 0
    %s20 = sadd.s32 %s19, 1
    %s21 = scalar_select %p18, %s19, %s20
    %p24 = pneg %p18
    %p25 = scmp.eq.s32.totalorder %s9, 1
    %p26 = por %p24, %p25
    %p27 = scmp.ne.s32.totalorder %s19, %s22
    %p28 = scmp.eq.s32.totalorder %s9, 0
    %p29 = por %p27, %p28
    %p30 = scmp.ne.s32.totalorder %s19, %s22
    %p31 = scmp.eq.s32.totalorder %s14, 1
    %p32 = por %p30, %p31
    %p33 = scmp.ne.s32.totalorder %s22, %s23
    %p34 = scmp.eq.s32.totalorder %s14, 0
    %p35 = por %p33, %p34
    %p36 = scmp.ne.s32.totalorder %s22, %s23
    %p37 = scmp.eq.s32.totalorder %s15, 1
    %p38 = por %p36, %p37
    %p40 = scmp.ne.s32.totalorder %s23, %s39
    %p41 = scmp.eq.s32.totalorder %s15, 0
    %p42 = por %p40, %p41
    %s44 = sadd.s32 %s43, 1
    %p47 = scmp.eq.s32.totalorder %s9, 1
    %p48 = scmp.ne.s32.totalorder %s43, %s45
    %p49 = scmp.eq.s32.totalorder %s9, 0
    %p50 = por %p48, %p49
    %p51 = scmp.ne.s32.totalorder %s43, %s45
    %p52 = scmp.eq.s32.totalorder %s14, 1
    %p53 = por %p51, %p52
    %p54 = scmp.ne.s32.totalorder %s45, %s46
    %p55 = scmp.eq.s32.totalorder %s14, 0
    %p56 = por %p54, %p55
    %p57 = scmp.ne.s32.totalorder %s45, %s46
    %p58 = scmp.eq.s32.totalorder %s15, 1
    %p59 = por %p57, %p58
    %p61 = scmp.ne.s32.totalorder %s46, %s60
    %p62 = scmp.eq.s32.totalorder %s15, 0
    %p63 = por %p61, %p62
    %s65 = sadd.s32 %s64, 1
    %p68 = scmp.eq.s32.totalorder %s9, 1
    %p69 = scmp.ne.s32.totalorder %s64, %s66
    %p70 = scmp.eq.s32.totalorder %s9, 0
    %p71 = por %p69, %p70
    %p72 = scmp.ne.s32.totalorder %s64, %s66
    %p73 = scmp.eq.s32.totalorder %s14, 1
    %p74 = por %p72, %p73
    %p75 = scmp.ne.s32.totalorder %s66, %s67
    %p76 = scmp.eq.s32.totalorder %s14, 0
    %p77 = por %p75, %p76
    %p78 = scmp.ne.s32.totalorder %s66, %s67
    %p79 = scmp.eq.s32.totalorder %s15, 1
    %p80 = por %p78, %p79
    %p82 = scmp.ne.s32.totalorder %s67, %s81
    %p83 = scmp.eq.s32.totalorder %s15, 0
    %p84 = por %p82, %p83
    %s85 = ssub.s32 %s9, %s16
    %p86 = scmp.eq.s32.totalorder %s85, 0
    %s88 = sadd.s32 %s87, 1
    %s89 = scalar_select %p86, %s87, %s88
    %p92 = pneg %p86
    %p93 = scmp.eq.s32.totalorder %s9, 1
    %p94 = por %p92, %p93
    %p95 = scmp.ne.s32.totalorder %s87, %s90
    %p96 = scmp.eq.s32.totalorder %s9, 0
    %p97 = por %p95, %p96
    %p98 = scmp.ne.s32.totalorder %s87, %s90
    %p99 = scmp.eq.s32.totalorder %s14, 1
    %p100 = por %p98, %p99
    %p101 = scmp.ne.s32.totalorder %s90, %s91
    %p102 = scmp.eq.s32.totalorder %s14, 0
    %p103 = por %p101, %p102
    %p104 = scmp.ne.s32.totalorder %s90, %s91
    %p105 = scmp.eq.s32.totalorder %s15, 1
    %p106 = por %p104, %p105
    %p108 = scmp.ne.s32.totalorder %s91, %s107
    %p109 = scmp.eq.s32.totalorder %s15, 0
    %p110 = por %p108, %p109
    %p111 = scmp.le.s32.totalorder 1, %s9
    %p112 = scmp.lt.s32.totalorder %s9, 3
    %p113 = pnand %p111, %p112
    %p114 = pneg %p113
    // Predicated region
    $region9: #{double_conv.5} parent=5 // pred_check
      _
    $region10: #{double_conv.5} parent=5 // pred_check_branch
      %116 = sbr.rel (%p113) target = $region12
    $region11: #{double_conv.5} parent=5 // pred_region
      %s117 = ssub.s32 %s9, 1
      // Predicated region
      $region13: #{double_conv.5} parent=11 // pred_check
        %p118 = pneg %p56
      $region14: #{double_conv.5} parent=11 // pred_check_branch
        %120 = sbr.rel (%p118) target = $region16
      $region15: #{double_conv.5} parent=11 // pred_region
        _
      $region16: #{double_conv.5} parent=11 // pred_fallthru
        _
      // Predicated region
      $region17: #{double_conv.5} parent=11 // pred_check
        %p121 = pneg %p77
      $region18: #{double_conv.5} parent=11 // pred_check_branch
        %123 = sbr.rel (%p121) target = $region20
      $region19: #{double_conv.5} parent=11 // pred_region
        _
      $region20: #{double_conv.5} parent=11 // pred_fallthru
        _
    $region12: #{double_conv.5} parent=5 // pred_fallthru
      _
    %p124 = scmp.lt.s32.totalorder %s9, 2
    // Predicated region
    $region21: #{double_conv.5} parent=5 // pred_check
      %p125 = pneg %p124
    $region22: #{double_conv.5} parent=5 // pred_check_branch
      %127 = sbr.rel (%p125) target = $region24
    $region23: #{double_conv.5} parent=5 // pred_region
      // Predicated region
      $region25: #{double_conv.5} parent=23 // pred_check
        %p128 = pneg %p29
      $region26: #{double_conv.5} parent=23 // pred_check_branch
        %130 = sbr.rel (%p128) target = $region28
      $region27: #{double_conv.5} parent=23 // pred_region
        %p131 = scmp.lt.s32.totalorder %s9, 1
        %s132 = scalar_select %p131, %s9, 1
        %s133 = smul.addr %s132, 32
        %s134 = smul.addr %s133, 8
        %s135 = scalar_lea.vmem %s0, %s134
      $region28: #{double_conv.5} parent=23 // pred_fallthru
        _
    $region24: #{double_conv.5} parent=5 // pred_fallthru
      _
    %p136 = scmp.le.s32.totalorder 1, %s9
    %p137 = scmp.lt.s32.totalorder %s9, 3
    %p138 = pnand %p136, %p137
    %p139 = pneg %p138
    // Predicated region
    $region29: #{double_conv.5} parent=5 // pred_check
      _
    $region30: #{double_conv.5} parent=5 // pred_check_branch
      %141 = sbr.rel (%p138) target = $region32
    $region31: #{double_conv.5} parent=5 // pred_region
      %s142 = ssub.s32 %s9, 1
      %p143 = scmp.lt.s32.totalorder %s14, 1
      %s144 = scalar_select %p143, %s14, 1
      %s145 = smul.addr %s144, 32
      %s146 = smul.addr %s145, 8
      %s147 = scalar_lea.vmem %s0, %s146
      %p148 = pneg %p35
      %p149 = pneg %p32
      %p150 = pneg %p56
      %p151 = pneg %p53
      %p152 = pneg %p77
      %p153 = pneg %p74
      %p154 = pneg %p103
      %p155 = pneg %p100
      %p156 = scmp.lt.s32.totalorder %s14, 1
      %s157 = scalar_select %p156, %s14, 1
      %s158 = smul.addr %s157, 32
      %s159 = smul.addr %s158, 8
      %s160 = scalar_lea.vmem %s3, %s159
      %p161 = scmp.lt.s32.totalorder %s14, 1
      %s162 = scalar_select %p161, %s14, 1
      %s163 = smul.addr %s162, 32
      %s164 = smul.addr %s163, 8
      %s165 = scalar_lea.vmem %s0, %s164
      %p166 = scmp.lt.s32.totalorder %s14, 1
      %s167 = scalar_select %p166, %s14, 1
      %s168 = smul.addr %s167, 32
      %s169 = smul.addr %s168, 8
      %s170 = scalar_lea.vmem %s3, %s169
      %v171 = vld [vmem:[%s165] sm:$0xff]
      %v172 = vld [vmem:[%s165 + $0x8] sm:$0xff]
      %v173 = vld [vmem:[%s165 + $0x10] sm:$0xff]
      %v174 = vld [vmem:[%s165 + $0x18] sm:$0xff]
      %v175 = vld [vmem:[%s165 + $0x20] sm:$0xff]
      %v176 = vld [vmem:[%s165 + $0x28] sm:$0xff]
      %v177 = vld [vmem:[%s165 + $0x30] sm:$0xff]
      %v178 = vld [vmem:[%s165 + $0x38] sm:$0xff]
      %v179 = vld [vmem:[%s165 + $0x40] sm:$0xff]
      %v180 = vld [vmem:[%s165 + $0x48] sm:$0xff]
      %v181 = vld [vmem:[%s165 + $0x50] sm:$0xff]
      %v182 = vld [vmem:[%s165 + $0x58] sm:$0xff]
      %v183 = vld [vmem:[%s165 + $0x60] sm:$0xff]
      %v184 = vld [vmem:[%s165 + $0x68] sm:$0xff]
      %v185 = vld [vmem:[%s165 + $0x70] sm:$0xff]
      %v186 = vld [vmem:[%s165 + $0x78] sm:$0xff]
      %v187 = vld [vmem:[%s165 + $0x80] sm:$0xff]
      %v188 = vld [vmem:[%s165 + $0x88] sm:$0xff]
      %v189 = vld [vmem:[%s165 + $0x90] sm:$0xff]
      %v190 = vld [vmem:[%s165 + $0x98] sm:$0xff]
      %v191 = vld [vmem:[%s165 + $0xa0] sm:$0xff]
      %v192 = vld [vmem:[%s165 + $0xa8] sm:$0xff]
      %v193 = vld [vmem:[%s165 + $0xb0] sm:$0xff]
      %v194 = vld [vmem:[%s165 + $0xb8] sm:$0xff]
      %v195 = vld [vmem:[%s165 + $0xc0] sm:$0xff]
      %v196 = vld [vmem:[%s165 + $0xc8] sm:$0xff]
      %v197 = vld [vmem:[%s165 + $0xd0] sm:$0xff]
      %v198 = vld [vmem:[%s165 + $0xd8] sm:$0xff]
      %v199 = vld [vmem:[%s165 + $0xe0] sm:$0xff]
      %v200 = vld [vmem:[%s165 + $0xe8] sm:$0xff]
      %v201 = vld [vmem:[%s165 + $0xf0] sm:$0xff]
      %v202 = vld [vmem:[%s165 + $0xf8] sm:$0xff]
      %v203 = vld [vmem:[%s1] sm:$0x1]
      %v205 = vperm.slane %v203, 0
      %v207 = vmul.f32 %v171, %v205
      %v208 = vmul.f32 %v172, %v205
      %v209 = vmul.f32 %v173, %v205
      %v210 = vmul.f32 %v174, %v205
      %v211 = vmul.f32 %v175, %v205
      %v212 = vmul.f32 %v176, %v205
      %v213 = vmul.f32 %v177, %v205
      %v214 = vmul.f32 %v178, %v205
      %v215 = vmul.f32 %v179, %v205
      %v216 = vmul.f32 %v180, %v205
      %v217 = vmul.f32 %v181, %v205
      %v218 = vmul.f32 %v182, %v205
      %v219 = vmul.f32 %v183, %v205
      %v220 = vmul.f32 %v184, %v205
      %v221 = vmul.f32 %v185, %v205
      %v222 = vmul.f32 %v186, %v205
      %v223 = vmul.f32 %v187, %v205
      %v224 = vmul.f32 %v188, %v205
      %v225 = vmul.f32 %v189, %v205
      %v226 = vmul.f32 %v190, %v205
      %v227 = vmul.f32 %v191, %v205
      %v228 = vmul.f32 %v192, %v205
      %v229 = vmul.f32 %v193, %v205
      %v230 = vmul.f32 %v194, %v205
      %v231 = vmul.f32 %v195, %v205
      %v232 = vmul.f32 %v196, %v205
      %v233 = vmul.f32 %v197, %v205
      %v234 = vmul.f32 %v198, %v205
      %v235 = vmul.f32 %v199, %v205
      %v236 = vmul.f32 %v200, %v205
      %v237 = vmul.f32 %v201, %v205
      %v238 = vmul.f32 %v202, %v205
      %v239 = vld [vmem:[%s2] sm:$0x1]
      %v241 = vperm.slane %v239, 0
      %v243 = vadd.f32 %v207, %v241
      %v244 = vadd.f32 %v208, %v241
      %v245 = vadd.f32 %v209, %v241
      %v246 = vadd.f32 %v210, %v241
      %v247 = vadd.f32 %v211, %v241
      %v248 = vadd.f32 %v212, %v241
      %v249 = vadd.f32 %v213, %v241
      %v250 = vadd.f32 %v214, %v241
      %v251 = vadd.f32 %v215, %v241
      %v252 = vadd.f32 %v216, %v241
      %v253 = vadd.f32 %v217, %v241
      %v254 = vadd.f32 %v218, %v241
      %v255 = vadd.f32 %v219, %v241
      %v256 = vadd.f32 %v220, %v241
      %v257 = vadd.f32 %v221, %v241
      %v258 = vadd.f32 %v222, %v241
      %v259 = vadd.f32 %v223, %v241
      %v260 = vadd.f32 %v224, %v241
      %v261 = vadd.f32 %v225, %v241
      %v262 = vadd.f32 %v226, %v241
      %v263 = vadd.f32 %v227, %v241
      %v264 = vadd.f32 %v228, %v241
      %v265 = vadd.f32 %v229, %v241
      %v266 = vadd.f32 %v230, %v241
      %v267 = vadd.f32 %v231, %v241
      %v268 = vadd.f32 %v232, %v241
      %v269 = vadd.f32 %v233, %v241
      %v270 = vadd.f32 %v234, %v241
      %v271 = vadd.f32 %v235, %v241
      %v272 = vadd.f32 %v236, %v241
      %v273 = vadd.f32 %v237, %v241
      %v274 = vadd.f32 %v238, %v241
      %v275 = vmax.f32 %v243, 0.0
      %v276 = vmax.f32 %v244, 0.0
      %v277 = vmax.f32 %v245, 0.0
      %v278 = vmax.f32 %v246, 0.0
      %v279 = vmax.f32 %v247, 0.0
      %v280 = vmax.f32 %v248, 0.0
      %v281 = vmax.f32 %v249, 0.0
      %v282 = vmax.f32 %v250, 0.0
      %v283 = vmax.f32 %v251, 0.0
      %v284 = vmax.f32 %v252, 0.0
      %v285 = vmax.f32 %v253, 0.0
      %v286 = vmax.f32 %v254, 0.0
      %v287 = vmax.f32 %v255, 0.0
      %v288 = vmax.f32 %v256, 0.0
      %v289 = vmax.f32 %v257, 0.0
      %v290 = vmax.f32 %v258, 0.0
      %v291 = vmax.f32 %v259, 0.0
      %v292 = vmax.f32 %v260, 0.0
      %v293 = vmax.f32 %v261, 0.0
      %v294 = vmax.f32 %v262, 0.0
      %v295 = vmax.f32 %v263, 0.0
      %v296 = vmax.f32 %v264, 0.0
      %v297 = vmax.f32 %v265, 0.0
      %v298 = vmax.f32 %v266, 0.0
      %v299 = vmax.f32 %v267, 0.0
      %v300 = vmax.f32 %v268, 0.0
      %v301 = vmax.f32 %v269, 0.0
      %v302 = vmax.f32 %v270, 0.0
      %v303 = vmax.f32 %v271, 0.0
      %v304 = vmax.f32 %v272, 0.0
      %v305 = vmax.f32 %v273, 0.0
      %v306 = vmax.f32 %v274, 0.0
      %vm307 = vcmask 64512
      %308 = vst.msk [vmem:[%s170] sm:$0xff] %vm307, %v275
      %309 = vst.msk [vmem:[%s170 + $0x8] sm:$0xff] %vm307, %v276
      %310 = vst.msk [vmem:[%s170 + $0x10] sm:$0xff] %vm307, %v277
      %311 = vst.msk [vmem:[%s170 + $0x18] sm:$0xff] %vm307, %v278
      %312 = vst.msk [vmem:[%s170 + $0x20] sm:$0xff] %vm307, %v279
      %313 = vst.msk [vmem:[%s170 + $0x28] sm:$0xff] %vm307, %v280
      %314 = vst.msk [vmem:[%s170 + $0x30] sm:$0xff] %vm307, %v281
      %315 = vst.msk [vmem:[%s170 + $0x38] sm:$0xff] %vm307, %v282
      %316 = vst.msk [vmem:[%s170 + $0x40] sm:$0xff] %vm307, %v283
      %317 = vst.msk [vmem:[%s170 + $0x48] sm:$0xff] %vm307, %v284
      %318 = vst.msk [vmem:[%s170 + $0x50] sm:$0xff] %vm307, %v285
      %319 = vst.msk [vmem:[%s170 + $0x58] sm:$0xff] %vm307, %v286
      %320 = vst.msk [vmem:[%s170 + $0x60] sm:$0xff] %vm307, %v287
      %321 = vst.msk [vmem:[%s170 + $0x68] sm:$0xff] %vm307, %v288
      %322 = vst.msk [vmem:[%s170 + $0x70] sm:$0xff] %vm307, %v289
      %323 = vst.msk [vmem:[%s170 + $0x78] sm:$0xff] %vm307, %v290
      %324 = vst.msk [vmem:[%s170 + $0x80] sm:$0xff] %vm307, %v291
      %325 = vst.msk [vmem:[%s170 + $0x88] sm:$0xff] %vm307, %v292
      %326 = vst.msk [vmem:[%s170 + $0x90] sm:$0xff] %vm307, %v293
      %327 = vst.msk [vmem:[%s170 + $0x98] sm:$0xff] %vm307, %v294
      %328 = vst.msk [vmem:[%s170 + $0xa0] sm:$0xff] %vm307, %v295
      %329 = vst.msk [vmem:[%s170 + $0xa8] sm:$0xff] %vm307, %v296
      %330 = vst.msk [vmem:[%s170 + $0xb0] sm:$0xff] %vm307, %v297
      %331 = vst.msk [vmem:[%s170 + $0xb8] sm:$0xff] %vm307, %v298
      %332 = vst.msk [vmem:[%s170 + $0xc0] sm:$0xff] %vm307, %v299
      %333 = vst.msk [vmem:[%s170 + $0xc8] sm:$0xff] %vm307, %v300
      %334 = vst.msk [vmem:[%s170 + $0xd0] sm:$0xff] %vm307, %v301
      %335 = vst.msk [vmem:[%s170 + $0xd8] sm:$0xff] %vm307, %v302
      %336 = vst.msk [vmem:[%s170 + $0xe0] sm:$0xff] %vm307, %v303
      %337 = vst.msk [vmem:[%s170 + $0xe8] sm:$0xff] %vm307, %v304
      %338 = vst.msk [vmem:[%s170 + $0xf0] sm:$0xff] %vm307, %v305
      %339 = vst.msk [vmem:[%s170 + $0xf8] sm:$0xff] %vm307, %v306
      %p340 = scmp.lt.s32.totalorder %s14, 1
      %s341 = scalar_select %p340, %s14, 1
      %s342 = smul.addr %s341, 32
      %s343 = smul.addr %s342, 8
      %s344 = scalar_lea.vmem %s3, %s343
      // Predicated region
      $region33: #{double_conv.5} parent=31 // pred_check
        %p345 = pneg %p100
      $region34: #{double_conv.5} parent=31 // pred_check_branch
        %347 = sbr.rel (%p345) target = $region36
      $region35: #{double_conv.5} parent=31 // pred_region
        _
      $region36: #{double_conv.5} parent=31 // pred_fallthru
        _
    $region32: #{double_conv.5} parent=5 // pred_fallthru
      _
    %p348 = scmp.le.s32.totalorder 2, %s9
    // Predicated region
    $region37: #{double_conv.5} parent=5 // pred_check
      %p349 = pneg %p348
    $region38: #{double_conv.5} parent=5 // pred_check_branch
      %351 = sbr.rel (%p349) target = $region40
    $region39: #{double_conv.5} parent=5 // pred_region
      %s352 = ssub.s32 %s9, 2
      // Predicated region
      $region41: #{double_conv.5} parent=39 // pred_check
        %p353 = pneg %p106
      $region42: #{double_conv.5} parent=39 // pred_check_branch
        %355 = sbr.rel (%p353) target = $region44
      $region43: #{double_conv.5} parent=39 // pred_region
        %p356 = scmp.lt.s32.totalorder %s15, 1
        %s357 = scalar_select %p356, %s15, 1
        %s358 = smul.addr %s357, 32
        %s359 = smul.addr %s358, 8
        %s360 = scalar_lea.vmem %s3, %s359
      $region44: #{double_conv.5} parent=39 // pred_fallthru
        _
    $region40: #{double_conv.5} parent=5 // pred_fallthru
      _
  $region6: #{double_conv.5} parent=0 // loop_footer
    %s13 = sadd.s32 1, %s9
  $region7: #{double_conv.5} parent=0 // loop_footer_branch
    %8 = sbr.rel target = $region3
  $region8: #{double_conv.5} parent=0 // loop_exit
    _

// kernel: double_conv.3
$region0: #{double_conv.3}
  #allocation0 [shape = 'u32[]', space=smem, size = 0x4, offset = 0x4, fixed_abs, tag = 'smem constant byte address 0x4 - core index']
  #allocation1 [shape = 'u32[72,128]{1,0:T(1,128)}', space=vmem, size = 0x9000, scoped, tag = 'internal scratch']
  #allocation2 [shape = 'f32[18,18,4]{2,1,0:T(8,128)}', space=vmem, size = 0x36000, scoped, tag = 'scratch operand']
  #allocation3 [shape = 'f32[16,16,36]{2,1,0:T(8,128)}', space=vmem, size = 0x20000, scoped, tag = 'scratch operand']
  %s0 = inlined_call_operand.vmem [shape: f32[2,16,16,4], index: 0, kind: input, shape index: {}]
  %s1 = inlined_call_operand.vmem [shape: f32[36,8], index: 1, kind: input, shape index: {}]
  %s2 = inlined_call_operand.vmem [shape: f32[2,16,16,8], index: 2, kind: output, shape index: {0}]
  %s3 = inlined_call_operand.vmem [shape: f32[2,1,8], index: 3, kind: output, shape index: {1}]
  %s4 = inlined_call_operand.vmem [shape: f32[2,1,8], index: 4, kind: output, shape index: {2}]
  %5 = xla_tuple %s2, %s3, %s4
  %s6 = sld [smem:[#allocation0]]
  $region57: #{double_conv.3} parent=0
    _
  %s8 = ssub.s32 1, %s6
  %s9 = scalar_select 0, %s8, %s6
  loop: start=0, step=1, limit=4
  $region2: #{double_conv.3} parent=0 // loop_pre_header
    _
  $region3: #{double_conv.3} parent=0 // loop_header
    %s11 = sphi 0, %s15
    %p12 = scmp.ge.s32.totalorder %s11, 4
    %s21 = sphi 0, %s23
    %s24 = sphi 0, %s21
    %s25 = sphi 0, %s24
    %s41 = sphi 0, %s25
    %s45 = sphi 0, %s45
    %s47 = sphi 0, %s45
    %s48 = sphi 0, %s47
    %s62 = sphi 0, %s48
    %s68 = sphi 0, %s70
    %s71 = sphi 0, %s68
    %s72 = sphi 0, %s71
    %s88 = sphi 0, %s72
    %s94 = sphi 0, %s96
    %s97 = sphi 0, %s94
    %s98 = sphi 0, %s97
    %s114 = sphi 0, %s98
    %s120 = sphi 0, %s122
    %s123 = sphi 0, %s120
    %s124 = sphi 0, %s123
    %s140 = sphi 0, %s124
  $region4: #{double_conv.3} parent=0 // loop_header_branch
    %14 = sbr.rel (%p12) target = $region8
  $region5: #{double_conv.3} parent=0 // loop_body
    %s16 = ssub.s32 %s11, 1
    %s17 = ssub.s32 %s11, 2
    %s18 = sadd.s32 %s11, 1
    %s19 = ssub.s32 %s11, %s18
    %p20 = scmp.eq.s32.totalorder %s19, 0
    %s22 = sadd.s32 %s21, 1
    %s23 = scalar_select %p20, %s21, %s22
    %p26 = pneg %p20
    %p27 = scmp.eq.s32.totalorder %s11, 1
    %p28 = por %p26, %p27
    %p29 = scmp.ne.s32.totalorder %s21, %s24
    %p30 = scmp.eq.s32.totalorder %s11, 0
    %p31 = por %p29, %p30
    %p32 = scmp.ne.s32.totalorder %s21, %s24
    %p33 = scmp.eq.s32.totalorder %s16, 1
    %p34 = por %p32, %p33
    %p35 = scmp.ne.s32.totalorder %s24, %s25
    %p36 = scmp.eq.s32.totalorder %s16, 0
    %p37 = por %p35, %p36
    %p38 = scmp.ne.s32.totalorder %s24, %s25
    %p39 = scmp.eq.s32.totalorder %s17, 1
    %p40 = por %p38, %p39
    %p42 = scmp.ne.s32.totalorder %s25, %s41
    %p43 = scmp.eq.s32.totalorder %s17, 0
    %p44 = por %p42, %p43
    %s46 = sadd.s32 %s45, 1
    %p49 = scmp.eq.s32.totalorder %s11, 1
    %p50 = scmp.ne.s32.totalorder %s45, %s47
    %p51 = scmp.eq.s32.totalorder %s11, 0
    %p52 = por %p50, %p51
    %p53 = scmp.ne.s32.totalorder %s45, %s47
    %p54 = scmp.eq.s32.totalorder %s16, 1
    %p55 = por %p53, %p54
    %p56 = scmp.ne.s32.totalorder %s47, %s48
    %p57 = scmp.eq.s32.totalorder %s16, 0
    %p58 = por %p56, %p57
    %p59 = scmp.ne.s32.totalorder %s47, %s48
    %p60 = scmp.eq.s32.totalorder %s17, 1
    %p61 = por %p59, %p60
    %p63 = scmp.ne.s32.totalorder %s48, %s62
    %p64 = scmp.eq.s32.totalorder %s17, 0
    %p65 = por %p63, %p64
    %s66 = ssub.s32 %s11, %s18
    %p67 = scmp.eq.s32.totalorder %s66, 0
    %s69 = sadd.s32 %s68, 1
    %s70 = scalar_select %p67, %s68, %s69
    %p73 = pneg %p67
    %p74 = scmp.eq.s32.totalorder %s11, 1
    %p75 = por %p73, %p74
    %p76 = scmp.ne.s32.totalorder %s68, %s71
    %p77 = scmp.eq.s32.totalorder %s11, 0
    %p78 = por %p76, %p77
    %p79 = scmp.ne.s32.totalorder %s68, %s71
    %p80 = scmp.eq.s32.totalorder %s16, 1
    %p81 = por %p79, %p80
    %p82 = scmp.ne.s32.totalorder %s71, %s72
    %p83 = scmp.eq.s32.totalorder %s16, 0
    %p84 = por %p82, %p83
    %p85 = scmp.ne.s32.totalorder %s71, %s72
    %p86 = scmp.eq.s32.totalorder %s17, 1
    %p87 = por %p85, %p86
    %p89 = scmp.ne.s32.totalorder %s72, %s88
    %p90 = scmp.eq.s32.totalorder %s17, 0
    %p91 = por %p89, %p90
    %s92 = ssub.s32 %s11, %s18
    %p93 = scmp.eq.s32.totalorder %s92, 0
    %s95 = sadd.s32 %s94, 1
    %s96 = scalar_select %p93, %s94, %s95
    %p99 = pneg %p93
    %p100 = scmp.eq.s32.totalorder %s11, 1
    %p101 = por %p99, %p100
    %p102 = scmp.ne.s32.totalorder %s94, %s97
    %p103 = scmp.eq.s32.totalorder %s11, 0
    %p104 = por %p102, %p103
    %p105 = scmp.ne.s32.totalorder %s94, %s97
    %p106 = scmp.eq.s32.totalorder %s16, 1
    %p107 = por %p105, %p106
    %p108 = scmp.ne.s32.totalorder %s97, %s98
    %p109 = scmp.eq.s32.totalorder %s16, 0
    %p110 = por %p108, %p109
    %p111 = scmp.ne.s32.totalorder %s97, %s98
    %p112 = scmp.eq.s32.totalorder %s17, 1
    %p113 = por %p111, %p112
    %p115 = scmp.ne.s32.totalorder %s98, %s114
    %p116 = scmp.eq.s32.totalorder %s17, 0
    %p117 = por %p115, %p116
    %s118 = ssub.s32 %s11, %s18
    %p119 = scmp.eq.s32.totalorder %s118, 0
    %s121 = sadd.s32 %s120, 1
    %s122 = scalar_select %p119, %s120, %s121
    %p125 = pneg %p119
    %p126 = scmp.eq.s32.totalorder %s11, 1
    %p127 = por %p125, %p126
    %p128 = scmp.ne.s32.totalorder %s120, %s123
    %p129 = scmp.eq.s32.totalorder %s11, 0
    %p130 = por %p128, %p129
    %p131 = scmp.ne.s32.totalorder %s120, %s123
    %p132 = scmp.eq.s32.totalorder %s16, 1
    %p133 = por %p131, %p132
    %p134 = scmp.ne.s32.totalorder %s123, %s124
    %p135 = scmp.eq.s32.totalorder %s16, 0
    %p136 = por %p134, %p135
    %p137 = scmp.ne.s32.totalorder %s123, %s124
    %p138 = scmp.eq.s32.totalorder %s17, 1
    %p139 = por %p137, %p138
    %p141 = scmp.ne.s32.totalorder %s124, %s140
    %p142 = scmp.eq.s32.totalorder %s17, 0
    %p143 = por %p141, %p142
    %p144 = scmp.le.s32.totalorder 1, %s11
    %p145 = scmp.lt.s32.totalorder %s11, 3
    %p146 = pnand %p144, %p145
    %p147 = pneg %p146
    // Predicated region
    $region9: #{double_conv.3} parent=5 // pred_check
      _
    $region10: #{double_conv.3} parent=5 // pred_check_branch
      %149 = sbr.rel (%p146) target = $region12
    $region11: #{double_conv.3} parent=5 // pred_region
      %s150 = ssub.s32 %s11, 1
      // Predicated region
      $region13: #{double_conv.3} parent=11 // pred_check
        %p151 = pneg %p58
      $region14: #{double_conv.3} parent=11 // pred_check_branch
        %153 = sbr.rel (%p151) target = $region16
      $region15: #{double_conv.3} parent=11 // pred_region
        _
      $region16: #{double_conv.3} parent=11 // pred_fallthru
        _
    $region12: #{double_conv.3} parent=5 // pred_fallthru
      _
    %p154 = scmp.lt.s32.totalorder %s11, 2
    // Predicated region
    $region17: #{double_conv.3} parent=5 // pred_check
      %p155 = pneg %p154
    $region18: #{double_conv.3} parent=5 // pred_check_branch
      %157 = sbr.rel (%p155) target = $region20
    $region19: #{double_conv.3} parent=5 // pred_region
      // Predicated region
      $region21: #{double_conv.3} parent=19 // pred_check
        %p158 = pneg %p31
      $region22: #{double_conv.3} parent=19 // pred_check_branch
        %160 = sbr.rel (%p158) target = $region24
      $region23: #{double_conv.3} parent=19 // pred_region
        %p161 = scmp.lt.s32.totalorder %s11, 1
        %s162 = scalar_select %p161, %s11, 1
        %s163 = smul.addr %s162, 32
        %s164 = smul.addr %s163, 8
        %s165 = scalar_lea.vmem %s0, %s164
      $region24: #{double_conv.3} parent=19 // pred_fallthru
        _
    $region20: #{double_conv.3} parent=5 // pred_fallthru
      _
    %p166 = scmp.le.s32.totalorder 1, %s11
    %p167 = scmp.lt.s32.totalorder %s11, 3
    %p168 = pnand %p166, %p167
    %p169 = pneg %p168
    // Predicated region
    $region25: #{double_conv.3} parent=5 // pred_check
      _
    $region26: #{double_conv.3} parent=5 // pred_check_branch
      %171 = sbr.rel (%p168) target = $region28
    $region27: #{double_conv.3} parent=5 // pred_region
      %s172 = ssub.s32 %s11, 1
      %p173 = scmp.lt.s32.totalorder %s16, 1
      %s174 = scalar_select %p173, %s16, 1
      %s175 = smul.addr %s174, 32
      %s176 = smul.addr %s175, 8
      %s177 = scalar_lea.vmem %s0, %s176
      %p178 = pneg %p37
      %p179 = pneg %p34
      %p180 = pneg %p58
      %p181 = pneg %p55
      %p182 = pneg %p84
      %p183 = pneg %p81
      %p184 = scmp.lt.s32.totalorder %s16, 1
      %s185 = scalar_select %p184, %s16, 1
      %s186 = smul.addr %s185, 32
      %s187 = smul.addr %s186, 8
      %s188 = scalar_lea.vmem %s2, %s187
      %p189 = pneg %p110
      %p190 = pneg %p107
      %p191 = scmp.lt.s32.totalorder %s16, 1
      %s192 = scalar_select %p191, %s16, 1
      %s193 = scalar_lea.vmem %s3, %s192
      %p194 = pneg %p136
      %p195 = pneg %p133
      %p196 = scmp.lt.s32.totalorder %s16, 1
      %s197 = scalar_select %p196, %s16, 1
      %s198 = scalar_lea.vmem %s4, %s197
      %p199 = scmp.lt.s32.totalorder %s16, 1
      %s200 = scalar_select %p199, %s16, 1
      %s201 = smul.addr %s200, 32
      %s202 = smul.addr %s201, 8
      %s203 = scalar_lea.vmem %s0, %s202
      %p204 = scmp.lt.s32.totalorder %s16, 1
      %s205 = scalar_select %p204, %s16, 1
      %s206 = smul.addr %s205, 32
      %s207 = smul.addr %s206, 8
      %s208 = scalar_lea.vmem %s2, %s207
      %p209 = scmp.lt.s32.totalorder %s16, 1
      %s210 = scalar_select %p209, %s16, 1
      %s211 = scalar_lea.vmem %s3, %s210
      %p212 = scmp.lt.s32.totalorder %s16, 1
      %s213 = scalar_select %p212, %s16, 1
      %s214 = scalar_lea.vmem %s4, %s213
      %v215 = vld [vmem:[%s203] sm:$0xff]
      %v216 = vld [vmem:[%s203 + $0x8] sm:$0xff]
      %v217 = vld [vmem:[%s203 + $0x10] sm:$0xff]
      %v218 = vld [vmem:[%s203 + $0x18] sm:$0xff]
      %v219 = vld [vmem:[%s203 + $0x20] sm:$0xff]
      %v220 = vld [vmem:[%s203 + $0x28] sm:$0xff]
      %v221 = vld [vmem:[%s203 + $0x30] sm:$0xff]
      %v222 = vld [vmem:[%s203 + $0x38] sm:$0xff]
      %v223 = vld [vmem:[%s203 + $0x40] sm:$0xff]
      %v224 = vld [vmem:[%s203 + $0x48] sm:$0xff]
      %v225 = vld [vmem:[%s203 + $0x50] sm:$0xff]
      %v226 = vld [vmem:[%s203 + $0x58] sm:$0xff]
      %v227 = vld [vmem:[%s203 + $0x60] sm:$0xff]
      %v228 = vld [vmem:[%s203 + $0x68] sm:$0xff]
      %v229 = vld [vmem:[%s203 + $0x70] sm:$0xff]
      %v230 = vld [vmem:[%s203 + $0x78] sm:$0xff]
      %v231 = vld [vmem:[%s203 + $0x80] sm:$0xff]
      %v232 = vld [vmem:[%s203 + $0x88] sm:$0xff]
      %v233 = vld [vmem:[%s203 + $0x90] sm:$0xff]
      %v234 = vld [vmem:[%s203 + $0x98] sm:$0xff]
      %v235 = vld [vmem:[%s203 + $0xa0] sm:$0xff]
      %v236 = vld [vmem:[%s203 + $0xa8] sm:$0xff]
      %v237 = vld [vmem:[%s203 + $0xb0] sm:$0xff]
      %v238 = vld [vmem:[%s203 + $0xb8] sm:$0xff]
      %v239 = vld [vmem:[%s203 + $0xc0] sm:$0xff]
      %v240 = vld [vmem:[%s203 + $0xc8] sm:$0xff]
      %v241 = vld [vmem:[%s203 + $0xd0] sm:$0xff]
      %v242 = vld [vmem:[%s203 + $0xd8] sm:$0xff]
      %v243 = vld [vmem:[%s203 + $0xe0] sm:$0xff]
      %v244 = vld [vmem:[%s203 + $0xe8] sm:$0xff]
      %v245 = vld [vmem:[%s203 + $0xf0] sm:$0xff]
      %v246 = vld [vmem:[%s203 + $0xf8] sm:$0xff]
      %vm247 = vcmask 31744
      %248 = vst.msk [vmem:[#allocation2] sm:$0xff] %vm247, 0.0
      %249 = vst.msk [vmem:[#allocation2 + $0x8] sm:$0xff] %vm247, 0.0
      %vm250 = vcmask 25600
      %251 = vst.msk [vmem:[#allocation2 + $0x10] sm:$0x3] %vm250, 0.0
      %252 = vst.msk [vmem:[#allocation2 + $0x18] sm:$0xff] %vm247, 0.0
      %253 = vst.msk [vmem:[#allocation2 + $0x20] sm:$0xff] %vm247, 0.0
      %254 = vst.msk [vmem:[#allocation2 + $0x28] sm:$0x3] %vm250, 0.0
      %255 = vst.msk [vmem:[#allocation2 + $0x30] sm:$0xff] %vm247, 0.0
      %256 = vst.msk [vmem:[#allocation2 + $0x38] sm:$0xff] %vm247, 0.0
      %257 = vst.msk [vmem:[#allocation2 + $0x40] sm:$0x3] %vm250, 0.0
      %258 = vst.msk [vmem:[#allocation2 + $0x48] sm:$0xff] %vm247, 0.0
      %259 = vst.msk [vmem:[#allocation2 + $0x50] sm:$0xff] %vm247, 0.0
      %260 = vst.msk [vmem:[#allocation2 + $0x58] sm:$0x3] %vm250, 0.0
      %261 = vst.msk [vmem:[#allocation2 + $0x60] sm:$0xff] %vm247, 0.0
      %262 = vst.msk [vmem:[#allocation2 + $0x68] sm:$0xff] %vm247, 0.0
      %263 = vst.msk [vmem:[#allocation2 + $0x70] sm:$0x3] %vm250, 0.0
      %264 = vst.msk [vmem:[#allocation2 + $0x78] sm:$0xff] %vm247, 0.0
      %265 = vst.msk [vmem:[#allocation2 + $0x80] sm:$0xff] %vm247, 0.0
      %266 = vst.msk [vmem:[#allocation2 + $0x88] sm:$0x3] %vm250, 0.0
      %267 = vst.msk [vmem:[#allocation2 + $0x90] sm:$0xff] %vm247, 0.0
      %268 = vst.msk [vmem:[#allocation2 + $0x98] sm:$0xff] %vm247, 0.0
      %269 = vst.msk [vmem:[#allocation2 + $0xa0] sm:$0x3] %vm250, 0.0
      %270 = vst.msk [vmem:[#allocation2 + $0xa8] sm:$0xff] %vm247, 0.0
      %271 = vst.msk [vmem:[#allocation2 + $0xb0] sm:$0xff] %vm247, 0.0
      %272 = vst.msk [vmem:[#allocation2 + $0xb8] sm:$0x3] %vm250, 0.0
      %273 = vst.msk [vmem:[#allocation2 + $0xc0] sm:$0xff] %vm247, 0.0
      %274 = vst.msk [vmem:[#allocation2 + $0xc8] sm:$0xff] %vm247, 0.0
      %275 = vst.msk [vmem:[#allocation2 + $0xd0] sm:$0x3] %vm250, 0.0
      %276 = vst.msk [vmem:[#allocation2 + $0xd8] sm:$0xff] %vm247, 0.0
      %277 = vst.msk [vmem:[#allocation2 + $0xe0] sm:$0xff] %vm247, 0.0
      %278 = vst.msk [vmem:[#allocation2 + $0xe8] sm:$0x3] %vm250, 0.0
      %279 = vst.msk [vmem:[#allocation2 + $0xf0] sm:$0xff] %vm247, 0.0
      %280 = vst.msk [vmem:[#allocation2 + $0xf8] sm:$0xff] %vm247, 0.0
      %281 = vst.msk [vmem:[#allocation2 + $0x100] sm:$0x3] %vm250, 0.0
      %282 = vst.msk [vmem:[#allocation2 + $0x108] sm:$0xff] %vm247, 0.0
      %283 = vst.msk [vmem:[#allocation2 + $0x110] sm:$0xff] %vm247, 0.0
      %284 = vst.msk [vmem:[#allocation2 + $0x118] sm:$0x3] %vm250, 0.0
      %285 = vst.msk [vmem:[#allocation2 + $0x120] sm:$0xff] %vm247, 0.0
      %286 = vst.msk [vmem:[#allocation2 + $0x128] sm:$0xff] %vm247, 0.0
      %287 = vst.msk [vmem:[#allocation2 + $0x130] sm:$0x3] %vm250, 0.0
      %288 = vst.msk [vmem:[#allocation2 + $0x138] sm:$0xff] %vm247, 0.0
      %289 = vst.msk [vmem:[#allocation2 + $0x140] sm:$0xff] %vm247, 0.0
      %290 = vst.msk [vmem:[#allocation2 + $0x148] sm:$0x3] %vm250, 0.0
      %291 = vst.msk [vmem:[#allocation2 + $0x150] sm:$0xff] %vm247, 0.0
      %292 = vst.msk [vmem:[#allocation2 + $0x158] sm:$0xff] %vm247, 0.0
      %293 = vst.msk [vmem:[#allocation2 + $0x160] sm:$0x3] %vm250, 0.0
      %294 = vst.msk [vmem:[#allocation2 + $0x168] sm:$0xff] %vm247, 0.0
      %295 = vst.msk [vmem:[#allocation2 + $0x170] sm:$0xff] %vm247, 0.0
      %296 = vst.msk [vmem:[#allocation2 + $0x178] sm:$0x3] %vm250, 0.0
      %297 = vst.msk [vmem:[#allocation2 + $0x180] sm:$0xff] %vm247, 0.0
      %298 = vst.msk [vmem:[#allocation2 + $0x188] sm:$0xff] %vm247, 0.0
      %299 = vst.msk [vmem:[#allocation2 + $0x190] sm:$0x3] %vm250, 0.0
      %300 = vst.msk [vmem:[#allocation2 + $0x198] sm:$0xff] %vm247, 0.0
      %301 = vst.msk [vmem:[#allocation2 + $0x1a0] sm:$0xff] %vm247, 0.0
      %302 = vst.msk [vmem:[#allocation2 + $0x1a8] sm:$0x3] %vm250, 0.0
      %s303 = scalar_lea.vmem [#allocation2], 24
      %304 = vst.msk [vmem:[%s303 + $0x1] sm:$0xff] %vm247, %v215
      %305 = vst.msk [vmem:[%s303 + $0x9] sm:$0xff] %vm247, %v216
      %306 = vst.msk [vmem:[%s303 + $0x19] sm:$0xff] %vm247, %v217
      %307 = vst.msk [vmem:[%s303 + $0x21] sm:$0xff] %vm247, %v218
      %308 = vst.msk [vmem:[%s303 + $0x31] sm:$0xff] %vm247, %v219
      %309 = vst.msk [vmem:[%s303 + $0x39] sm:$0xff] %vm247, %v220
      %310 = vst.msk [vmem:[%s303 + $0x49] sm:$0xff] %vm247, %v221
      %311 = vst.msk [vmem:[%s303 + $0x51] sm:$0xff] %vm247, %v222
      %312 = vst.msk [vmem:[%s303 + $0x61] sm:$0xff] %vm247, %v223
      %313 = vst.msk [vmem:[%s303 + $0x69] sm:$0xff] %vm247, %v224
      %314 = vst.msk [vmem:[%s303 + $0x79] sm:$0xff] %vm247, %v225
      %315 = vst.msk [vmem:[%s303 + $0x81] sm:$0xff] %vm247, %v226
      %316 = vst.msk [vmem:[%s303 + $0x91] sm:$0xff] %vm247, %v227
      %317 = vst.msk [vmem:[%s303 + $0x99] sm:$0xff] %vm247, %v228
      %318 = vst.msk [vmem:[%s303 + $0xa9] sm:$0xff] %vm247, %v229
      %319 = vst.msk [vmem:[%s303 + $0xb1] sm:$0xff] %vm247, %v230
      %320 = vst.msk [vmem:[%s303 + $0xc1] sm:$0xff] %vm247, %v231
      %321 = vst.msk [vmem:[%s303 + $0xc9] sm:$0xff] %vm247, %v232
      %322 = vst.msk [vmem:[%s303 + $0xd9] sm:$0xff] %vm247, %v233
      %323 = vst.msk [vmem:[%s303 + $0xe1] sm:$0xff] %vm247, %v234
      %324 = vst.msk [vmem:[%s303 + $0xf1] sm:$0xff] %vm247, %v235
      %325 = vst.msk [vmem:[%s303 + $0xf9] sm:$0xff] %vm247, %v236
      %326 = vst.msk [vmem:[%s303 + $0x109] sm:$0xff] %vm247, %v237
      %327 = vst.msk [vmem:[%s303 + $0x111] sm:$0xff] %vm247, %v238
      %328 = vst.msk [vmem:[%s303 + $0x121] sm:$0xff] %vm247, %v239
      %329 = vst.msk [vmem:[%s303 + $0x129] sm:$0xff] %vm247, %v240
      %330 = vst.msk [vmem:[%s303 + $0x139] sm:$0xff] %vm247, %v241
      %331 = vst.msk [vmem:[%s303 + $0x141] sm:$0xff] %vm247, %v242
      %332 = vst.msk [vmem:[%s303 + $0x151] sm:$0xff] %vm247, %v243
      %333 = vst.msk [vmem:[%s303 + $0x159] sm:$0xff] %vm247, %v244
      %334 = vst.msk [vmem:[%s303 + $0x169] sm:$0xff] %vm247, %v245
      %335 = vst.msk [vmem:[%s303 + $0x171] sm:$0xff] %vm247, %v246
      %v336 = vld [vmem:[#allocation2] sm:$0xff]
      %v337 = vld [vmem:[#allocation2 + $0x8] sm:$0xff]
      %v338 = vld [vmem:[#allocation2 + $0x18] sm:$0xff]
      %v339 = vld [vmem:[#allocation2 + $0x20] sm:$0xff]
      %v340 = vld [vmem:[#allocation2 + $0x30] sm:$0xff]
      %v341 = vld [vmem:[#allocation2 + $0x38] sm:$0xff]
      %v342 = vld [vmem:[#allocation2 + $0x48] sm:$0xff]
      %v343 = vld [vmem:[#allocation2 + $0x50] sm:$0xff]
      %v344 = vld [vmem:[#allocation2 + $0x60] sm:$0xff]
      %v345 = vld [vmem:[#allocation2 + $0x68] sm:$0xff]
      %v346 = vld [vmem:[#allocation2 + $0x78] sm:$0xff]
      %v347 = vld [vmem:[#allocation2 + $0x80] sm:$0xff]
      %v348 = vld [vmem:[#allocation2 + $0x90] sm:$0xff]
      %v349 = vld [vmem:[#allocation2 + $0x98] sm:$0xff]
      %v350 = vld [vmem:[#allocation2 + $0xa8] sm:$0xff]
      %v351 = vld [vmem:[#allocation2 + $0xb0] sm:$0xff]
      %v352 = vld [vmem:[#allocation2 + $0xc0] sm:$0xff]
      %v353 = vld [vmem:[#allocation2 + $0xc8] sm:$0xff]
      %v354 = vld [vmem:[#allocation2 + $0xd8] sm:$0xff]
      %v355 = vld [vmem:[#allocation2 + $0xe0] sm:$0xff]
      %v356 = vld [vmem:[#allocation2 + $0xf0] sm:$0xff]
      %v357 = vld [vmem:[#allocation2 + $0xf8] sm:$0xff]
      %v358 = vld [vmem:[#allocation2 + $0x108] sm:$0xff]
      %v359 = vld [vmem:[#allocation2 + $0x110] sm:$0xff]
      %v360 = vld [vmem:[#allocation2 + $0x120] sm:$0xff]
      %v361 = vld [vmem:[#allocation2 + $0x128] sm:$0xff]
      %v362 = vld [vmem:[#allocation2 + $0x138] sm:$0xff]
      %v363 = vld [vmem:[#allocation2 + $0x140] sm:$0xff]
      %v364 = vld [vmem:[#allocation2 + $0x150] sm:$0xff]
      %v365 = vld [vmem:[#allocation2 + $0x158] sm:$0xff]
      %v366 = vld [vmem:[#allocation2 + $0x168] sm:$0xff]
      %v367 = vld [vmem:[#allocation2 + $0x170] sm:$0xff]
      %368 = vst.msk [vmem:[#allocation3] sm:$0xff] %vm247, %v336
      %369 = vst.msk [vmem:[#allocation3 + $0x8] sm:$0xff] %vm247, %v337
      %370 = vst.msk [vmem:[#allocation3 + $0x10] sm:$0xff] %vm247, %v338
      %371 = vst.msk [vmem:[#allocation3 + $0x18] sm:$0xff] %vm247, %v339
      %372 = vst.msk [vmem:[#allocation3 + $0x20] sm:$0xff] %vm247, %v340
      %373 = vst.msk [vmem:[#allocation3 + $0x28] sm:$0xff] %vm247, %v341
      %374 = vst.msk [vmem:[#allocation3 + $0x30] sm:$0xff] %vm247, %v342
      %375 = vst.msk [vmem:[#allocation3 + $0x38] sm:$0xff] %vm247, %v343
      %376 = vst.msk [vmem:[#allocation3 + $0x40] sm:$0xff] %vm247, %v344
      %377 = vst.msk [vmem:[#allocation3 + $0x48] sm:$0xff] %vm247, %v345
      %378 = vst.msk [vmem:[#allocation3 + $0x50] sm:$0xff] %vm247, %v346
      %379 = vst.msk [vmem:[#allocation3 + $0x58] sm:$0xff] %vm247, %v347
      %380 = vst.msk [vmem:[#allocation3 + $0x60] sm:$0xff] %vm247, %v348
      %381 = vst.msk [vmem:[#allocation3 + $0x68] sm:$0xff] %vm247, %v349
      %382 = vst.msk [vmem:[#allocation3 + $0x70] sm:$0xff] %vm247, %v350
      %383 = vst.msk [vmem:[#allocation3 + $0x78] sm:$0xff] %vm247, %v351
      %384 = vst.msk [vmem:[#allocation3 + $0x80] sm:$0xff] %vm247, %v352
      %385 = vst.msk [vmem:[#allocation3 + $0x88] sm:$0xff] %vm247, %v353
      %386 = vst.msk [vmem:[#allocation3 + $0x90] sm:$0xff] %vm247, %v354
      %387 = vst.msk [vmem:[#allocation3 + $0x98] sm:$0xff] %vm247, %v355
      %388 = vst.msk [vmem:[#allocation3 + $0xa0] sm:$0xff] %vm247, %v356
      %389 = vst.msk [vmem:[#allocation3 + $0xa8] sm:$0xff] %vm247, %v357
      %390 = vst.msk [vmem:[#allocation3 + $0xb0] sm:$0xff] %vm247, %v358
      %391 = vst.msk [vmem:[#allocation3 + $0xb8] sm:$0xff] %vm247, %v359
      %392 = vst.msk [vmem:[#allocation3 + $0xc0] sm:$0xff] %vm247, %v360
      %393 = vst.msk [vmem:[#allocation3 + $0xc8] sm:$0xff] %vm247, %v361
      %394 = vst.msk [vmem:[#allocation3 + $0xd0] sm:$0xff] %vm247, %v362
      %395 = vst.msk [vmem:[#allocation3 + $0xd8] sm:$0xff] %vm247, %v363
      %396 = vst.msk [vmem:[#allocation3 + $0xe0] sm:$0xff] %vm247, %v364
      %397 = vst.msk [vmem:[#allocation3 + $0xe8] sm:$0xff] %vm247, %v365
      %398 = vst.msk [vmem:[#allocation3 + $0xf0] sm:$0xff] %vm247, %v366
      %399 = vst.msk [vmem:[#allocation3 + $0xf8] sm:$0xff] %vm247, %v367
      %v400 = vld [vmem:[#allocation2 + $0x1] sm:$0xff]
      %v401 = vld [vmem:[#allocation2 + $0x9] sm:$0xff]
      %v402 = vld [vmem:[#allocation2 + $0x19] sm:$0xff]
      %v403 = vld [vmem:[#allocation2 + $0x21] sm:$0xff]
      %v404 = vld [vmem:[#allocation2 + $0x31] sm:$0xff]
      %v405 = vld [vmem:[#allocation2 + $0x39] sm:$0xff]
      %v406 = vld [vmem:[#allocation2 + $0x49] sm:$0xff]
      %v407 = vld [vmem:[#allocation2 + $0x51] sm:$0xff]
      %v408 = vld [vmem:[#allocation2 + $0x61] sm:$0xff]
      %v409 = vld [vmem:[#allocation2 + $0x69] sm:$0xff]
      %v410 = vld [vmem:[#allocation2 + $0x79] sm:$0xff]
      %v411 = vld [vmem:[#allocation2 + $0x81] sm:$0xff]
      %v412 = vld [vmem:[#allocation2 + $0x91] sm:$0xff]
      %v413 = vld [vmem:[#allocation2 + $0x99] sm:$0xff]
      %v414 = vld [vmem:[#allocation2 + $0xa9] sm:$0xff]
      %v415 = vld [vmem:[#allocation2 + $0xb1] sm:$0xff]
      %v416 = vld [vmem:[#allocation2 + $0xc1] sm:$0xff]
      %v417 = vld [vmem:[#allocation2 + $0xc9] sm:$0xff]
      %v418 = vld [vmem:[#allocation2 + $0xd9] sm:$0xff]
      %v419 = vld [vmem:[#allocation2 + $0xe1] sm:$0xff]
      %v420 = vld [vmem:[#allocation2 + $0xf1] sm:$0xff]
      %v421 = vld [vmem:[#allocation2 + $0xf9] sm:$0xff]
      %v422 = vld [vmem:[#allocation2 + $0x109] sm:$0xff]
      %v423 = vld [vmem:[#allocation2 + $0x111] sm:$0xff]
      %v424 = vld [vmem:[#allocation2 + $0x121] sm:$0xff]
      %v425 = vld [vmem:[#allocation2 + $0x129] sm:$0xff]
      %v426 = vld [vmem:[#allocation2 + $0x139] sm:$0xff]
      %v427 = vld [vmem:[#allocation2 + $0x141] sm:$0xff]
      %v428 = vld [vmem:[#allocation2 + $0x151] sm:$0xff]
      %v429 = vld [vmem:[#allocation2 + $0x159] sm:$0xff]
      %v430 = vld [vmem:[#allocation2 + $0x169] sm:$0xff]
      %v431 = vld [vmem:[#allocation2 + $0x171] sm:$0xff]
      %464 = vrot.lane.b32.xlu0 %v400, 4
      %v465 = vpop.permute.xlu0 %464
      %466 = vrot.lane.b32.xlu0 %v401, 4
      %v467 = vpop.permute.xlu0 %466
      %468 = vrot.lane.b32.xlu0 %v402, 4
      %v469 = vpop.permute.xlu0 %468
      %470 = vrot.lane.b32.xlu0 %v403, 4
      %v471 = vpop.permute.xlu0 %470
      %472 = vrot.lane.b32.xlu0 %v404, 4
      %v473 = vpop.permute.xlu0 %472
      %474 = vrot.lane.b32.xlu0 %v405, 4
      %v475 = vpop.permute.xlu0 %474
      %476 = vrot.lane.b32.xlu0 %v406, 4
      %v477 = vpop.permute.xlu0 %476
      %478 = vrot.lane.b32.xlu0 %v407, 4
      %v479 = vpop.permute.xlu0 %478
      %480 = vrot.lane.b32.xlu0 %v408, 4
      %v481 = vpop.permute.xlu0 %480
      %482 = vrot.lane.b32.xlu0 %v409, 4
      %v483 = vpop.permute.xlu0 %482
      %484 = vrot.lane.b32.xlu0 %v410, 4
      %v485 = vpop.permute.xlu0 %484
      %486 = vrot.lane.b32.xlu0 %v411, 4
      %v487 = vpop.permute.xlu0 %486
      %488 = vrot.lane.b32.xlu0 %v412, 4
      %v489 = vpop.permute.xlu0 %488
      %490 = vrot.lane.b32.xlu0 %v413, 4
      %v491 = vpop.permute.xlu0 %490
      %492 = vrot.lane.b32.xlu0 %v414, 4
      %v493 = vpop.permute.xlu0 %492
      %494 = vrot.lane.b32.xlu0 %v415, 4
      %v495 = vpop.permute.xlu0 %494
      %496 = vrot.lane.b32.xlu0 %v416, 4
      %v497 = vpop.permute.xlu0 %496
      %498 = vrot.lane.b32.xlu0 %v417, 4
      %v499 = vpop.permute.xlu0 %498
      %500 = vrot.lane.b32.xlu0 %v418, 4
      %v501 = vpop.permute.xlu0 %500
      %502 = vrot.lane.b32.xlu0 %v419, 4
      %v503 = vpop.permute.xlu0 %502
      %504 = vrot.lane.b32.xlu0 %v420, 4
      %v505 = vpop.permute.xlu0 %504
      %506 = vrot.lane.b32.xlu0 %v421, 4
      %v507 = vpop.permute.xlu0 %506
      %508 = vrot.lane.b32.xlu0 %v422, 4
      %v509 = vpop.permute.xlu0 %508
      %510 = vrot.lane.b32.xlu0 %v423, 4
      %v511 = vpop.permute.xlu0 %510
      %512 = vrot.lane.b32.xlu0 %v424, 4
      %v513 = vpop.permute.xlu0 %512
      %514 = vrot.lane.b32.xlu0 %v425, 4
      %v515 = vpop.permute.xlu0 %514
      %516 = vrot.lane.b32.xlu0 %v426, 4
      %v517 = vpop.permute.xlu0 %516
      %518 = vrot.lane.b32.xlu0 %v427, 4
      %v519 = vpop.permute.xlu0 %518
      %520 = vrot.lane.b32.xlu0 %v428, 4
      %v521 = vpop.permute.xlu0 %520
      %522 = vrot.lane.b32.xlu0 %v429, 4
      %v523 = vpop.permute.xlu0 %522
      %524 = vrot.lane.b32.xlu0 %v430, 4
      %v525 = vpop.permute.xlu0 %524
      %526 = vrot.lane.b32.xlu0 %v431, 4
      %v527 = vpop.permute.xlu0 %526
      %vm560 = vcmask 64544
      %561 = vst.msk [vmem:[#allocation3] sm:$0xff] %vm560, %v465
      %562 = vst.msk [vmem:[#allocation3 + $0x8] sm:$0xff] %vm560, %v467
      %563 = vst.msk [vmem:[#allocation3 + $0x10] sm:$0xff] %vm560, %v469
      %564 = vst.msk [vmem:[#allocation3 + $0x18] sm:$0xff] %vm560, %v471
      %565 = vst.msk [vmem:[#allocation3 + $0x20] sm:$0xff] %vm560, %v473
      %566 = vst.msk [vmem:[#allocation3 + $0x28] sm:$0xff] %vm560, %v475
      %567 = vst.msk [vmem:[#allocation3 + $0x30] sm:$0xff] %vm560, %v477
      %568 = vst.msk [vmem:[#allocation3 + $0x38] sm:$0xff] %vm560, %v479
      %569 = vst.msk [vmem:[#allocation3 + $0x40] sm:$0xff] %vm560, %v481
      %570 = vst.msk [vmem:[#allocation3 + $0x48] sm:$0xff] %vm560, %v483
      %571 = vst.msk [vmem:[#allocation3 + $0x50] sm:$0xff] %vm560, %v485
      %572 = vst.msk [vmem:[#allocation3 + $0x58] sm:$0xff] %vm560, %v487
      %573 = vst.msk [vmem:[#allocation3 + $0x60] sm:$0xff] %vm560, %v489
      %574 = vst.msk [vmem:[#allocation3 + $0x68] sm:$0xff] %vm560, %v491
      %575 = vst.msk [vmem:[#allocation3 + $0x70] sm:$0xff] %vm560, %v493
      %576 = vst.msk [vmem:[#allocation3 + $0x78] sm:$0xff] %vm560, %v495
      %577 = vst.msk [vmem:[#allocation3 + $0x80] sm:$0xff] %vm560, %v497
      %578 = vst.msk [vmem:[#allocation3 + $0x88] sm:$0xff] %vm560, %v499
      %579 = vst.msk [vmem:[#allocation3 + $0x90] sm:$0xff] %vm560, %v501
      %580 = vst.msk [vmem:[#allocation3 + $0x98] sm:$0xff] %vm560, %v503
      %581 = vst.msk [vmem:[#allocation3 + $0xa0] sm:$0xff] %vm560, %v505
      %582 = vst.msk [vmem:[#allocation3 + $0xa8] sm:$0xff] %vm560, %v507
      %583 = vst.msk [vmem:[#allocation3 + $0xb0] sm:$0xff] %vm560, %v509
      %584 = vst.msk [vmem:[#allocation3 + $0xb8] sm:$0xff] %vm560, %v511
      %585 = vst.msk [vmem:[#allocation3 + $0xc0] sm:$0xff] %vm560, %v513
      %586 = vst.msk [vmem:[#allocation3 + $0xc8] sm:$0xff] %vm560, %v515
      %587 = vst.msk [vmem:[#allocation3 + $0xd0] sm:$0xff] %vm560, %v517
      %588 = vst.msk [vmem:[#allocation3 + $0xd8] sm:$0xff] %vm560, %v519
      %589 = vst.msk [vmem:[#allocation3 + $0xe0] sm:$0xff] %vm560, %v521
      %590 = vst.msk [vmem:[#allocation3 + $0xe8] sm:$0xff] %vm560, %v523
      %591 = vst.msk [vmem:[#allocation3 + $0xf0] sm:$0xff] %vm560, %v525
      %592 = vst.msk [vmem:[#allocation3 + $0xf8] sm:$0xff] %vm560, %v527
      %v593 = vld [vmem:[#allocation2 + $0x2] sm:$0xff]
      %v594 = vld [vmem:[#allocation2 + $0xa] sm:$0xff]
      %v595 = vld [vmem:[#allocation2 + $0x1a] sm:$0xff]
      %v596 = vld [vmem:[#allocation2 + $0x22] sm:$0xff]
      %v597 = vld [vmem:[#allocation2 + $0x32] sm:$0xff]
      %v598 = vld [vmem:[#allocation2 + $0x3a] sm:$0xff]
      %v599 = vld [vmem:[#allocation2 + $0x4a] sm:$0xff]
      %v600 = vld [vmem:[#allocation2 + $0x52] sm:$0xff]
      %v601 = vld [vmem:[#allocation2 + $0x62] sm:$0xff]
      %v602 = vld [vmem:[#allocation2 + $0x6a] sm:$0xff]
      %v603 = vld [vmem:[#allocation2 + $0x7a] sm:$0xff]
      %v604 = vld [vmem:[#allocation2 + $0x82] sm:$0xff]
      %v605 = vld [vmem:[#allocation2 + $0x92] sm:$0xff]
      %v606 = vld [vmem:[#allocation2 + $0x9a] sm:$0xff]
      %v607 = vld [vmem:[#allocation2 + $0xaa] sm:$0xff]
      %v608 = vld [vmem:[#allocation2 + $0xb2] sm:$0xff]
      %v609 = vld [vmem:[#allocation2 + $0xc2] sm:$0xff]
      %v610 = vld [vmem:[#allocation2 + $0xca] sm:$0xff]
      %v611 = vld [vmem:[#allocation2 + $0xda] sm:$0xff]
      %v612 = vld [vmem:[#allocation2 + $0xe2] sm:$0xff]
      %v613 = vld [vmem:[#allocation2 + $0xf2] sm:$0xff]
      %v614 = vld [vmem:[#allocation2 + $0xfa] sm:$0xff]
      %v615 = vld [vmem:[#allocation2 + $0x10a] sm:$0xff]
      %v616 = vld [vmem:[#allocation2 + $0x112] sm:$0xff]
      %v617 = vld [vmem:[#allocation2 + $0x122] sm:$0xff]
      %v618 = vld [vmem:[#allocation2 + $0x12a] sm:$0xff]
      %v619 = vld [vmem:[#allocation2 + $0x13a] sm:$0xff]
      %v620 = vld [vmem:[#allocation2 + $0x142] sm:$0xff]
      %v621 = vld [vmem:[#allocation2 + $0x152] sm:$0xff]
      %v622 = vld [vmem:[#allocation2 + $0x15a] sm:$0xff]
      %v623 = vld [vmem:[#allocation2 + $0x16a] sm:$0xff]
      %v624 = vld [vmem:[#allocation2 + $0x172] sm:$0xff]
      %657 = vrot.lane.b32.xlu0 %v593, 8
      %v658 = vpop.permute.xlu0 %657
      %659 = vrot.lane.b32.xlu0 %v594, 8
      %v660 = vpop.permute.xlu0 %659
      %661 = vrot.lane.b32.xlu0 %v595, 8
      %v662 = vpop.permute.xlu0 %661
      %663 = vrot.lane.b32.xlu0 %v596, 8
      %v664 = vpop.permute.xlu0 %663
      %665 = vrot.lane.b32.xlu0 %v597, 8
      %v666 = vpop.permute.xlu0 %665
      %667 = vrot.lane.b32.xlu0 %v598, 8
      %v668 = vpop.permute.xlu0 %667
      %669 = vrot.lane.b32.xlu0 %v599, 8
      %v670 = vpop.permute.xlu0 %669
      %671 = vrot.lane.b32.xlu0 %v600, 8
      %v672 = vpop.permute.xlu0 %671
      %673 = vrot.lane.b32.xlu0 %v601, 8
      %v674 = vpop.permute.xlu0 %673
      %675 = vrot.lane.b32.xlu0 %v602, 8
      %v676 = vpop.permute.xlu0 %675
      %677 = vrot.lane.b32.xlu0 %v603, 8
      %v678 = vpop.permute.xlu0 %677
      %679 = vrot.lane.b32.xlu0 %v604, 8
      %v680 = vpop.permute.xlu0 %679
      %681 = vrot.lane.b32.xlu0 %v605, 8
      %v682 = vpop.permute.xlu0 %681
      %683 = vrot.lane.b32.xlu0 %v606, 8
      %v684 = vpop.permute.xlu0 %683
      %685 = vrot.lane.b32.xlu0 %v607, 8
      %v686 = vpop.permute.xlu0 %685
      %687 = vrot.lane.b32.xlu0 %v608, 8
      %v688 = vpop.permute.xlu0 %687
      %689 = vrot.lane.b32.xlu0 %v609, 8
      %v690 = vpop.permute.xlu0 %689
      %691 = vrot.lane.b32.xlu0 %v610, 8
      %v692 = vpop.permute.xlu0 %691
      %693 = vrot.lane.b32.xlu0 %v611, 8
      %v694 = vpop.permute.xlu0 %693
      %695 = vrot.lane.b32.xlu0 %v612, 8
      %v696 = vpop.permute.xlu0 %695
      %697 = vrot.lane.b32.xlu0 %v613, 8
      %v698 = vpop.permute.xlu0 %697
      %699 = vrot.lane.b32.xlu0 %v614, 8
      %v700 = vpop.permute.xlu0 %699
      %701 = vrot.lane.b32.xlu0 %v615, 8
      %v702 = vpop.permute.xlu0 %701
      %703 = vrot.lane.b32.xlu0 %v616, 8
      %v704 = vpop.permute.xlu0 %703
      %705 = vrot.lane.b32.xlu0 %v617, 8
      %v706 = vpop.permute.xlu0 %705
      %707 = vrot.lane.b32.xlu0 %v618, 8
      %v708 = vpop.permute.xlu0 %707
      %709 = vrot.lane.b32.xlu0 %v619, 8
      %v710 = vpop.permute.xlu0 %709
      %711 = vrot.lane.b32.xlu0 %v620, 8
      %v712 = vpop.permute.xlu0 %711
      %713 = vrot.lane.b32.xlu0 %v621, 8
      %v714 = vpop.permute.xlu0 %713
      %715 = vrot.lane.b32.xlu0 %v622, 8
      %v716 = vpop.permute.xlu0 %715
      %717 = vrot.lane.b32.xlu0 %v623, 8
      %v718 = vpop.permute.xlu0 %717
      %719 = vrot.lane.b32.xlu0 %v624, 8
      %v720 = vpop.permute.xlu0 %719
      %vm753 = vcmask 97344
      %754 = vst.msk [vmem:[#allocation3] sm:$0xff] %vm753, %v658
      %755 = vst.msk [vmem:[#allocation3 + $0x8] sm:$0xff] %vm753, %v660
      %756 = vst.msk [vmem:[#allocation3 + $0x10] sm:$0xff] %vm753, %v662
      %757 = vst.msk [vmem:[#allocation3 + $0x18] sm:$0xff] %vm753, %v664
      %758 = vst.msk [vmem:[#allocation3 + $0x20] sm:$0xff] %vm753, %v666
      %759 = vst.msk [vmem:[#allocation3 + $0x28] sm:$0xff] %vm753, %v668
      %760 = vst.msk [vmem:[#allocation3 + $0x30] sm:$0xff] %vm753, %v670
      %761 = vst.msk [vmem:[#allocation3 + $0x38] sm:$0xff] %vm753, %v672
      %762 = vst.msk [vmem:[#allocation3 + $0x40] sm:$0xff] %vm753, %v674
      %763 = vst.msk [vmem:[#allocation3 + $0x48] sm:$0xff] %vm753, %v676
      %764 = vst.msk [vmem:[#allocation3 + $0x50] sm:$0xff] %vm753, %v678
      %765 = vst.msk [vmem:[#allocation3 + $0x58] sm:$0xff] %vm753, %v680
      %766 = vst.msk [vmem:[#allocation3 + $0x60] sm:$0xff] %vm753, %v682
      %767 = vst.msk [vmem:[#allocation3 + $0x68] sm:$0xff] %vm753, %v684
      %768 = vst.msk [vmem:[#allocation3 + $0x70] sm:$0xff] %vm753, %v686
      %769 = vst.msk [vmem:[#allocation3 + $0x78] sm:$0xff] %vm753, %v688
      %770 = vst.msk [vmem:[#allocation3 + $0x80] sm:$0xff] %vm753, %v690
      %771 = vst.msk [vmem:[#allocation3 + $0x88] sm:$0xff] %vm753, %v692
      %772 = vst.msk [vmem:[#allocation3 + $0x90] sm:$0xff] %vm753, %v694
      %773 = vst.msk [vmem:[#allocation3 + $0x98] sm:$0xff] %vm753, %v696
      %774 = vst.msk [vmem:[#allocation3 + $0xa0] sm:$0xff] %vm753, %v698
      %775 = vst.msk [vmem:[#allocation3 + $0xa8] sm:$0xff] %vm753, %v700
      %776 = vst.msk [vmem:[#allocation3 + $0xb0] sm:$0xff] %vm753, %v702
      %777 = vst.msk [vmem:[#allocation3 + $0xb8] sm:$0xff] %vm753, %v704
      %778 = vst.msk [vmem:[#allocation3 + $0xc0] sm:$0xff] %vm753, %v706
      %779 = vst.msk [vmem:[#allocation3 + $0xc8] sm:$0xff] %vm753, %v708
      %780 = vst.msk [vmem:[#allocation3 + $0xd0] sm:$0xff] %vm753, %v710
      %781 = vst.msk [vmem:[#allocation3 + $0xd8] sm:$0xff] %vm753, %v712
      %782 = vst.msk [vmem:[#allocation3 + $0xe0] sm:$0xff] %vm753, %v714
      %783 = vst.msk [vmem:[#allocation3 + $0xe8] sm:$0xff] %vm753, %v716
      %784 = vst.msk [vmem:[#allocation3 + $0xf0] sm:$0xff] %vm753, %v718
      %785 = vst.msk [vmem:[#allocation3 + $0xf8] sm:$0xff] %vm753, %v720
      %v786 = vld [vmem:[%s303] sm:$0xff]
      %v787 = vld [vmem:[%s303 + $0x8] sm:$0xff]
      %v788 = vld [vmem:[%s303 + $0x18] sm:$0xff]
      %v789 = vld [vmem:[%s303 + $0x20] sm:$0xff]
      %v790 = vld [vmem:[%s303 + $0x30] sm:$0xff]
      %v791 = vld [vmem:[%s303 + $0x38] sm:$0xff]
      %v792 = vld [vmem:[%s303 + $0x48] sm:$0xff]
      %v793 = vld [vmem:[%s303 + $0x50] sm:$0xff]
      %v794 = vld [vmem:[%s303 + $0x60] sm:$0xff]
      %v795 = vld [vmem:[%s303 + $0x68] sm:$0xff]
      %v796 = vld [vmem:[%s303 + $0x78] sm:$0xff]
      %v797 = vld [vmem:[%s303 + $0x80] sm:$0xff]
      %v798 = vld [vmem:[%s303 + $0x90] sm:$0xff]
      %v799 = vld [vmem:[%s303 + $0x98] sm:$0xff]
      %v800 = vld [vmem:[%s303 + $0xa8] sm:$0xff]
      %v801 = vld [vmem:[%s303 + $0xb0] sm:$0xff]
      %v802 = vld [vmem:[%s303 + $0xc0] sm:$0xff]
      %v803 = vld [vmem:[%s303 + $0xc8] sm:$0xff]
      %v804 = vld [vmem:[%s303 + $0xd8] sm:$0xff]
      %v805 = vld [vmem:[%s303 + $0xe0] sm:$0xff]
      %v806 = vld [vmem:[%s303 + $0xf0] sm:$0xff]
      %v807 = vld [vmem:[%s303 + $0xf8] sm:$0xff]
      %v808 = vld [vmem:[%s303 + $0x108] sm:$0xff]
      %v809 = vld [vmem:[%s303 + $0x110] sm:$0xff]
      %v810 = vld [vmem:[%s303 + $0x120] sm:$0xff]
      %v811 = vld [vmem:[%s303 + $0x128] sm:$0xff]
      %v812 = vld [vmem:[%s303 + $0x138] sm:$0xff]
      %v813 = vld [vmem:[%s303 + $0x140] sm:$0xff]
      %v814 = vld [vmem:[%s303 + $0x150] sm:$0xff]
      %v815 = vld [vmem:[%s303 + $0x158] sm:$0xff]
      %v816 = vld [vmem:[%s303 + $0x168] sm:$0xff]
      %v817 = vld [vmem:[%s303 + $0x170] sm:$0xff]
      %850 = vrot.lane.b32.xlu0 %v786, 12
      %v851 = vpop.permute.xlu0 %850
      %852 = vrot.lane.b32.xlu0 %v787, 12
      %v853 = vpop.permute.xlu0 %852
      %854 = vrot.lane.b32.xlu0 %v788, 12
      %v855 = vpop.permute.xlu0 %854
      %856 = vrot.lane.b32.xlu0 %v789, 12
      %v857 = vpop.permute.xlu0 %856
      %858 = vrot.lane.b32.xlu0 %v790, 12
      %v859 = vpop.permute.xlu0 %858
      %860 = vrot.lane.b32.xlu0 %v791, 12
      %v861 = vpop.permute.xlu0 %860
      %862 = vrot.lane.b32.xlu0 %v792, 12
      %v863 = vpop.permute.xlu0 %862
      %864 = vrot.lane.b32.xlu0 %v793, 12
      %v865 = vpop.permute.xlu0 %864
      %866 = vrot.lane.b32.xlu0 %v794, 12
      %v867 = vpop.permute.xlu0 %866
      %868 = vrot.lane.b32.xlu0 %v795, 12
      %v869 = vpop.permute.xlu0 %868
      %870 = vrot.lane.b32.xlu0 %v796, 12
      %v871 = vpop.permute.xlu0 %870
      %872 = vrot.lane.b32.xlu0 %v797, 12
      %v873 = vpop.permute.xlu0 %872
      %874 = vrot.lane.b32.xlu0 %v798, 12
      %v875 = vpop.permute.xlu0 %874
      %876 = vrot.lane.b32.xlu0 %v799, 12
      %v877 = vpop.permute.xlu0 %876
      %878 = vrot.lane.b32.xlu0 %v800, 12
      %v879 = vpop.permute.xlu0 %878
      %880 = vrot.lane.b32.xlu0 %v801, 12
      %v881 = vpop.permute.xlu0 %880
      %882 = vrot.lane.b32.xlu0 %v802, 12
      %v883 = vpop.permute.xlu0 %882
      %884 = vrot.lane.b32.xlu0 %v803, 12
      %v885 = vpop.permute.xlu0 %884
      %886 = vrot.lane.b32.xlu0 %v804, 12
      %v887 = vpop.permute.xlu0 %886
      %888 = vrot.lane.b32.xlu0 %v805, 12
      %v889 = vpop.permute.xlu0 %888
      %890 = vrot.lane.b32.xlu0 %v806, 12
      %v891 = vpop.permute.xlu0 %890
      %892 = vrot.lane.b32.xlu0 %v807, 12
      %v893 = vpop.permute.xlu0 %892
      %894 = vrot.lane.b32.xlu0 %v808, 12
      %v895 = vpop.permute.xlu0 %894
      %896 = vrot.lane.b32.xlu0 %v809, 12
      %v897 = vpop.permute.xlu0 %896
      %898 = vrot.lane.b32.xlu0 %v810, 12
      %v899 = vpop.permute.xlu0 %898
      %900 = vrot.lane.b32.xlu0 %v811, 12
      %v901 = vpop.permute.xlu0 %900
      %902 = vrot.lane.b32.xlu0 %v812, 12
      %v903 = vpop.permute.xlu0 %902
      %904 = vrot.lane.b32.xlu0 %v813, 12
      %v905 = vpop.permute.xlu0 %904
      %906 = vrot.lane.b32.xlu0 %v814, 12
      %v907 = vpop.permute.xlu0 %906
      %908 = vrot.lane.b32.xlu0 %v815, 12
      %v909 = vpop.permute.xlu0 %908
      %910 = vrot.lane.b32.xlu0 %v816, 12
      %v911 = vpop.permute.xlu0 %910
      %912 = vrot.lane.b32.xlu0 %v817, 12
      %v913 = vpop.permute.xlu0 %912
      %vm946 = vcmask 130144
      %947 = vst.msk [vmem:[#allocation3] sm:$0xff] %vm946, %v851
      %948 = vst.msk [vmem:[#allocation3 + $0x8] sm:$0xff] %vm946, %v853
      %949 = vst.msk [vmem:[#allocation3 + $0x10] sm:$0xff] %vm946, %v855
      %950 = vst.msk [vmem:[#allocation3 + $0x18] sm:$0xff] %vm946, %v857
      %951 = vst.msk [vmem:[#allocation3 + $0x20] sm:$0xff] %vm946, %v859
      %952 = vst.msk [vmem:[#allocation3 + $0x28] sm:$0xff] %vm946, %v861
      %953 = vst.msk [vmem:[#allocation3 + $0x30] sm:$0xff] %vm946, %v863
      %954 = vst.msk [vmem:[#allocation3 + $0x38] sm:$0xff] %vm946, %v865
      %955 = vst.msk [vmem:[#allocation3 + $0x40] sm:$0xff] %vm946, %v867
      %956 = vst.msk [vmem:[#allocation3 + $0x48] sm:$0xff] %vm946, %v869
      %957 = vst.msk [vmem:[#allocation3 + $0x50] sm:$0xff] %vm946, %v871
      %958 = vst.msk [vmem:[#allocation3 + $0x58] sm:$0xff] %vm946, %v873
      %959 = vst.msk [vmem:[#allocation3 + $0x60] sm:$0xff] %vm946, %v875
      %960 = vst.msk [vmem:[#allocation3 + $0x68] sm:$0xff] %vm946, %v877
      %961 = vst.msk [vmem:[#allocation3 + $0x70] sm:$0xff] %vm946, %v879
      %962 = vst.msk [vmem:[#allocation3 + $0x78] sm:$0xff] %vm946, %v881
      %963 = vst.msk [vmem:[#allocation3 + $0x80] sm:$0xff] %vm946, %v883
      %964 = vst.msk [vmem:[#allocation3 + $0x88] sm:$0xff] %vm946, %v885
      %965 = vst.msk [vmem:[#allocation3 + $0x90] sm:$0xff] %vm946, %v887
      %966 = vst.msk [vmem:[#allocation3 + $0x98] sm:$0xff] %vm946, %v889
      %967 = vst.msk [vmem:[#allocation3 + $0xa0] sm:$0xff] %vm946, %v891
      %968 = vst.msk [vmem:[#allocation3 + $0xa8] sm:$0xff] %vm946, %v893
      %969 = vst.msk [vmem:[#allocation3 + $0xb0] sm:$0xff] %vm946, %v895
      %970 = vst.msk [vmem:[#allocation3 + $0xb8] sm:$0xff] %vm946, %v897
      %971 = vst.msk [vmem:[#allocation3 + $0xc0] sm:$0xff] %vm946, %v899
      %972 = vst.msk [vmem:[#allocation3 + $0xc8] sm:$0xff] %vm946, %v901
      %973 = vst.msk [vmem:[#allocation3 + $0xd0] sm:$0xff] %vm946, %v903
      %974 = vst.msk [vmem:[#allocation3 + $0xd8] sm:$0xff] %vm946, %v905
      %975 = vst.msk [vmem:[#allocation3 + $0xe0] sm:$0xff] %vm946, %v907
      %976 = vst.msk [vmem:[#allocation3 + $0xe8] sm:$0xff] %vm946, %v909
      %977 = vst.msk [vmem:[#allocation3 + $0xf0] sm:$0xff] %vm946, %v911
      %978 = vst.msk [vmem:[#allocation3 + $0xf8] sm:$0xff] %vm946, %v913
      %v979 = vld [vmem:[%s303 + $0x1] sm:$0xff]
      %v980 = vld [vmem:[%s303 + $0x9] sm:$0xff]
      %v981 = vld [vmem:[%s303 + $0x19] sm:$0xff]
      %v982 = vld [vmem:[%s303 + $0x21] sm:$0xff]
      %v983 = vld [vmem:[%s303 + $0x31] sm:$0xff]
      %v984 = vld [vmem:[%s303 + $0x39] sm:$0xff]
      %v985 = vld [vmem:[%s303 + $0x49] sm:$0xff]
      %v986 = vld [vmem:[%s303 + $0x51] sm:$0xff]
      %v987 = vld [vmem:[%s303 + $0x61] sm:$0xff]
      %v988 = vld [vmem:[%s303 + $0x69] sm:$0xff]
      %v989 = vld [vmem:[%s303 + $0x79] sm:$0xff]
      %v990 = vld [vmem:[%s303 + $0x81] sm:$0xff]
      %v991 = vld [vmem:[%s303 + $0x91] sm:$0xff]
      %v992 = vld [vmem:[%s303 + $0x99] sm:$0xff]
      %v993 = vld [vmem:[%s303 + $0xa9] sm:$0xff]
      %v994 = vld [vmem:[%s303 + $0xb1] sm:$0xff]
      %v995 = vld [vmem:[%s303 + $0xc1] sm:$0xff]
      %v996 = vld [vmem:[%s303 + $0xc9] sm:$0xff]
      %v997 = vld [vmem:[%s303 + $0xd9] sm:$0xff]
      %v998 = vld [vmem:[%s303 + $0xe1] sm:$0xff]
      %v999 = vld [vmem:[%s303 + $0xf1] sm:$0xff]
      %v1000 = vld [vmem:[%s303 + $0xf9] sm:$0xff]
      %v1001 = vld [vmem:[%s303 + $0x109] sm:$0xff]
      %v1002 = vld [vmem:[%s303 + $0x111] sm:$0xff]
      %v1003 = vld [vmem:[%s303 + $0x121] sm:$0xff]
      %v1004 = vld [vmem:[%s303 + $0x129] sm:$0xff]
      %v1005 = vld [vmem:[%s303 + $0x139] sm:$0xff]
      %v1006 = vld [vmem:[%s303 + $0x141] sm:$0xff]
      %v1007 = vld [vmem:[%s303 + $0x151] sm:$0xff]
      %v1008 = vld [vmem:[%s303 + $0x159] sm:$0xff]
      %v1009 = vld [vmem:[%s303 + $0x169] sm:$0xff]
      %v1010 = vld [vmem:[%s303 + $0x171] sm:$0xff]
      %1043 = vrot.lane.b32.xlu0 %v979, 16
      %v1044 = vpop.permute.xlu0 %1043
      %1045 = vrot.lane.b32.xlu0 %v980, 16
      %v1046 = vpop.permute.xlu0 %1045
      %1047 = vrot.lane.b32.xlu0 %v981, 16
      %v1048 = vpop.permute.xlu0 %1047
      %1049 = vrot.lane.b32.xlu0 %v982, 16
      %v1050 = vpop.permute.xlu0 %1049
      %1051 = vrot.lane.b32.xlu0 %v983, 16
      %v1052 = vpop.permute.xlu0 %1051
      %1053 = vrot.lane.b32.xlu0 %v984, 16
      %v1054 = vpop.permute.xlu0 %1053
      %1055 = vrot.lane.b32.xlu0 %v985, 16
      %v1056 = vpop.permute.xlu0 %1055
      %1057 = vrot.lane.b32.xlu0 %v986, 16
      %v1058 = vpop.permute.xlu0 %1057
      %1059 = vrot.lane.b32.xlu0 %v987, 16
      %v1060 = vpop.permute.xlu0 %1059
      %1061 = vrot.lane.b32.xlu0 %v988, 16
      %v1062 = vpop.permute.xlu0 %1061
      %1063 = vrot.lane.b32.xlu0 %v989, 16
      %v1064 = vpop.permute.xlu0 %1063
      %1065 = vrot.lane.b32.xlu0 %v990, 16
      %v1066 = vpop.permute.xlu0 %1065
      %1067 = vrot.lane.b32.xlu0 %v991, 16
      %v1068 = vpop.permute.xlu0 %1067
      %1069 = vrot.lane.b32.xlu0 %v992, 16
      %v1070 = vpop.permute.xlu0 %1069
      %1071 = vrot.lane.b32.xlu0 %v993, 16
      %v1072 = vpop.permute.xlu0 %1071
      %1073 = vrot.lane.b32.xlu0 %v994, 16
      %v1074 = vpop.permute.xlu0 %1073
      %1075 = vrot.lane.b32.xlu0 %v995, 16
      %v1076 = vpop.permute.xlu0 %1075
      %1077 = vrot.lane.b32.xlu0 %v996, 16
      %v1078 = vpop.permute.xlu0 %1077
      %1079 = vrot.lane.b32.xlu0 %v997, 16
      %v1080 = vpop.permute.xlu0 %1079
      %1081 = vrot.lane.b32.xlu0 %v998, 16
      %v1082 = vpop.permute.xlu0 %1081
      %1083 = vrot.lane.b32.xlu0 %v999, 16
      %v1084 = vpop.permute.xlu0 %1083
      %1085 = vrot.lane.b32.xlu0 %v1000, 16
      %v1086 = vpop.permute.xlu0 %1085
      %1087 = vrot.lane.b32.xlu0 %v1001, 16
      %v1088 = vpop.permute.xlu0 %1087
      %1089 = vrot.lane.b32.xlu0 %v1002, 16
      %v1090 = vpop.permute.xlu0 %1089
      %1091 = vrot.lane.b32.xlu0 %v1003, 16
      %v1092 = vpop.permute.xlu0 %1091
      %1093 = vrot.lane.b32.xlu0 %v1004, 16
      %v1094 = vpop.permute.xlu0 %1093
      %1095 = vrot.lane.b32.xlu0 %v1005, 16
      %v1096 = vpop.permute.xlu0 %1095
      %1097 = vrot.lane.b32.xlu0 %v1006, 16
      %v1098 = vpop.permute.xlu0 %1097
      %1099 = vrot.lane.b32.xlu0 %v1007, 16
      %v1100 = vpop.permute.xlu0 %1099
      %1101 = vrot.lane.b32.xlu0 %v1008, 16
      %v1102 = vpop.permute.xlu0 %1101
      %1103 = vrot.lane.b32.xlu0 %v1009, 16
      %v1104 = vpop.permute.xlu0 %1103
      %1105 = vrot.lane.b32.xlu0 %v1010, 16
      %v1106 = vpop.permute.xlu0 %1105
      %vm1139 = vcmask 162944
      %1140 = vst.msk [vmem:[#allocation3] sm:$0xff] %vm1139, %v1044
      %1141 = vst.msk [vmem:[#allocation3 + $0x8] sm:$0xff] %vm1139, %v1046
      %1142 = vst.msk [vmem:[#allocation3 + $0x10] sm:$0xff] %vm1139, %v1048
      %1143 = vst.msk [vmem:[#allocation3 + $0x18] sm:$0xff] %vm1139, %v1050
      %1144 = vst.msk [vmem:[#allocation3 + $0x20] sm:$0xff] %vm1139, %v1052
      %1145 = vst.msk [vmem:[#allocation3 + $0x28] sm:$0xff] %vm1139, %v1054
      %1146 = vst.msk [vmem:[#allocation3 + $0x30] sm:$0xff] %vm1139, %v1056
      %1147 = vst.msk [vmem:[#allocation3 + $0x38] sm:$0xff] %vm1139, %v1058
      %1148 = vst.msk [vmem:[#allocation3 + $0x40] sm:$0xff] %vm1139, %v1060
      %1149 = vst.msk [vmem:[#allocation3 + $0x48] sm:$0xff] %vm1139, %v1062
      %1150 = vst.msk [vmem:[#allocation3 + $0x50] sm:$0xff] %vm1139, %v1064
      %1151 = vst.msk [vmem:[#allocation3 + $0x58] sm:$0xff] %vm1139, %v1066
      %1152 = vst.msk [vmem:[#allocation3 + $0x60] sm:$0xff] %vm1139, %v1068
      %1153 = vst.msk [vmem:[#allocation3 + $0x68] sm:$0xff] %vm1139, %v1070
      %1154 = vst.msk [vmem:[#allocation3 + $0x70] sm:$0xff] %vm1139, %v1072
      %1155 = vst.msk [vmem:[#allocation3 + $0x78] sm:$0xff] %vm1139, %v1074
      %1156 = vst.msk [vmem:[#allocation3 + $0x80] sm:$0xff] %vm1139, %v1076
      %1157 = vst.msk [vmem:[#allocation3 + $0x88] sm:$0xff] %vm1139, %v1078
      %1158 = vst.msk [vmem:[#allocation3 + $0x90] sm:$0xff] %vm1139, %v1080
      %1159 = vst.msk [vmem:[#allocation3 + $0x98] sm:$0xff] %vm1139, %v1082
      %1160 = vst.msk [vmem:[#allocation3 + $0xa0] sm:$0xff] %vm1139, %v1084
      %1161 = vst.msk [vmem:[#allocation3 + $0xa8] sm:$0xff] %vm1139, %v1086
      %1162 = vst.msk [vmem:[#allocation3 + $0xb0] sm:$0xff] %vm1139, %v1088
      %1163 = vst.msk [vmem:[#allocation3 + $0xb8] sm:$0xff] %vm1139, %v1090
      %1164 = vst.msk [vmem:[#allocation3 + $0xc0] sm:$0xff] %vm1139, %v1092
      %1165 = vst.msk [vmem:[#allocation3 + $0xc8] sm:$0xff] %vm1139, %v1094
      %1166 = vst.msk [vmem:[#allocation3 + $0xd0] sm:$0xff] %vm1139, %v1096
      %1167 = vst.msk [vmem:[#allocation3 + $0xd8] sm:$0xff] %vm1139, %v1098
      %1168 = vst.msk [vmem:[#allocation3 + $0xe0] sm:$0xff] %vm1139, %v1100
      %1169 = vst.msk [vmem:[#allocation3 + $0xe8] sm:$0xff] %vm1139, %v1102
      %1170 = vst.msk [vmem:[#allocation3 + $0xf0] sm:$0xff] %vm1139, %v1104
      %1171 = vst.msk [vmem:[#allocation3 + $0xf8] sm:$0xff] %vm1139, %v1106
      %v1172 = vld [vmem:[%s303 + $0x2] sm:$0xff]
      %v1173 = vld [vmem:[%s303 + $0xa] sm:$0xff]
      %v1174 = vld [vmem:[%s303 + $0x1a] sm:$0xff]
      %v1175 = vld [vmem:[%s303 + $0x22] sm:$0xff]
      %v1176 = vld [vmem:[%s303 + $0x32] sm:$0xff]
      %v1177 = vld [vmem:[%s303 + $0x3a] sm:$0xff]
      %v1178 = vld [vmem:[%s303 + $0x4a] sm:$0xff]
      %v1179 = vld [vmem:[%s303 + $0x52] sm:$0xff]
      %v1180 = vld [vmem:[%s303 + $0x62] sm:$0xff]
      %v1181 = vld [vmem:[%s303 + $0x6a] sm:$0xff]
      %v1182 = vld [vmem:[%s303 + $0x7a] sm:$0xff]
      %v1183 = vld [vmem:[%s303 + $0x82] sm:$0xff]
      %v1184 = vld [vmem:[%s303 + $0x92] sm:$0xff]
      %v1185 = vld [vmem:[%s303 + $0x9a] sm:$0xff]
      %v1186 = vld [vmem:[%s303 + $0xaa] sm:$0xff]
      %v1187 = vld [vmem:[%s303 + $0xb2] sm:$0xff]
      %v1188 = vld [vmem:[%s303 + $0xc2] sm:$0xff]
      %v1189 = vld [vmem:[%s303 + $0xca] sm:$0xff]
      %v1190 = vld [vmem:[%s303 + $0xda] sm:$0xff]
      %v1191 = vld [vmem:[%s303 + $0xe2] sm:$0xff]
      %v1192 = vld [vmem:[%s303 + $0xf2] sm:$0xff]
      %v1193 = vld [vmem:[%s303 + $0xfa] sm:$0xff]
      %v1194 = vld [vmem:[%s303 + $0x10a] sm:$0xff]
      %v1195 = vld [vmem:[%s303 + $0x112] sm:$0xff]
      %v1196 = vld [vmem:[%s303 + $0x122] sm:$0xff]
      %v1197 = vld [vmem:[%s303 + $0x12a] sm:$0xff]
      %v1198 = vld [vmem:[%s303 + $0x13a] sm:$0xff]
      %v1199 = vld [vmem:[%s303 + $0x142] sm:$0xff]
      %v1200 = vld [vmem:[%s303 + $0x152] sm:$0xff]
      %v1201 = vld [vmem:[%s303 + $0x15a] sm:$0xff]
      %v1202 = vld [vmem:[%s303 + $0x16a] sm:$0xff]
      %v1203 = vld [vmem:[%s303 + $0x172] sm:$0xff]
      %1236 = vrot.lane.b32.xlu0 %v1172, 20
      %v1237 = vpop.permute.xlu0 %1236
      %1238 = vrot.lane.b32.xlu0 %v1173, 20
      %v1239 = vpop.permute.xlu0 %1238
      %1240 = vrot.lane.b32.xlu0 %v1174, 20
      %v1241 = vpop.permute.xlu0 %1240
      %1242 = vrot.lane.b32.xlu0 %v1175, 20
      %v1243 = vpop.permute.xlu0 %1242
      %1244 = vrot.lane.b32.xlu0 %v1176, 20
      %v1245 = vpop.permute.xlu0 %1244
      %1246 = vrot.lane.b32.xlu0 %v1177, 20
      %v1247 = vpop.permute.xlu0 %1246
      %1248 = vrot.lane.b32.xlu0 %v1178, 20
      %v1249 = vpop.permute.xlu0 %1248
      %1250 = vrot.lane.b32.xlu0 %v1179, 20
      %v1251 = vpop.permute.xlu0 %1250
      %1252 = vrot.lane.b32.xlu0 %v1180, 20
      %v1253 = vpop.permute.xlu0 %1252
      %1254 = vrot.lane.b32.xlu0 %v1181, 20
      %v1255 = vpop.permute.xlu0 %1254
      %1256 = vrot.lane.b32.xlu0 %v1182, 20
      %v1257 = vpop.permute.xlu0 %1256
      %1258 = vrot.lane.b32.xlu0 %v1183, 20
      %v1259 = vpop.permute.xlu0 %1258
      %1260 = vrot.lane.b32.xlu0 %v1184, 20
      %v1261 = vpop.permute.xlu0 %1260
      %1262 = vrot.lane.b32.xlu0 %v1185, 20
      %v1263 = vpop.permute.xlu0 %1262
      %1264 = vrot.lane.b32.xlu0 %v1186, 20
      %v1265 = vpop.permute.xlu0 %1264
      %1266 = vrot.lane.b32.xlu0 %v1187, 20
      %v1267 = vpop.permute.xlu0 %1266
      %1268 = vrot.lane.b32.xlu0 %v1188, 20
      %v1269 = vpop.permute.xlu0 %1268
      %1270 = vrot.lane.b32.xlu0 %v1189, 20
      %v1271 = vpop.permute.xlu0 %1270
      %1272 = vrot.lane.b32.xlu0 %v1190, 20
      %v1273 = vpop.permute.xlu0 %1272
      %1274 = vrot.lane.b32.xlu0 %v1191, 20
      %v1275 = vpop.permute.xlu0 %1274
      %1276 = vrot.lane.b32.xlu0 %v1192, 20
      %v1277 = vpop.permute.xlu0 %1276
      %1278 = vrot.lane.b32.xlu0 %v1193, 20
      %v1279 = vpop.permute.xlu0 %1278
      %1280 = vrot.lane.b32.xlu0 %v1194, 20
      %v1281 = vpop.permute.xlu0 %1280
      %1282 = vrot.lane.b32.xlu0 %v1195, 20
      %v1283 = vpop.permute.xlu0 %1282
      %1284 = vrot.lane.b32.xlu0 %v1196, 20
      %v1285 = vpop.permute.xlu0 %1284
      %1286 = vrot.lane.b32.xlu0 %v1197, 20
      %v1287 = vpop.permute.xlu0 %1286
      %1288 = vrot.lane.b32.xlu0 %v1198, 20
      %v1289 = vpop.permute.xlu0 %1288
      %1290 = vrot.lane.b32.xlu0 %v1199, 20
      %v1291 = vpop.permute.xlu0 %1290
      %1292 = vrot.lane.b32.xlu0 %v1200, 20
      %v1293 = vpop.permute.xlu0 %1292
      %1294 = vrot.lane.b32.xlu0 %v1201, 20
      %v1295 = vpop.permute.xlu0 %1294
      %1296 = vrot.lane.b32.xlu0 %v1202, 20
      %v1297 = vpop.permute.xlu0 %1296
      %1298 = vrot.lane.b32.xlu0 %v1203, 20
      %v1299 = vpop.permute.xlu0 %1298
      %vm1332 = vcmask 195744
      %1333 = vst.msk [vmem:[#allocation3] sm:$0xff] %vm1332, %v1237
      %1334 = vst.msk [vmem:[#allocation3 + $0x8] sm:$0xff] %vm1332, %v1239
      %1335 = vst.msk [vmem:[#allocation3 + $0x10] sm:$0xff] %vm1332, %v1241
      %1336 = vst.msk [vmem:[#allocation3 + $0x18] sm:$0xff] %vm1332, %v1243
      %1337 = vst.msk [vmem:[#allocation3 + $0x20] sm:$0xff] %vm1332, %v1245
      %1338 = vst.msk [vmem:[#allocation3 + $0x28] sm:$0xff] %vm1332, %v1247
      %1339 = vst.msk [vmem:[#allocation3 + $0x30] sm:$0xff] %vm1332, %v1249
      %1340 = vst.msk [vmem:[#allocation3 + $0x38] sm:$0xff] %vm1332, %v1251
      %1341 = vst.msk [vmem:[#allocation3 + $0x40] sm:$0xff] %vm1332, %v1253
      %1342 = vst.msk [vmem:[#allocation3 + $0x48] sm:$0xff] %vm1332, %v1255
      %1343 = vst.msk [vmem:[#allocation3 + $0x50] sm:$0xff] %vm1332, %v1257
      %1344 = vst.msk [vmem:[#allocation3 + $0x58] sm:$0xff] %vm1332, %v1259
      %1345 = vst.msk [vmem:[#allocation3 + $0x60] sm:$0xff] %vm1332, %v1261
      %1346 = vst.msk [vmem:[#allocation3 + $0x68] sm:$0xff] %vm1332, %v1263
      %1347 = vst.msk [vmem:[#allocation3 + $0x70] sm:$0xff] %vm1332, %v1265
      %1348 = vst.msk [vmem:[#allocation3 + $0x78] sm:$0xff] %vm1332, %v1267
      %1349 = vst.msk [vmem:[#allocation3 + $0x80] sm:$0xff] %vm1332, %v1269
      %1350 = vst.msk [vmem:[#allocation3 + $0x88] sm:$0xff] %vm1332, %v1271
      %1351 = vst.msk [vmem:[#allocation3 + $0x90] sm:$0xff] %vm1332, %v1273
      %1352 = vst.msk [vmem:[#allocation3 + $0x98] sm:$0xff] %vm1332, %v1275
      %1353 = vst.msk [vmem:[#allocation3 + $0xa0] sm:$0xff] %vm1332, %v1277
      %1354 = vst.msk [vmem:[#allocation3 + $0xa8] sm:$0xff] %vm1332, %v1279
      %1355 = vst.msk [vmem:[#allocation3 + $0xb0] sm:$0xff] %vm1332, %v1281
      %1356 = vst.msk [vmem:[#allocation3 + $0xb8] sm:$0xff] %vm1332, %v1283
      %1357 = vst.msk [vmem:[#allocation3 + $0xc0] sm:$0xff] %vm1332, %v1285
      %1358 = vst.msk [vmem:[#allocation3 + $0xc8] sm:$0xff] %vm1332, %v1287
      %1359 = vst.msk [vmem:[#allocation3 + $0xd0] sm:$0xff] %vm1332, %v1289
      %1360 = vst.msk [vmem:[#allocation3 + $0xd8] sm:$0xff] %vm1332, %v1291
      %1361 = vst.msk [vmem:[#allocation3 + $0xe0] sm:$0xff] %vm1332, %v1293
      %1362 = vst.msk [vmem:[#allocation3 + $0xe8] sm:$0xff] %vm1332, %v1295
      %1363 = vst.msk [vmem:[#allocation3 + $0xf0] sm:$0xff] %vm1332, %v1297
      %1364 = vst.msk [vmem:[#allocation3 + $0xf8] sm:$0xff] %vm1332, %v1299
      %s1365 = scalar_lea.vmem [#allocation2], 48
      %v1366 = vld [vmem:[%s1365] sm:$0xff]
      %v1367 = vld [vmem:[%s1365 + $0x8] sm:$0xff]
      %v1368 = vld [vmem:[%s1365 + $0x18] sm:$0xff]
      %v1369 = vld [vmem:[%s1365 + $0x20] sm:$0xff]
      %v1370 = vld [vmem:[%s1365 + $0x30] sm:$0xff]
      %v1371 = vld [vmem:[%s1365 + $0x38] sm:$0xff]
      %v1372 = vld [vmem:[%s1365 + $0x48] sm:$0xff]
      %v1373 = vld [vmem:[%s1365 + $0x50] sm:$0xff]
      %v1374 = vld [vmem:[%s1365 + $0x60] sm:$0xff]
      %v1375 = vld [vmem:[%s1365 + $0x68] sm:$0xff]
      %v1376 = vld [vmem:[%s1365 + $0x78] sm:$0xff]
      %v1377 = vld [vmem:[%s1365 + $0x80] sm:$0xff]
      %v1378 = vld [vmem:[%s1365 + $0x90] sm:$0xff]
      %v1379 = vld [vmem:[%s1365 + $0x98] sm:$0xff]
      %v1380 = vld [vmem:[%s1365 + $0xa8] sm:$0xff]
      %v1381 = vld [vmem:[%s1365 + $0xb0] sm:$0xff]
      %v1382 = vld [vmem:[%s1365 + $0xc0] sm:$0xff]
      %v1383 = vld [vmem:[%s1365 + $0xc8] sm:$0xff]
      %v1384 = vld [vmem:[%s1365 + $0xd8] sm:$0xff]
      %v1385 = vld [vmem:[%s1365 + $0xe0] sm:$0xff]
      %v1386 = vld [vmem:[%s1365 + $0xf0] sm:$0xff]
      %v1387 = vld [vmem:[%s1365 + $0xf8] sm:$0xff]
      %v1388 = vld [vmem:[%s1365 + $0x108] sm:$0xff]
      %v1389 = vld [vmem:[%s1365 + $0x110] sm:$0xff]
      %v1390 = vld [vmem:[%s1365 + $0x120] sm:$0xff]
      %v1391 = vld [vmem:[%s1365 + $0x128] sm:$0xff]
      %v1392 = vld [vmem:[%s1365 + $0x138] sm:$0xff]
      %v1393 = vld [vmem:[%s1365 + $0x140] sm:$0xff]
      %v1394 = vld [vmem:[%s1365 + $0x150] sm:$0xff]
      %v1395 = vld [vmem:[%s1365 + $0x158] sm:$0xff]
      %v1396 = vld [vmem:[%s1365 + $0x168] sm:$0xff]
      %v1397 = vld [vmem:[%s1365 + $0x170] sm:$0xff]
      %1430 = vrot.lane.b32.xlu0 %v1366, 24
      %v1431 = vpop.permute.xlu0 %1430
      %1432 = vrot.lane.b32.xlu0 %v1367, 24
      %v1433 = vpop.permute.xlu0 %1432
      %1434 = vrot.lane.b32.xlu0 %v1368, 24
      %v1435 = vpop.permute.xlu0 %1434
      %1436 = vrot.lane.b32.xlu0 %v1369, 24
      %v1437 = vpop.permute.xlu0 %1436
      %1438 = vrot.lane.b32.xlu0 %v1370, 24
      %v1439 = vpop.permute.xlu0 %1438
      %1440 = vrot.lane.b32.xlu0 %v1371, 24
      %v1441 = vpop.permute.xlu0 %1440
      %1442 = vrot.lane.b32.xlu0 %v1372, 24
      %v1443 = vpop.permute.xlu0 %1442
      %1444 = vrot.lane.b32.xlu0 %v1373, 24
      %v1445 = vpop.permute.xlu0 %1444
      %1446 = vrot.lane.b32.xlu0 %v1374, 24
      %v1447 = vpop.permute.xlu0 %1446
      %1448 = vrot.lane.b32.xlu0 %v1375, 24
      %v1449 = vpop.permute.xlu0 %1448
      %1450 = vrot.lane.b32.xlu0 %v1376, 24
      %v1451 = vpop.permute.xlu0 %1450
      %1452 = vrot.lane.b32.xlu0 %v1377, 24
      %v1453 = vpop.permute.xlu0 %1452
      %1454 = vrot.lane.b32.xlu0 %v1378, 24
      %v1455 = vpop.permute.xlu0 %1454
      %1456 = vrot.lane.b32.xlu0 %v1379, 24
      %v1457 = vpop.permute.xlu0 %1456
      %1458 = vrot.lane.b32.xlu0 %v1380, 24
      %v1459 = vpop.permute.xlu0 %1458
      %1460 = vrot.lane.b32.xlu0 %v1381, 24
      %v1461 = vpop.permute.xlu0 %1460
      %1462 = vrot.lane.b32.xlu0 %v1382, 24
      %v1463 = vpop.permute.xlu0 %1462
      %1464 = vrot.lane.b32.xlu0 %v1383, 24
      %v1465 = vpop.permute.xlu0 %1464
      %1466 = vrot.lane.b32.xlu0 %v1384, 24
      %v1467 = vpop.permute.xlu0 %1466
      %1468 = vrot.lane.b32.xlu0 %v1385, 24
      %v1469 = vpop.permute.xlu0 %1468
      %1470 = vrot.lane.b32.xlu0 %v1386, 24
      %v1471 = vpop.permute.xlu0 %1470
      %1472 = vrot.lane.b32.xlu0 %v1387, 24
      %v1473 = vpop.permute.xlu0 %1472
      %1474 = vrot.lane.b32.xlu0 %v1388, 24
      %v1475 = vpop.permute.xlu0 %1474
      %1476 = vrot.lane.b32.xlu0 %v1389, 24
      %v1477 = vpop.permute.xlu0 %1476
      %1478 = vrot.lane.b32.xlu0 %v1390, 24
      %v1479 = vpop.permute.xlu0 %1478
      %1480 = vrot.lane.b32.xlu0 %v1391, 24
      %v1481 = vpop.permute.xlu0 %1480
      %1482 = vrot.lane.b32.xlu0 %v1392, 24
      %v1483 = vpop.permute.xlu0 %1482
      %1484 = vrot.lane.b32.xlu0 %v1393, 24
      %v1485 = vpop.permute.xlu0 %1484
      %1486 = vrot.lane.b32.xlu0 %v1394, 24
      %v1487 = vpop.permute.xlu0 %1486
      %1488 = vrot.lane.b32.xlu0 %v1395, 24
      %v1489 = vpop.permute.xlu0 %1488
      %1490 = vrot.lane.b32.xlu0 %v1396, 24
      %v1491 = vpop.permute.xlu0 %1490
      %1492 = vrot.lane.b32.xlu0 %v1397, 24
      %v1493 = vpop.permute.xlu0 %1492
      %vm1526 = vcmask 228544
      %1527 = vst.msk [vmem:[#allocation3] sm:$0xff] %vm1526, %v1431
      %1528 = vst.msk [vmem:[#allocation3 + $0x8] sm:$0xff] %vm1526, %v1433
      %1529 = vst.msk [vmem:[#allocation3 + $0x10] sm:$0xff] %vm1526, %v1435
      %1530 = vst.msk [vmem:[#allocation3 + $0x18] sm:$0xff] %vm1526, %v1437
      %1531 = vst.msk [vmem:[#allocation3 + $0x20] sm:$0xff] %vm1526, %v1439
      %1532 = vst.msk [vmem:[#allocation3 + $0x28] sm:$0xff] %vm1526, %v1441
      %1533 = vst.msk [vmem:[#allocation3 + $0x30] sm:$0xff] %vm1526, %v1443
      %1534 = vst.msk [vmem:[#allocation3 + $0x38] sm:$0xff] %vm1526, %v1445
      %1535 = vst.msk [vmem:[#allocation3 + $0x40] sm:$0xff] %vm1526, %v1447
      %1536 = vst.msk [vmem:[#allocation3 + $0x48] sm:$0xff] %vm1526, %v1449
      %1537 = vst.msk [vmem:[#allocation3 + $0x50] sm:$0xff] %vm1526, %v1451
      %1538 = vst.msk [vmem:[#allocation3 + $0x58] sm:$0xff] %vm1526, %v1453
      %1539 = vst.msk [vmem:[#allocation3 + $0x60] sm:$0xff] %vm1526, %v1455
      %1540 = vst.msk [vmem:[#allocation3 + $0x68] sm:$0xff] %vm1526, %v1457
      %1541 = vst.msk [vmem:[#allocation3 + $0x70] sm:$0xff] %vm1526, %v1459
      %1542 = vst.msk [vmem:[#allocation3 + $0x78] sm:$0xff] %vm1526, %v1461
      %1543 = vst.msk [vmem:[#allocation3 + $0x80] sm:$0xff] %vm1526, %v1463
      %1544 = vst.msk [vmem:[#allocation3 + $0x88] sm:$0xff] %vm1526, %v1465
      %1545 = vst.msk [vmem:[#allocation3 + $0x90] sm:$0xff] %vm1526, %v1467
      %1546 = vst.msk [vmem:[#allocation3 + $0x98] sm:$0xff] %vm1526, %v1469
      %1547 = vst.msk [vmem:[#allocation3 + $0xa0] sm:$0xff] %vm1526, %v1471
      %1548 = vst.msk [vmem:[#allocation3 + $0xa8] sm:$0xff] %vm1526, %v1473
      %1549 = vst.msk [vmem:[#allocation3 + $0xb0] sm:$0xff] %vm1526, %v1475
      %1550 = vst.msk [vmem:[#allocation3 + $0xb8] sm:$0xff] %vm1526, %v1477
      %1551 = vst.msk [vmem:[#allocation3 + $0xc0] sm:$0xff] %vm1526, %v1479
      %1552 = vst.msk [vmem:[#allocation3 + $0xc8] sm:$0xff] %vm1526, %v1481
      %1553 = vst.msk [vmem:[#allocation3 + $0xd0] sm:$0xff] %vm1526, %v1483
      %1554 = vst.msk [vmem:[#allocation3 + $0xd8] sm:$0xff] %vm1526, %v1485
      %1555 = vst.msk [vmem:[#allocation3 + $0xe0] sm:$0xff] %vm1526, %v1487
      %1556 = vst.msk [vmem:[#allocation3 + $0xe8] sm:$0xff] %vm1526, %v1489
      %1557 = vst.msk [vmem:[#allocation3 + $0xf0] sm:$0xff] %vm1526, %v1491
      %1558 = vst.msk [vmem:[#allocation3 + $0xf8] sm:$0xff] %vm1526, %v1493
      %v1559 = vld [vmem:[%s1365 + $0x1] sm:$0xff]
      %v1560 = vld [vmem:[%s1365 + $0x9] sm:$0xff]
      %v1561 = vld [vmem:[%s1365 + $0x19] sm:$0xff]
      %v1562 = vld [vmem:[%s1365 + $0x21] sm:$0xff]
      %v1563 = vld [vmem:[%s1365 + $0x31] sm:$0xff]
      %v1564 = vld [vmem:[%s1365 + $0x39] sm:$0xff]
      %v1565 = vld [vmem:[%s1365 + $0x49] sm:$0xff]
      %v1566 = vld [vmem:[%s1365 + $0x51] sm:$0xff]
      %v1567 = vld [vmem:[%s1365 + $0x61] sm:$0xff]
      %v1568 = vld [vmem:[%s1365 + $0x69] sm:$0xff]
      %v1569 = vld [vmem:[%s1365 + $0x79] sm:$0xff]
      %v1570 = vld [vmem:[%s1365 + $0x81] sm:$0xff]
      %v1571 = vld [vmem:[%s1365 + $0x91] sm:$0xff]
      %v1572 = vld [vmem:[%s1365 + $0x99] sm:$0xff]
      %v1573 = vld [vmem:[%s1365 + $0xa9] sm:$0xff]
      %v1574 = vld [vmem:[%s1365 + $0xb1] sm:$0xff]
      %v1575 = vld [vmem:[%s1365 + $0xc1] sm:$0xff]
      %v1576 = vld [vmem:[%s1365 + $0xc9] sm:$0xff]
      %v1577 = vld [vmem:[%s1365 + $0xd9] sm:$0xff]
      %v1578 = vld [vmem:[%s1365 + $0xe1] sm:$0xff]
      %v1579 = vld [vmem:[%s1365 + $0xf1] sm:$0xff]
      %v1580 = vld [vmem:[%s1365 + $0xf9] sm:$0xff]
      %v1581 = vld [vmem:[%s1365 + $0x109] sm:$0xff]
      %v1582 = vld [vmem:[%s1365 + $0x111] sm:$0xff]
      %v1583 = vld [vmem:[%s1365 + $0x121] sm:$0xff]
      %v1584 = vld [vmem:[%s1365 + $0x129] sm:$0xff]
      %v1585 = vld [vmem:[%s1365 + $0x139] sm:$0xff]
      %v1586 = vld [vmem:[%s1365 + $0x141] sm:$0xff]
      %v1587 = vld [vmem:[%s1365 + $0x151] sm:$0xff]
      %v1588 = vld [vmem:[%s1365 + $0x159] sm:$0xff]
      %v1589 = vld [vmem:[%s1365 + $0x169] sm:$0xff]
      %v1590 = vld [vmem:[%s1365 + $0x171] sm:$0xff]
      %1623 = vrot.lane.b32.xlu0 %v1559, 28
      %v1624 = vpop.permute.xlu0 %1623
      %1625 = vrot.lane.b32.xlu0 %v1560, 28
      %v1626 = vpop.permute.xlu0 %1625
      %1627 = vrot.lane.b32.xlu0 %v1561, 28
      %v1628 = vpop.permute.xlu0 %1627
      %1629 = vrot.lane.b32.xlu0 %v1562, 28
      %v1630 = vpop.permute.xlu0 %1629
      %1631 = vrot.lane.b32.xlu0 %v1563, 28
      %v1632 = vpop.permute.xlu0 %1631
      %1633 = vrot.lane.b32.xlu0 %v1564, 28
      %v1634 = vpop.permute.xlu0 %1633
      %1635 = vrot.lane.b32.xlu0 %v1565, 28
      %v1636 = vpop.permute.xlu0 %1635
      %1637 = vrot.lane.b32.xlu0 %v1566, 28
      %v1638 = vpop.permute.xlu0 %1637
      %1639 = vrot.lane.b32.xlu0 %v1567, 28
      %v1640 = vpop.permute.xlu0 %1639
      %1641 = vrot.lane.b32.xlu0 %v1568, 28
      %v1642 = vpop.permute.xlu0 %1641
      %1643 = vrot.lane.b32.xlu0 %v1569, 28
      %v1644 = vpop.permute.xlu0 %1643
      %1645 = vrot.lane.b32.xlu0 %v1570, 28
      %v1646 = vpop.permute.xlu0 %1645
      %1647 = vrot.lane.b32.xlu0 %v1571, 28
      %v1648 = vpop.permute.xlu0 %1647
      %1649 = vrot.lane.b32.xlu0 %v1572, 28
      %v1650 = vpop.permute.xlu0 %1649
      %1651 = vrot.lane.b32.xlu0 %v1573, 28
      %v1652 = vpop.permute.xlu0 %1651
      %1653 = vrot.lane.b32.xlu0 %v1574, 28
      %v1654 = vpop.permute.xlu0 %1653
      %1655 = vrot.lane.b32.xlu0 %v1575, 28
      %v1656 = vpop.permute.xlu0 %1655
      %1657 = vrot.lane.b32.xlu0 %v1576, 28
      %v1658 = vpop.permute.xlu0 %1657
      %1659 = vrot.lane.b32.xlu0 %v1577, 28
      %v1660 = vpop.permute.xlu0 %1659
      %1661 = vrot.lane.b32.xlu0 %v1578, 28
      %v1662 = vpop.permute.xlu0 %1661
      %1663 = vrot.lane.b32.xlu0 %v1579, 28
      %v1664 = vpop.permute.xlu0 %1663
      %1665 = vrot.lane.b32.xlu0 %v1580, 28
      %v1666 = vpop.permute.xlu0 %1665
      %1667 = vrot.lane.b32.xlu0 %v1581, 28
      %v1668 = vpop.permute.xlu0 %1667
      %1669 = vrot.lane.b32.xlu0 %v1582, 28
      %v1670 = vpop.permute.xlu0 %1669
      %1671 = vrot.lane.b32.xlu0 %v1583, 28
      %v1672 = vpop.permute.xlu0 %1671
      %1673 = vrot.lane.b32.xlu0 %v1584, 28
      %v1674 = vpop.permute.xlu0 %1673
      %1675 = vrot.lane.b32.xlu0 %v1585, 28
      %v1676 = vpop.permute.xlu0 %1675
      %1677 = vrot.lane.b32.xlu0 %v1586, 28
      %v1678 = vpop.permute.xlu0 %1677
      %1679 = vrot.lane.b32.xlu0 %v1587, 28
      %v1680 = vpop.permute.xlu0 %1679
      %1681 = vrot.lane.b32.xlu0 %v1588, 28
      %v1682 = vpop.permute.xlu0 %1681
      %1683 = vrot.lane.b32.xlu0 %v1589, 28
      %v1684 = vpop.permute.xlu0 %1683
      %1685 = vrot.lane.b32.xlu0 %v1590, 28
      %v1686 = vpop.permute.xlu0 %1685
      %vm1719 = vcmask 261344
      %1720 = vst.msk [vmem:[#allocation3] sm:$0xff] %vm1719, %v1624
      %1721 = vst.msk [vmem:[#allocation3 + $0x8] sm:$0xff] %vm1719, %v1626
      %1722 = vst.msk [vmem:[#allocation3 + $0x10] sm:$0xff] %vm1719, %v1628
      %1723 = vst.msk [vmem:[#allocation3 + $0x18] sm:$0xff] %vm1719, %v1630
      %1724 = vst.msk [vmem:[#allocation3 + $0x20] sm:$0xff] %vm1719, %v1632
      %1725 = vst.msk [vmem:[#allocation3 + $0x28] sm:$0xff] %vm1719, %v1634
      %1726 = vst.msk [vmem:[#allocation3 + $0x30] sm:$0xff] %vm1719, %v1636
      %1727 = vst.msk [vmem:[#allocation3 + $0x38] sm:$0xff] %vm1719, %v1638
      %1728 = vst.msk [vmem:[#allocation3 + $0x40] sm:$0xff] %vm1719, %v1640
      %1729 = vst.msk [vmem:[#allocation3 + $0x48] sm:$0xff] %vm1719, %v1642
      %1730 = vst.msk [vmem:[#allocation3 + $0x50] sm:$0xff] %vm1719, %v1644
      %1731 = vst.msk [vmem:[#allocation3 + $0x58] sm:$0xff] %vm1719, %v1646
      %1732 = vst.msk [vmem:[#allocation3 + $0x60] sm:$0xff] %vm1719, %v1648
      %1733 = vst.msk [vmem:[#allocation3 + $0x68] sm:$0xff] %vm1719, %v1650
      %1734 = vst.msk [vmem:[#allocation3 + $0x70] sm:$0xff] %vm1719, %v1652
      %1735 = vst.msk [vmem:[#allocation3 + $0x78] sm:$0xff] %vm1719, %v1654
      %1736 = vst.msk [vmem:[#allocation3 + $0x80] sm:$0xff] %vm1719, %v1656
      %1737 = vst.msk [vmem:[#allocation3 + $0x88] sm:$0xff] %vm1719, %v1658
      %1738 = vst.msk [vmem:[#allocation3 + $0x90] sm:$0xff] %vm1719, %v1660
      %1739 = vst.msk [vmem:[#allocation3 + $0x98] sm:$0xff] %vm1719, %v1662
      %1740 = vst.msk [vmem:[#allocation3 + $0xa0] sm:$0xff] %vm1719, %v1664
      %1741 = vst.msk [vmem:[#allocation3 + $0xa8] sm:$0xff] %vm1719, %v1666
      %1742 = vst.msk [vmem:[#allocation3 + $0xb0] sm:$0xff] %vm1719, %v1668
      %1743 = vst.msk [vmem:[#allocation3 + $0xb8] sm:$0xff] %vm1719, %v1670
      %1744 = vst.msk [vmem:[#allocation3 + $0xc0] sm:$0xff] %vm1719, %v1672
      %1745 = vst.msk [vmem:[#allocation3 + $0xc8] sm:$0xff] %vm1719, %v1674
      %1746 = vst.msk [vmem:[#allocation3 + $0xd0] sm:$0xff] %vm1719, %v1676
      %1747 = vst.msk [vmem:[#allocation3 + $0xd8] sm:$0xff] %vm1719, %v1678
      %1748 = vst.msk [vmem:[#allocation3 + $0xe0] sm:$0xff] %vm1719, %v1680
      %1749 = vst.msk [vmem:[#allocation3 + $0xe8] sm:$0xff] %vm1719, %v1682
      %1750 = vst.msk [vmem:[#allocation3 + $0xf0] sm:$0xff] %vm1719, %v1684
      %1751 = vst.msk [vmem:[#allocation3 + $0xf8] sm:$0xff] %vm1719, %v1686
      %v1752 = vld [vmem:[%s1365 + $0x2] sm:$0xff]
      %v1753 = vld [vmem:[%s1365 + $0xa] sm:$0xff]
      %v1754 = vld [vmem:[%s1365 + $0x1a] sm:$0xff]
      %v1755 = vld [vmem:[%s1365 + $0x22] sm:$0xff]
      %v1756 = vld [vmem:[%s1365 + $0x32] sm:$0xff]
      %v1757 = vld [vmem:[%s1365 + $0x3a] sm:$0xff]
      %v1758 = vld [vmem:[%s1365 + $0x4a] sm:$0xff]
      %v1759 = vld [vmem:[%s1365 + $0x52] sm:$0xff]
      %v1760 = vld [vmem:[%s1365 + $0x62] sm:$0xff]
      %v1761 = vld [vmem:[%s1365 + $0x6a] sm:$0xff]
      %v1762 = vld [vmem:[%s1365 + $0x7a] sm:$0xff]
      %v1763 = vld [vmem:[%s1365 + $0x82] sm:$0xff]
      %v1764 = vld [vmem:[%s1365 + $0x92] sm:$0xff]
      %v1765 = vld [vmem:[%s1365 + $0x9a] sm:$0xff]
      %v1766 = vld [vmem:[%s1365 + $0xaa] sm:$0xff]
      %v1767 = vld [vmem:[%s1365 + $0xb2] sm:$0xff]
      %v1768 = vld [vmem:[%s1365 + $0xc2] sm:$0xff]
      %v1769 = vld [vmem:[%s1365 + $0xca] sm:$0xff]
      %v1770 = vld [vmem:[%s1365 + $0xda] sm:$0xff]
      %v1771 = vld [vmem:[%s1365 + $0xe2] sm:$0xff]
      %v1772 = vld [vmem:[%s1365 + $0xf2] sm:$0xff]
      %v1773 = vld [vmem:[%s1365 + $0xfa] sm:$0xff]
      %v1774 = vld [vmem:[%s1365 + $0x10a] sm:$0xff]
      %v1775 = vld [vmem:[%s1365 + $0x112] sm:$0xff]
      %v1776 = vld [vmem:[%s1365 + $0x122] sm:$0xff]
      %v1777 = vld [vmem:[%s1365 + $0x12a] sm:$0xff]
      %v1778 = vld [vmem:[%s1365 + $0x13a] sm:$0xff]
      %v1779 = vld [vmem:[%s1365 + $0x142] sm:$0xff]
      %v1780 = vld [vmem:[%s1365 + $0x152] sm:$0xff]
      %v1781 = vld [vmem:[%s1365 + $0x15a] sm:$0xff]
      %v1782 = vld [vmem:[%s1365 + $0x16a] sm:$0xff]
      %v1783 = vld [vmem:[%s1365 + $0x172] sm:$0xff]
      %1816 = vrot.lane.b32.xlu0 %v1752, 32
      %v1817 = vpop.permute.xlu0 %1816
      %1818 = vrot.lane.b32.xlu0 %v1753, 32
      %v1819 = vpop.permute.xlu0 %1818
      %1820 = vrot.lane.b32.xlu0 %v1754, 32
      %v1821 = vpop.permute.xlu0 %1820
      %1822 = vrot.lane.b32.xlu0 %v1755, 32
      %v1823 = vpop.permute.xlu0 %1822
      %1824 = vrot.lane.b32.xlu0 %v1756, 32
      %v1825 = vpop.permute.xlu0 %1824
      %1826 = vrot.lane.b32.xlu0 %v1757, 32
      %v1827 = vpop.permute.xlu0 %1826
      %1828 = vrot.lane.b32.xlu0 %v1758, 32
      %v1829 = vpop.permute.xlu0 %1828
      %1830 = vrot.lane.b32.xlu0 %v1759, 32
      %v1831 = vpop.permute.xlu0 %1830
      %1832 = vrot.lane.b32.xlu0 %v1760, 32
      %v1833 = vpop.permute.xlu0 %1832
      %1834 = vrot.lane.b32.xlu0 %v1761, 32
      %v1835 = vpop.permute.xlu0 %1834
      %1836 = vrot.lane.b32.xlu0 %v1762, 32
      %v1837 = vpop.permute.xlu0 %1836
      %1838 = vrot.lane.b32.xlu0 %v1763, 32
      %v1839 = vpop.permute.xlu0 %1838
      %1840 = vrot.lane.b32.xlu0 %v1764, 32
      %v1841 = vpop.permute.xlu0 %1840
      %1842 = vrot.lane.b32.xlu0 %v1765, 32
      %v1843 = vpop.permute.xlu0 %1842
      %1844 = vrot.lane.b32.xlu0 %v1766, 32
      %v1845 = vpop.permute.xlu0 %1844
      %1846 = vrot.lane.b32.xlu0 %v1767, 32
      %v1847 = vpop.permute.xlu0 %1846
      %1848 = vrot.lane.b32.xlu0 %v1768, 32
      %v1849 = vpop.permute.xlu0 %1848
      %1850 = vrot.lane.b32.xlu0 %v1769, 32
      %v1851 = vpop.permute.xlu0 %1850
      %1852 = vrot.lane.b32.xlu0 %v1770, 32
      %v1853 = vpop.permute.xlu0 %1852
      %1854 = vrot.lane.b32.xlu0 %v1771, 32
      %v1855 = vpop.permute.xlu0 %1854
      %1856 = vrot.lane.b32.xlu0 %v1772, 32
      %v1857 = vpop.permute.xlu0 %1856
      %1858 = vrot.lane.b32.xlu0 %v1773, 32
      %v1859 = vpop.permute.xlu0 %1858
      %1860 = vrot.lane.b32.xlu0 %v1774, 32
      %v1861 = vpop.permute.xlu0 %1860
      %1862 = vrot.lane.b32.xlu0 %v1775, 32
      %v1863 = vpop.permute.xlu0 %1862
      %1864 = vrot.lane.b32.xlu0 %v1776, 32
      %v1865 = vpop.permute.xlu0 %1864
      %1866 = vrot.lane.b32.xlu0 %v1777, 32
      %v1867 = vpop.permute.xlu0 %1866
      %1868 = vrot.lane.b32.xlu0 %v1778, 32
      %v1869 = vpop.permute.xlu0 %1868
      %1870 = vrot.lane.b32.xlu0 %v1779, 32
      %v1871 = vpop.permute.xlu0 %1870
      %1872 = vrot.lane.b32.xlu0 %v1780, 32
      %v1873 = vpop.permute.xlu0 %1872
      %1874 = vrot.lane.b32.xlu0 %v1781, 32
      %v1875 = vpop.permute.xlu0 %1874
      %1876 = vrot.lane.b32.xlu0 %v1782, 32
      %v1877 = vpop.permute.xlu0 %1876
      %1878 = vrot.lane.b32.xlu0 %v1783, 32
      %v1879 = vpop.permute.xlu0 %1878
      %vm1912 = vcmask 294144
      %1913 = vst.msk [vmem:[#allocation3] sm:$0xff] %vm1912, %v1817
      %1914 = vst.msk [vmem:[#allocation3 + $0x8] sm:$0xff] %vm1912, %v1819
      %1915 = vst.msk [vmem:[#allocation3 + $0x10] sm:$0xff] %vm1912, %v1821
      %1916 = vst.msk [vmem:[#allocation3 + $0x18] sm:$0xff] %vm1912, %v1823
      %1917 = vst.msk [vmem:[#allocation3 + $0x20] sm:$0xff] %vm1912, %v1825
      %1918 = vst.msk [vmem:[#allocation3 + $0x28] sm:$0xff] %vm1912, %v1827
      %1919 = vst.msk [vmem:[#allocation3 + $0x30] sm:$0xff] %vm1912, %v1829
      %1920 = vst.msk [vmem:[#allocation3 + $0x38] sm:$0xff] %vm1912, %v1831
      %1921 = vst.msk [vmem:[#allocation3 + $0x40] sm:$0xff] %vm1912, %v1833
      %1922 = vst.msk [vmem:[#allocation3 + $0x48] sm:$0xff] %vm1912, %v1835
      %1923 = vst.msk [vmem:[#allocation3 + $0x50] sm:$0xff] %vm1912, %v1837
      %1924 = vst.msk [vmem:[#allocation3 + $0x58] sm:$0xff] %vm1912, %v1839
      %1925 = vst.msk [vmem:[#allocation3 + $0x60] sm:$0xff] %vm1912, %v1841
      %1926 = vst.msk [vmem:[#allocation3 + $0x68] sm:$0xff] %vm1912, %v1843
      %1927 = vst.msk [vmem:[#allocation3 + $0x70] sm:$0xff] %vm1912, %v1845
      %1928 = vst.msk [vmem:[#allocation3 + $0x78] sm:$0xff] %vm1912, %v1847
      %1929 = vst.msk [vmem:[#allocation3 + $0x80] sm:$0xff] %vm1912, %v1849
      %1930 = vst.msk [vmem:[#allocation3 + $0x88] sm:$0xff] %vm1912, %v1851
      %1931 = vst.msk [vmem:[#allocation3 + $0x90] sm:$0xff] %vm1912, %v1853
      %1932 = vst.msk [vmem:[#allocation3 + $0x98] sm:$0xff] %vm1912, %v1855
      %1933 = vst.msk [vmem:[#allocation3 + $0xa0] sm:$0xff] %vm1912, %v1857
      %1934 = vst.msk [vmem:[#allocation3 + $0xa8] sm:$0xff] %vm1912, %v1859
      %1935 = vst.msk [vmem:[#allocation3 + $0xb0] sm:$0xff] %vm1912, %v1861
      %1936 = vst.msk [vmem:[#allocation3 + $0xb8] sm:$0xff] %vm1912, %v1863
      %1937 = vst.msk [vmem:[#allocation3 + $0xc0] sm:$0xff] %vm1912, %v1865
      %1938 = vst.msk [vmem:[#allocation3 + $0xc8] sm:$0xff] %vm1912, %v1867
      %1939 = vst.msk [vmem:[#allocation3 + $0xd0] sm:$0xff] %vm1912, %v1869
      %1940 = vst.msk [vmem:[#allocation3 + $0xd8] sm:$0xff] %vm1912, %v1871
      %1941 = vst.msk [vmem:[#allocation3 + $0xe0] sm:$0xff] %vm1912, %v1873
      %1942 = vst.msk [vmem:[#allocation3 + $0xe8] sm:$0xff] %vm1912, %v1875
      %1943 = vst.msk [vmem:[#allocation3 + $0xf0] sm:$0xff] %vm1912, %v1877
      %1944 = vst.msk [vmem:[#allocation3 + $0xf8] sm:$0xff] %vm1912, %v1879
      %v1945 = vld [vmem:[#allocation3] sm:$0xff]
      %v1946 = vld [vmem:[#allocation3 + $0x8] sm:$0xff]
      %v1947 = vld [vmem:[#allocation3 + $0x10] sm:$0xff]
      %v1948 = vld [vmem:[#allocation3 + $0x18] sm:$0xff]
      %v1949 = vld [vmem:[#allocation3 + $0x20] sm:$0xff]
      %v1950 = vld [vmem:[#allocation3 + $0x28] sm:$0xff]
      %v1951 = vld [vmem:[#allocation3 + $0x30] sm:$0xff]
      %v1952 = vld [vmem:[#allocation3 + $0x38] sm:$0xff]
      %v1953 = vld [vmem:[#allocation3 + $0x40] sm:$0xff]
      %v1954 = vld [vmem:[#allocation3 + $0x48] sm:$0xff]
      %v1955 = vld [vmem:[#allocation3 + $0x50] sm:$0xff]
      %v1956 = vld [vmem:[#allocation3 + $0x58] sm:$0xff]
      %v1957 = vld [vmem:[#allocation3 + $0x60] sm:$0xff]
      %v1958 = vld [vmem:[#allocation3 + $0x68] sm:$0xff]
      %v1959 = vld [vmem:[#allocation3 + $0x70] sm:$0xff]
      %v1960 = vld [vmem:[#allocation3 + $0x78] sm:$0xff]
      %v1961 = vld [vmem:[#allocation3 + $0x80] sm:$0xff]
      %v1962 = vld [vmem:[#allocation3 + $0x88] sm:$0xff]
      %v1963 = vld [vmem:[#allocation3 + $0x90] sm:$0xff]
      %v1964 = vld [vmem:[#allocation3 + $0x98] sm:$0xff]
      %v1965 = vld [vmem:[#allocation3 + $0xa0] sm:$0xff]
      %v1966 = vld [vmem:[#allocation3 + $0xa8] sm:$0xff]
      %v1967 = vld [vmem:[#allocation3 + $0xb0] sm:$0xff]
      %v1968 = vld [vmem:[#allocation3 + $0xb8] sm:$0xff]
      %v1969 = vld [vmem:[#allocation3 + $0xc0] sm:$0xff]
      %v1970 = vld [vmem:[#allocation3 + $0xc8] sm:$0xff]
      %v1971 = vld [vmem:[#allocation3 + $0xd0] sm:$0xff]
      %v1972 = vld [vmem:[#allocation3 + $0xd8] sm:$0xff]
      %v1973 = vld [vmem:[#allocation3 + $0xe0] sm:$0xff]
      %v1974 = vld [vmem:[#allocation3 + $0xe8] sm:$0xff]
      %v1975 = vld [vmem:[#allocation3 + $0xf0] sm:$0xff]
      %v1976 = vld [vmem:[#allocation3 + $0xf8] sm:$0xff]
      %v1977 = vld [vmem:[%s1] sm:$0xff]
      %v1978 = vld [vmem:[%s1 + $0x8] sm:$0xff]
      %v1979 = vld [vmem:[%s1 + $0x10] sm:$0xff]
      %v1980 = vld [vmem:[%s1 + $0x18] sm:$0xff]
      %v1981 = vld [vmem:[%s1 + $0x20] sm:$0xf]
      %vm1982 = vcmask 293888
      %v1984 = vsel %vm1982, %v1945, 0
      %v1987 = vsel %vm1982, %v1946, 0
      %v1990 = vsel %vm1982, %v1947, 0
      %v1993 = vsel %vm1982, %v1948, 0
      %v1996 = vsel %vm1982, %v1949, 0
      %v1999 = vsel %vm1982, %v1950, 0
      %v2002 = vsel %vm1982, %v1951, 0
      %v2005 = vsel %vm1982, %v1952, 0
      %v2008 = vsel %vm1982, %v1953, 0
      %v2011 = vsel %vm1982, %v1954, 0
      %v2014 = vsel %vm1982, %v1955, 0
      %v2017 = vsel %vm1982, %v1956, 0
      %v2020 = vsel %vm1982, %v1957, 0
      %v2023 = vsel %vm1982, %v1958, 0
      %v2026 = vsel %vm1982, %v1959, 0
      %v2029 = vsel %vm1982, %v1960, 0
      %v2032 = vsel %vm1982, %v1961, 0
      %v2035 = vsel %vm1982, %v1962, 0
      %v2038 = vsel %vm1982, %v1963, 0
      %v2041 = vsel %vm1982, %v1964, 0
      %v2044 = vsel %vm1982, %v1965, 0
      %v2047 = vsel %vm1982, %v1966, 0
      %v2050 = vsel %vm1982, %v1967, 0
      %v2053 = vsel %vm1982, %v1968, 0
      %v2056 = vsel %vm1982, %v1969, 0
      %v2059 = vsel %vm1982, %v1970, 0
      %v2062 = vsel %vm1982, %v1971, 0
      %v2065 = vsel %vm1982, %v1972, 0
      %v2068 = vsel %vm1982, %v1973, 0
      %v2071 = vsel %vm1982, %v1974, 0
      %v2074 = vsel %vm1982, %v1975, 0
      %v2077 = vsel %vm1982, %v1976, 0
      %vm2079 = vcmask 1043456
      %v2081 = vsel %vm2079, %v1981, 0
      %2083 = vmatpush.msra.mxu0 0.0
      %2084 = vmatpush.msra.mxu0 0.0
      %2085 = vmatpush.msra.mxu0 0.0
      %2086 = vmatpush.msra.mxu0 0.0
      %2087 = vmatpush.msra.mxu0 0.0
      %2088 = vmatpush.msra.mxu0 0.0
      %2089 = vmatpush.msra.mxu0 0.0
      %2090 = vmatpush.msra.mxu0 0.0
      %2091 = vmatpush.msra.mxu0 0.0
      %2092 = vmatpush.msra.mxu0 0.0
      %2093 = vmatpush.msra.mxu0 0.0
      %2094 = vmatpush.msra.mxu0 %v2081
      %2095 = vmatpush.msra.mxu0 %v1980
      %2096 = vmatpush.msra.mxu0 %v1979
      %2097 = vmatpush.msra.mxu0 %v1978
      %2098 = vmatpush.msra.mxu0 %v1977
      %2099 = vmatmul.f32.gmra.mxu0 %v1984
      %v2100 = vpop.f32.mrf.mxu0
      %v2101 = vadd.f32 0.0, %v2100
      %2102 = vmatmul.f32.gmra.mxu0 %v1987
      %v2103 = vpop.f32.mrf.mxu0
      %v2104 = vadd.f32 0.0, %v2103
      %2105 = vmatmul.f32.gmra.mxu0 %v1990
      %v2106 = vpop.f32.mrf.mxu0
      %v2107 = vadd.f32 0.0, %v2106
      %2108 = vmatmul.f32.gmra.mxu0 %v1993
      %v2109 = vpop.f32.mrf.mxu0
      %v2110 = vadd.f32 0.0, %v2109
      %2111 = vmatmul.f32.gmra.mxu0 %v1996
      %v2112 = vpop.f32.mrf.mxu0
      %v2113 = vadd.f32 0.0, %v2112
      %2114 = vmatmul.f32.gmra.mxu0 %v1999
      %v2115 = vpop.f32.mrf.mxu0
      %v2116 = vadd.f32 0.0, %v2115
      %2117 = vmatmul.f32.gmra.mxu0 %v2002
      %v2118 = vpop.f32.mrf.mxu0
      %v2119 = vadd.f32 0.0, %v2118
      %2120 = vmatmul.f32.gmra.mxu0 %v2005
      %v2121 = vpop.f32.mrf.mxu0
      %v2122 = vadd.f32 0.0, %v2121
      %2123 = vmatmul.f32.gmra.mxu0 %v2008
      %v2124 = vpop.f32.mrf.mxu0
      %v2125 = vadd.f32 0.0, %v2124
      %2126 = vmatmul.f32.gmra.mxu0 %v2011
      %v2127 = vpop.f32.mrf.mxu0
      %v2128 = vadd.f32 0.0, %v2127
      %2129 = vmatmul.f32.gmra.mxu0 %v2014
      %v2130 = vpop.f32.mrf.mxu0
      %v2131 = vadd.f32 0.0, %v2130
      %2132 = vmatmul.f32.gmra.mxu0 %v2017
      %v2133 = vpop.f32.mrf.mxu0
      %v2134 = vadd.f32 0.0, %v2133
      %2135 = vmatmul.f32.gmra.mxu0 %v2020
      %v2136 = vpop.f32.mrf.mxu0
      %v2137 = vadd.f32 0.0, %v2136
      %2138 = vmatmul.f32.gmra.mxu0 %v2023
      %v2139 = vpop.f32.mrf.mxu0
      %v2140 = vadd.f32 0.0, %v2139
      %2141 = vmatmul.f32.gmra.mxu0 %v2026
      %v2142 = vpop.f32.mrf.mxu0
      %v2143 = vadd.f32 0.0, %v2142
      %2144 = vmatmul.f32.gmra.mxu0 %v2029
      %v2145 = vpop.f32.mrf.mxu0
      %v2146 = vadd.f32 0.0, %v2145
      %2147 = vmatmul.f32.gmra.mxu0 %v2032
      %v2148 = vpop.f32.mrf.mxu0
      %v2149 = vadd.f32 0.0, %v2148
      %2150 = vmatmul.f32.gmra.mxu0 %v2035
      %v2151 = vpop.f32.mrf.mxu0
      %v2152 = vadd.f32 0.0, %v2151
      %2153 = vmatmul.f32.gmra.mxu0 %v2038
      %v2154 = vpop.f32.mrf.mxu0
      %v2155 = vadd.f32 0.0, %v2154
      %2156 = vmatmul.f32.gmra.mxu0 %v2041
      %v2157 = vpop.f32.mrf.mxu0
      %v2158 = vadd.f32 0.0, %v2157
      %2159 = vmatmul.f32.gmra.mxu0 %v2044
      %v2160 = vpop.f32.mrf.mxu0
      %v2161 = vadd.f32 0.0, %v2160
      %2162 = vmatmul.f32.gmra.mxu0 %v2047
      %v2163 = vpop.f32.mrf.mxu0
      %v2164 = vadd.f32 0.0, %v2163
      %2165 = vmatmul.f32.gmra.mxu0 %v2050
      %v2166 = vpop.f32.mrf.mxu0
      %v2167 = vadd.f32 0.0, %v2166
      %2168 = vmatmul.f32.gmra.mxu0 %v2053
      %v2169 = vpop.f32.mrf.mxu0
      %v2170 = vadd.f32 0.0, %v2169
      %2171 = vmatmul.f32.gmra.mxu0 %v2056
      %v2172 = vpop.f32.mrf.mxu0
      %v2173 = vadd.f32 0.0, %v2172
      %2174 = vmatmul.f32.gmra.mxu0 %v2059
      %v2175 = vpop.f32.mrf.mxu0
      %v2176 = vadd.f32 0.0, %v2175
      %2177 = vmatmul.f32.gmra.mxu0 %v2062
      %v2178 = vpop.f32.mrf.mxu0
      %v2179 = vadd.f32 0.0, %v2178
      %2180 = vmatmul.f32.gmra.mxu0 %v2065
      %v2181 = vpop.f32.mrf.mxu0
      %v2182 = vadd.f32 0.0, %v2181
      %2183 = vmatmul.f32.gmra.mxu0 %v2068
      %v2184 = vpop.f32.mrf.mxu0
      %v2185 = vadd.f32 0.0, %v2184
      %2186 = vmatmul.f32.gmra.mxu0 %v2071
      %v2187 = vpop.f32.mrf.mxu0
      %v2188 = vadd.f32 0.0, %v2187
      %2189 = vmatmul.f32.gmra.mxu0 %v2074
      %v2190 = vpop.f32.mrf.mxu0
      %v2191 = vadd.f32 0.0, %v2190
      %2192 = vmatmul.f32.gmra.mxu0 %v2077
      %v2193 = vpop.f32.mrf.mxu0
      %v2194 = vadd.f32 0.0, %v2193
      %2195 = vdwg.mxu0
      %vm2196 = vcmask 64512
      %2197 = vst.msk [vmem:[%s208] sm:$0xff] %vm2196, %v2101
      %2198 = vst.msk [vmem:[%s208 + $0x8] sm:$0xff] %vm2196, %v2104
      %2199 = vst.msk [vmem:[%s208 + $0x10] sm:$0xff] %vm2196, %v2107
      %2200 = vst.msk [vmem:[%s208 + $0x18] sm:$0xff] %vm2196, %v2110
      %2201 = vst.msk [vmem:[%s208 + $0x20] sm:$0xff] %vm2196, %v2113
      %2202 = vst.msk [vmem:[%s208 + $0x28] sm:$0xff] %vm2196, %v2116
      %2203 = vst.msk [vmem:[%s208 + $0x30] sm:$0xff] %vm2196, %v2119
      %2204 = vst.msk [vmem:[%s208 + $0x38] sm:$0xff] %vm2196, %v2122
      %2205 = vst.msk [vmem:[%s208 + $0x40] sm:$0xff] %vm2196, %v2125
      %2206 = vst.msk [vmem:[%s208 + $0x48] sm:$0xff] %vm2196, %v2128
      %2207 = vst.msk [vmem:[%s208 + $0x50] sm:$0xff] %vm2196, %v2131
      %2208 = vst.msk [vmem:[%s208 + $0x58] sm:$0xff] %vm2196, %v2134
      %2209 = vst.msk [vmem:[%s208 + $0x60] sm:$0xff] %vm2196, %v2137
      %2210 = vst.msk [vmem:[%s208 + $0x68] sm:$0xff] %vm2196, %v2140
      %2211 = vst.msk [vmem:[%s208 + $0x70] sm:$0xff] %vm2196, %v2143
      %2212 = vst.msk [vmem:[%s208 + $0x78] sm:$0xff] %vm2196, %v2146
      %2213 = vst.msk [vmem:[%s208 + $0x80] sm:$0xff] %vm2196, %v2149
      %2214 = vst.msk [vmem:[%s208 + $0x88] sm:$0xff] %vm2196, %v2152
      %2215 = vst.msk [vmem:[%s208 + $0x90] sm:$0xff] %vm2196, %v2155
      %2216 = vst.msk [vmem:[%s208 + $0x98] sm:$0xff] %vm2196, %v2158
      %2217 = vst.msk [vmem:[%s208 + $0xa0] sm:$0xff] %vm2196, %v2161
      %2218 = vst.msk [vmem:[%s208 + $0xa8] sm:$0xff] %vm2196, %v2164
      %2219 = vst.msk [vmem:[%s208 + $0xb0] sm:$0xff] %vm2196, %v2167
      %2220 = vst.msk [vmem:[%s208 + $0xb8] sm:$0xff] %vm2196, %v2170
      %2221 = vst.msk [vmem:[%s208 + $0xc0] sm:$0xff] %vm2196, %v2173
      %2222 = vst.msk [vmem:[%s208 + $0xc8] sm:$0xff] %vm2196, %v2176
      %2223 = vst.msk [vmem:[%s208 + $0xd0] sm:$0xff] %vm2196, %v2179
      %2224 = vst.msk [vmem:[%s208 + $0xd8] sm:$0xff] %vm2196, %v2182
      %2225 = vst.msk [vmem:[%s208 + $0xe0] sm:$0xff] %vm2196, %v2185
      %2226 = vst.msk [vmem:[%s208 + $0xe8] sm:$0xff] %vm2196, %v2188
      %2227 = vst.msk [vmem:[%s208 + $0xf0] sm:$0xff] %vm2196, %v2191
      %2228 = vst.msk [vmem:[%s208 + $0xf8] sm:$0xff] %vm2196, %v2194
      %v2229 = vsel %vm2196, %v2101, 0.0
      %v2230 = vsel %vm2196, %v2104, 0.0
      %v2231 = vadd.f32 %v2229, %v2230
      %v2232 = vsel %vm2196, %v2107, 0.0
      %v2233 = vadd.f32 %v2231, %v2232
      %v2234 = vsel %vm2196, %v2110, 0.0
      %v2235 = vadd.f32 %v2233, %v2234
      %v2236 = vsel %vm2196, %v2113, 0.0
      %v2237 = vadd.f32 %v2235, %v2236
      %v2238 = vsel %vm2196, %v2116, 0.0
      %v2239 = vadd.f32 %v2237, %v2238
      %v2240 = vsel %vm2196, %v2119, 0.0
      %v2241 = vadd.f32 %v2239, %v2240
      %v2242 = vsel %vm2196, %v2122, 0.0
      %v2243 = vadd.f32 %v2241, %v2242
      %v2244 = vsel %vm2196, %v2125, 0.0
      %v2245 = vadd.f32 %v2243, %v2244
      %v2246 = vsel %vm2196, %v2128, 0.0
      %v2247 = vadd.f32 %v2245, %v2246
      %v2248 = vsel %vm2196, %v2131, 0.0
      %v2249 = vadd.f32 %v2247, %v2248
      %v2250 = vsel %vm2196, %v2134, 0.0
      %v2251 = vadd.f32 %v2249, %v2250
      %v2252 = vsel %vm2196, %v2137, 0.0
      %v2253 = vadd.f32 %v2251, %v2252
      %v2254 = vsel %vm2196, %v2140, 0.0
      %v2255 = vadd.f32 %v2253, %v2254
      %v2256 = vsel %vm2196, %v2143, 0.0
      %v2257 = vadd.f32 %v2255, %v2256
      %v2258 = vsel %vm2196, %v2146, 0.0
      %v2259 = vadd.f32 %v2257, %v2258
      %v2260 = vsel %vm2196, %v2149, 0.0
      %v2261 = vadd.f32 %v2259, %v2260
      %v2262 = vsel %vm2196, %v2152, 0.0
      %v2263 = vadd.f32 %v2261, %v2262
      %v2264 = vsel %vm2196, %v2155, 0.0
      %v2265 = vadd.f32 %v2263, %v2264
      %v2266 = vsel %vm2196, %v2158, 0.0
      %v2267 = vadd.f32 %v2265, %v2266
      %v2268 = vsel %vm2196, %v2161, 0.0
      %v2269 = vadd.f32 %v2267, %v2268
      %v2270 = vsel %vm2196, %v2164, 0.0
      %v2271 = vadd.f32 %v2269, %v2270
      %v2272 = vsel %vm2196, %v2167, 0.0
      %v2273 = vadd.f32 %v2271, %v2272
      %v2274 = vsel %vm2196, %v2170, 0.0
      %v2275 = vadd.f32 %v2273, %v2274
      %v2276 = vsel %vm2196, %v2173, 0.0
      %v2277 = vadd.f32 %v2275, %v2276
      %v2278 = vsel %vm2196, %v2176, 0.0
      %v2279 = vadd.f32 %v2277, %v2278
      %v2280 = vsel %vm2196, %v2179, 0.0
      %v2281 = vadd.f32 %v2279, %v2280
      %v2282 = vsel %vm2196, %v2182, 0.0
      %v2283 = vadd.f32 %v2281, %v2282
      %v2284 = vsel %vm2196, %v2185, 0.0
      %v2285 = vadd.f32 %v2283, %v2284
      %v2286 = vsel %vm2196, %v2188, 0.0
      %v2287 = vadd.f32 %v2285, %v2286
      %v2288 = vsel %vm2196, %v2191, 0.0
      %v2289 = vadd.f32 %v2287, %v2288
      %v2290 = vsel %vm2196, %v2194, 0.0
      %v2291 = vadd.f32 %v2289, %v2290
      %v2292 = vrot.slane %v2291, 4
      %v2293 = vadd.f32 %v2291, %v2292
      %v2294 = vrot.slane %v2293, 2
      %v2295 = vadd.f32 %v2293, %v2294
      %v2296 = vrot.slane %v2295, 1
      %v2297 = vadd.f32 %v2295, %v2296
      %vm2298 = vcmask 57344
      %2299 = vst.msk [vmem:[%s211] sm:$0x1] %vm2298, %v2297
      %v2300 = vmul.f32 %v2101, %v2101
      %v2301 = vmul.f32 %v2104, %v2104
      %v2302 = vmul.f32 %v2107, %v2107
      %v2303 = vmul.f32 %v2110, %v2110
      %v2304 = vmul.f32 %v2113, %v2113
      %v2305 = vmul.f32 %v2116, %v2116
      %v2306 = vmul.f32 %v2119, %v2119
      %v2307 = vmul.f32 %v2122, %v2122
      %v2308 = vmul.f32 %v2125, %v2125
      %v2309 = vmul.f32 %v2128, %v2128
      %v2310 = vmul.f32 %v2131, %v2131
      %v2311 = vmul.f32 %v2134, %v2134
      %v2312 = vmul.f32 %v2137, %v2137
      %v2313 = vmul.f32 %v2140, %v2140
      %v2314 = vmul.f32 %v2143, %v2143
      %v2315 = vmul.f32 %v2146, %v2146
      %v2316 = vmul.f32 %v2149, %v2149
      %v2317 = vmul.f32 %v2152, %v2152
      %v2318 = vmul.f32 %v2155, %v2155
      %v2319 = vmul.f32 %v2158, %v2158
      %v2320 = vmul.f32 %v2161, %v2161
      %v2321 = vmul.f32 %v2164, %v2164
      %v2322 = vmul.f32 %v2167, %v2167
      %v2323 = vmul.f32 %v2170, %v2170
      %v2324 = vmul.f32 %v2173, %v2173
      %v2325 = vmul.f32 %v2176, %v2176
      %v2326 = vmul.f32 %v2179, %v2179
      %v2327 = vmul.f32 %v2182, %v2182
      %v2328 = vmul.f32 %v2185, %v2185
      %v2329 = vmul.f32 %v2188, %v2188
      %v2330 = vmul.f32 %v2191, %v2191
      %v2331 = vmul.f32 %v2194, %v2194
      %v2332 = vsel %vm2196, %v2300, 0.0
      %v2333 = vsel %vm2196, %v2301, 0.0
      %v2334 = vadd.f32 %v2332, %v2333
      %v2335 = vsel %vm2196, %v2302, 0.0
      %v2336 = vadd.f32 %v2334, %v2335
      %v2337 = vsel %vm2196, %v2303, 0.0
      %v2338 = vadd.f32 %v2336, %v2337
      %v2339 = vsel %vm2196, %v2304, 0.0
      %v2340 = vadd.f32 %v2338, %v2339
      %v2341 = vsel %vm2196, %v2305, 0.0
      %v2342 = vadd.f32 %v2340, %v2341
      %v2343 = vsel %vm2196, %v2306, 0.0
      %v2344 = vadd.f32 %v2342, %v2343
      %v2345 = vsel %vm2196, %v2307, 0.0
      %v2346 = vadd.f32 %v2344, %v2345
      %v2347 = vsel %vm2196, %v2308, 0.0
      %v2348 = vadd.f32 %v2346, %v2347
      %v2349 = vsel %vm2196, %v2309, 0.0
      %v2350 = vadd.f32 %v2348, %v2349
      %v2351 = vsel %vm2196, %v2310, 0.0
      %v2352 = vadd.f32 %v2350, %v2351
      %v2353 = vsel %vm2196, %v2311, 0.0
      %v2354 = vadd.f32 %v2352, %v2353
      %v2355 = vsel %vm2196, %v2312, 0.0
      %v2356 = vadd.f32 %v2354, %v2355
      %v2357 = vsel %vm2196, %v2313, 0.0
      %v2358 = vadd.f32 %v2356, %v2357
      %v2359 = vsel %vm2196, %v2314, 0.0
      %v2360 = vadd.f32 %v2358, %v2359
      %v2361 = vsel %vm2196, %v2315, 0.0
      %v2362 = vadd.f32 %v2360, %v2361
      %v2363 = vsel %vm2196, %v2316, 0.0
      %v2364 = vadd.f32 %v2362, %v2363
      %v2365 = vsel %vm2196, %v2317, 0.0
      %v2366 = vadd.f32 %v2364, %v2365
      %v2367 = vsel %vm2196, %v2318, 0.0
      %v2368 = vadd.f32 %v2366, %v2367
      %v2369 = vsel %vm2196, %v2319, 0.0
      %v2370 = vadd.f32 %v2368, %v2369
      %v2371 = vsel %vm2196, %v2320, 0.0
      %v2372 = vadd.f32 %v2370, %v2371
      %v2373 = vsel %vm2196, %v2321, 0.0
      %v2374 = vadd.f32 %v2372, %v2373
      %v2375 = vsel %vm2196, %v2322, 0.0
      %v2376 = vadd.f32 %v2374, %v2375
      %v2377 = vsel %vm2196, %v2323, 0.0
      %v2378 = vadd.f32 %v2376, %v2377
      %v2379 = vsel %vm2196, %v2324, 0.0
      %v2380 = vadd.f32 %v2378, %v2379
      %v2381 = vsel %vm2196, %v2325, 0.0
      %v2382 = vadd.f32 %v2380, %v2381
      %v2383 = vsel %vm2196, %v2326, 0.0
      %v2384 = vadd.f32 %v2382, %v2383
      %v2385 = vsel %vm2196, %v2327, 0.0
      %v2386 = vadd.f32 %v2384, %v2385
      %v2387 = vsel %vm2196, %v2328, 0.0
      %v2388 = vadd.f32 %v2386, %v2387
      %v2389 = vsel %vm2196, %v2329, 0.0
      %v2390 = vadd.f32 %v2388, %v2389
      %v2391 = vsel %vm2196, %v2330, 0.0
      %v2392 = vadd.f32 %v2390, %v2391
      %v2393 = vsel %vm2196, %v2331, 0.0
      %v2394 = vadd.f32 %v2392, %v2393
      %v2395 = vrot.slane %v2394, 4
      %v2396 = vadd.f32 %v2394, %v2395
      %v2397 = vrot.slane %v2396, 2
      %v2398 = vadd.f32 %v2396, %v2397
      %v2399 = vrot.slane %v2398, 1
      %v2400 = vadd.f32 %v2398, %v2399
      %2401 = vst.msk [vmem:[%s214] sm:$0x1] %vm2298, %v2400
      %p2402 = scmp.lt.s32.totalorder %s16, 1
      %s2403 = scalar_select %p2402, %s16, 1
      %s2404 = smul.addr %s2403, 32
      %s2405 = smul.addr %s2404, 8
      %s2406 = scalar_lea.vmem %s2, %s2405
      %p2407 = scmp.lt.s32.totalorder %s16, 1
      %s2408 = scalar_select %p2407, %s16, 1
      %s2409 = scalar_lea.vmem %s3, %s2408
      %p2410 = scmp.lt.s32.totalorder %s16, 1
      %s2411 = scalar_select %p2410, %s16, 1
      %s2412 = scalar_lea.vmem %s4, %s2411
      // Predicated region
      $region29: #{double_conv.3} parent=27 // pred_check
        %p2413 = pneg %p81
      $region30: #{double_conv.3} parent=27 // pred_check_branch
        %2415 = sbr.rel (%p2413) target = $region32
      $region31: #{double_conv.3} parent=27 // pred_region
        _
      $region32: #{double_conv.3} parent=27 // pred_fallthru
        _
      // Predicated region
      $region33: #{double_conv.3} parent=27 // pred_check
        %p2416 = pneg %p107
      $region34: #{double_conv.3} parent=27 // pred_check_branch
        %2418 = sbr.rel (%p2416) target = $region36
      $region35: #{double_conv.3} parent=27 // pred_region
        _
      $region36: #{double_conv.3} parent=27 // pred_fallthru
        _
      // Predicated region
      $region37: #{double_conv.3} parent=27 // pred_check
        %p2419 = pneg %p133
      $region38: #{double_conv.3} parent=27 // pred_check_branch
        %2421 = sbr.rel (%p2419) target = $region40
      $region39: #{double_conv.3} parent=27 // pred_region
        _
      $region40: #{double_conv.3} parent=27 // pred_fallthru
        _
    $region28: #{double_conv.3} parent=5 // pred_fallthru
      _
    %p2422 = scmp.le.s32.totalorder 2, %s11
    // Predicated region
    $region41: #{double_conv.3} parent=5 // pred_check
      %p2423 = pneg %p2422
    $region42: #{double_conv.3} parent=5 // pred_check_branch
      %2425 = sbr.rel (%p2423) target = $region44
    $region43: #{double_conv.3} parent=5 // pred_region
      %s2426 = ssub.s32 %s11, 2
      // Predicated region
      $region45: #{double_conv.3} parent=43 // pred_check
        %p2427 = pneg %p87
      $region46: #{double_conv.3} parent=43 // pred_check_branch
        %2429 = sbr.rel (%p2427) target = $region48
      $region47: #{double_conv.3} parent=43 // pred_region
        %p2430 = scmp.lt.s32.totalorder %s17, 1
        %s2431 = scalar_select %p2430, %s17, 1
        %s2432 = smul.addr %s2431, 32
        %s2433 = smul.addr %s2432, 8
        %s2434 = scalar_lea.vmem %s2, %s2433
      $region48: #{double_conv.3} parent=43 // pred_fallthru
        _
      // Predicated region
      $region49: #{double_conv.3} parent=43 // pred_check
        %p2435 = pneg %p113
      $region50: #{double_conv.3} parent=43 // pred_check_branch
        %2437 = sbr.rel (%p2435) target = $region52
      $region51: #{double_conv.3} parent=43 // pred_region
        %p2438 = scmp.lt.s32.totalorder %s17, 1
        %s2439 = scalar_select %p2438, %s17, 1
        %s2440 = scalar_lea.vmem %s3, %s2439
      $region52: #{double_conv.3} parent=43 // pred_fallthru
        _
      // Predicated region
      $region53: #{double_conv.3} parent=43 // pred_check
        %p2441 = pneg %p139
      $region54: #{double_conv.3} parent=43 // pred_check_branch
        %2443 = sbr.rel (%p2441) target = $region56
      $region55: #{double_conv.3} parent=43 // pred_region
        %p2444 = scmp.lt.s32.totalorder %s17, 1
        %s2445 = scalar_select %p2444, %s17, 1
        %s2446 = scalar_lea.vmem %s4, %s2445
      $region56: #{double_conv.3} parent=43 // pred_fallthru
        _
    $region44: #{double_conv.3} parent=5 // pred_fallthru
      _
  $region6: #{double_conv.3} parent=0 // loop_footer
    %s15 = sadd.s32 1, %s11
  $region7: #{double_conv.3} parent=0 // loop_footer_branch
    %10 = sbr.rel target = $region3
  $region8: #{double_conv.3} parent=0 // loop_exit
    _

// kernel: double_conv.4
$region0: #{double_conv.4}
  #allocation0 [shape = 'u32[]', space=smem, size = 0x4, offset = 0x4, fixed_abs, tag = 'smem constant byte address 0x4 - core index']
  #allocation1 [shape = 'u32[72,128]{1,0:T(1,128)}', space=vmem, size = 0x9000, scoped, tag = 'internal scratch']
  #allocation2 [shape = 'f32[18,18,8]{2,1,0:T(8,128)}', space=vmem, size = 0x36000, scoped, tag = 'scratch operand']
  #allocation3 [shape = 'f32[16,16,72]{2,1,0:T(8,128)}', space=vmem, size = 0x20000, scoped, tag = 'scratch operand']
  %s0 = inlined_call_operand.vmem [shape: f32[2,16,16,8], index: 0, kind: input, shape index: {}]
  %s1 = inlined_call_operand.vmem [shape: f32[72,8], index: 1, kind: input, shape index: {}]
  %s2 = inlined_call_operand.vmem [shape: f32[1,8], index: 2, kind: input, shape index: {}]
  %s3 = inlined_call_operand.vmem [shape: f32[1,8], index: 3, kind: input, shape index: {}]
  %s4 = inlined_call_operand.vmem [shape: f32[2,16,16,8], index: 4, kind: output, shape index: {0}]
  %s5 = inlined_call_operand.vmem [shape: f32[2,1,8], index: 5, kind: output, shape index: {1}]
  %s6 = inlined_call_operand.vmem [shape: f32[2,1,8], index: 6, kind: output, shape index: {2}]
  %7 = xla_tuple %s4, %s5, %s6
  %s8 = sld [smem:[#allocation0]]
  $region65: #{double_conv.4} parent=0
    _
  %s10 = ssub.s32 1, %s8
  %s11 = scalar_select 0, %s10, %s8
  loop: start=0, step=1, limit=4
  $region2: #{double_conv.4} parent=0 // loop_pre_header
    _
  $region3: #{double_conv.4} parent=0 // loop_header
    %s13 = sphi 0, %s17
    %p14 = scmp.ge.s32.totalorder %s13, 4
    %s23 = sphi 0, %s25
    %s26 = sphi 0, %s23
    %s27 = sphi 0, %s26
    %s43 = sphi 0, %s27
    %s47 = sphi 0, %s47
    %s49 = sphi 0, %s47
    %s50 = sphi 0, %s49
    %s64 = sphi 0, %s50
    %s68 = sphi 0, %s68
    %s70 = sphi 0, %s68
    %s71 = sphi 0, %s70
    %s85 = sphi 0, %s71
    %s89 = sphi 0, %s89
    %s91 = sphi 0, %s89
    %s92 = sphi 0, %s91
    %s106 = sphi 0, %s92
    %s112 = sphi 0, %s114
    %s115 = sphi 0, %s112
    %s116 = sphi 0, %s115
    %s132 = sphi 0, %s116
    %s138 = sphi 0, %s140
    %s141 = sphi 0, %s138
    %s142 = sphi 0, %s141
    %s158 = sphi 0, %s142
    %s164 = sphi 0, %s166
    %s167 = sphi 0, %s164
    %s168 = sphi 0, %s167
    %s184 = sphi 0, %s168
  $region4: #{double_conv.4} parent=0 // loop_header_branch
    %16 = sbr.rel (%p14) target = $region8
  $region5: #{double_conv.4} parent=0 // loop_body
    %s18 = ssub.s32 %s13, 1
    %s19 = ssub.s32 %s13, 2
    %s20 = sadd.s32 %s13, 1
    %s21 = ssub.s32 %s13, %s20
    %p22 = scmp.eq.s32.totalorder %s21, 0
    %s24 = sadd.s32 %s23, 1
    %s25 = scalar_select %p22, %s23, %s24
    %p28 = pneg %p22
    %p29 = scmp.eq.s32.totalorder %s13, 1
    %p30 = por %p28, %p29
    %p31 = scmp.ne.s32.totalorder %s23, %s26
    %p32 = scmp.eq.s32.totalorder %s13, 0
    %p33 = por %p31, %p32
    %p34 = scmp.ne.s32.totalorder %s23, %s26
    %p35 = scmp.eq.s32.totalorder %s18, 1
    %p36 = por %p34, %p35
    %p37 = scmp.ne.s32.totalorder %s26, %s27
    %p38 = scmp.eq.s32.totalorder %s18, 0
    %p39 = por %p37, %p38
    %p40 = scmp.ne.s32.totalorder %s26, %s27
    %p41 = scmp.eq.s32.totalorder %s19, 1
    %p42 = por %p40, %p41
    %p44 = scmp.ne.s32.totalorder %s27, %s43
    %p45 = scmp.eq.s32.totalorder %s19, 0
    %p46 = por %p44, %p45
    %s48 = sadd.s32 %s47, 1
    %p51 = scmp.eq.s32.totalorder %s13, 1
    %p52 = scmp.ne.s32.totalorder %s47, %s49
    %p53 = scmp.eq.s32.totalorder %s13, 0
    %p54 = por %p52, %p53
    %p55 = scmp.ne.s32.totalorder %s47, %s49
    %p56 = scmp.eq.s32.totalorder %s18, 1
    %p57 = por %p55, %p56
    %p58 = scmp.ne.s32.totalorder %s49, %s50
    %p59 = scmp.eq.s32.totalorder %s18, 0
    %p60 = por %p58, %p59
    %p61 = scmp.ne.s32.totalorder %s49, %s50
    %p62 = scmp.eq.s32.totalorder %s19, 1
    %p63 = por %p61, %p62
    %p65 = scmp.ne.s32.totalorder %s50, %s64
    %p66 = scmp.eq.s32.totalorder %s19, 0
    %p67 = por %p65, %p66
    %s69 = sadd.s32 %s68, 1
    %p72 = scmp.eq.s32.totalorder %s13, 1
    %p73 = scmp.ne.s32.totalorder %s68, %s70
    %p74 = scmp.eq.s32.totalorder %s13, 0
    %p75 = por %p73, %p74
    %p76 = scmp.ne.s32.totalorder %s68, %s70
    %p77 = scmp.eq.s32.totalorder %s18, 1
    %p78 = por %p76, %p77
    %p79 = scmp.ne.s32.totalorder %s70, %s71
    %p80 = scmp.eq.s32.totalorder %s18, 0
    %p81 = por %p79, %p80
    %p82 = scmp.ne.s32.totalorder %s70, %s71
    %p83 = scmp.eq.s32.totalorder %s19, 1
    %p84 = por %p82, %p83
    %p86 = scmp.ne.s32.totalorder %s71, %s85
    %p87 = scmp.eq.s32.totalorder %s19, 0
    %p88 = por %p86, %p87
    %s90 = sadd.s32 %s89, 1
    %p93 = scmp.eq.s32.totalorder %s13, 1
    %p94 = scmp.ne.s32.totalorder %s89, %s91
    %p95 = scmp.eq.s32.totalorder %s13, 0
    %p96 = por %p94, %p95
    %p97 = scmp.ne.s32.totalorder %s89, %s91
    %p98 = scmp.eq.s32.totalorder %s18, 1
    %p99 = por %p97, %p98
    %p100 = scmp.ne.s32.totalorder %s91, %s92
    %p101 = scmp.eq.s32.totalorder %s18, 0
    %p102 = por %p100, %p101
    %p103 = scmp.ne.s32.totalorder %s91, %s92
    %p104 = scmp.eq.s32.totalorder %s19, 1
    %p105 = por %p103, %p104
    %p107 = scmp.ne.s32.totalorder %s92, %s106
    %p108 = scmp.eq.s32.totalorder %s19, 0
    %p109 = por %p107, %p108
    %s110 = ssub.s32 %s13, %s20
    %p111 = scmp.eq.s32.totalorder %s110, 0
    %s113 = sadd.s32 %s112, 1
    %s114 = scalar_select %p111, %s112, %s113
    %p117 = pneg %p111
    %p118 = scmp.eq.s32.totalorder %s13, 1
    %p119 = por %p117, %p118
    %p120 = scmp.ne.s32.totalorder %s112, %s115
    %p121 = scmp.eq.s32.totalorder %s13, 0
    %p122 = por %p120, %p121
    %p123 = scmp.ne.s32.totalorder %s112, %s115
    %p124 = scmp.eq.s32.totalorder %s18, 1
    %p125 = por %p123, %p124
    %p126 = scmp.ne.s32.totalorder %s115, %s116
    %p127 = scmp.eq.s32.totalorder %s18, 0
    %p128 = por %p126, %p127
    %p129 = scmp.ne.s32.totalorder %s115, %s116
    %p130 = scmp.eq.s32.totalorder %s19, 1
    %p131 = por %p129, %p130
    %p133 = scmp.ne.s32.totalorder %s116, %s132
    %p134 = scmp.eq.s32.totalorder %s19, 0
    %p135 = por %p133, %p134
    %s136 = ssub.s32 %s13, %s20
    %p137 = scmp.eq.s32.totalorder %s136, 0
    %s139 = sadd.s32 %s138, 1
    %s140 = scalar_select %p137, %s138, %s139
    %p143 = pneg %p137
    %p144 = scmp.eq.s32.totalorder %s13, 1
    %p145 = por %p143, %p144
    %p146 = scmp.ne.s32.totalorder %s138, %s141
    %p147 = scmp.eq.s32.totalorder %s13, 0
    %p148 = por %p146, %p147
    %p149 = scmp.ne.s32.totalorder %s138, %s141
    %p150 = scmp.eq.s32.totalorder %s18, 1
    %p151 = por %p149, %p150
    %p152 = scmp.ne.s32.totalorder %s141, %s142
    %p153 = scmp.eq.s32.totalorder %s18, 0
    %p154 = por %p152, %p153
    %p155 = scmp.ne.s32.totalorder %s141, %s142
    %p156 = scmp.eq.s32.totalorder %s19, 1
    %p157 = por %p155, %p156
    %p159 = scmp.ne.s32.totalorder %s142, %s158
    %p160 = scmp.eq.s32.totalorder %s19, 0
    %p161 = por %p159, %p160
    %s162 = ssub.s32 %s13, %s20
    %p163 = scmp.eq.s32.totalorder %s162, 0
    %s165 = sadd.s32 %s164, 1
    %s166 = scalar_select %p163, %s164, %s165
    %p169 = pneg %p163
    %p170 = scmp.eq.s32.totalorder %s13, 1
    %p171 = por %p169, %p170
    %p172 = scmp.ne.s32.totalorder %s164, %s167
    %p173 = scmp.eq.s32.totalorder %s13, 0
    %p174 = por %p172, %p173
    %p175 = scmp.ne.s32.totalorder %s164, %s167
    %p176 = scmp.eq.s32.totalorder %s18, 1
    %p177 = por %p175, %p176
    %p178 = scmp.ne.s32.totalorder %s167, %s168
    %p179 = scmp.eq.s32.totalorder %s18, 0
    %p180 = por %p178, %p179
    %p181 = scmp.ne.s32.totalorder %s167, %s168
    %p182 = scmp.eq.s32.totalorder %s19, 1
    %p183 = por %p181, %p182
    %p185 = scmp.ne.s32.totalorder %s168, %s184
    %p186 = scmp.eq.s32.totalorder %s19, 0
    %p187 = por %p185, %p186
    %p188 = scmp.le.s32.totalorder 1, %s13
    %p189 = scmp.lt.s32.totalorder %s13, 3
    %p190 = pnand %p188, %p189
    %p191 = pneg %p190
    // Predicated region
    $region9: #{double_conv.4} parent=5 // pred_check
      _
    $region10: #{double_conv.4} parent=5 // pred_check_branch
      %193 = sbr.rel (%p190) target = $region12
    $region11: #{double_conv.4} parent=5 // pred_region
      %s194 = ssub.s32 %s13, 1
      // Predicated region
      $region13: #{double_conv.4} parent=11 // pred_check
        %p195 = pneg %p60
      $region14: #{double_conv.4} parent=11 // pred_check_branch
        %197 = sbr.rel (%p195) target = $region16
      $region15: #{double_conv.4} parent=11 // pred_region
        _
      $region16: #{double_conv.4} parent=11 // pred_fallthru
        _
      // Predicated region
      $region17: #{double_conv.4} parent=11 // pred_check
        %p198 = pneg %p81
      $region18: #{double_conv.4} parent=11 // pred_check_branch
        %200 = sbr.rel (%p198) target = $region20
      $region19: #{double_conv.4} parent=11 // pred_region
        _
      $region20: #{double_conv.4} parent=11 // pred_fallthru
        _
      // Predicated region
      $region21: #{double_conv.4} parent=11 // pred_check
        %p201 = pneg %p102
      $region22: #{double_conv.4} parent=11 // pred_check_branch
        %203 = sbr.rel (%p201) target = $region24
      $region23: #{double_conv.4} parent=11 // pred_region
        _
      $region24: #{double_conv.4} parent=11 // pred_fallthru
        _
    $region12: #{double_conv.4} parent=5 // pred_fallthru
      _
    %p204 = scmp.lt.s32.totalorder %s13, 2
    // Predicated region
    $region25: #{double_conv.4} parent=5 // pred_check
      %p205 = pneg %p204
    $region26: #{double_conv.4} parent=5 // pred_check_branch
      %207 = sbr.rel (%p205) target = $region28
    $region27: #{double_conv.4} parent=5 // pred_region
      // Predicated region
      $region29: #{double_conv.4} parent=27 // pred_check
        %p208 = pneg %p33
      $region30: #{double_conv.4} parent=27 // pred_check_branch
        %210 = sbr.rel (%p208) target = $region32
      $region31: #{double_conv.4} parent=27 // pred_region
        %p211 = scmp.lt.s32.totalorder %s13, 1
        %s212 = scalar_select %p211, %s13, 1
        %s213 = smul.addr %s212, 32
        %s214 = smul.addr %s213, 8
        %s215 = scalar_lea.vmem %s0, %s214
      $region32: #{double_conv.4} parent=27 // pred_fallthru
        _
    $region28: #{double_conv.4} parent=5 // pred_fallthru
      _
    %p216 = scmp.le.s32.totalorder 1, %s13
    %p217 = scmp.lt.s32.totalorder %s13, 3
    %p218 = pnand %p216, %p217
    %p219 = pneg %p218
    // Predicated region
    $region33: #{double_conv.4} parent=5 // pred_check
      _
    $region34: #{double_conv.4} parent=5 // pred_check_branch
      %221 = sbr.rel (%p218) target = $region36
    $region35: #{double_conv.4} parent=5 // pred_region
      %s222 = ssub.s32 %s13, 1
      %p223 = scmp.lt.s32.totalorder %s18, 1
      %s224 = scalar_select %p223, %s18, 1
      %s225 = smul.addr %s224, 32
      %s226 = smul.addr %s225, 8
      %s227 = scalar_lea.vmem %s0, %s226
      %p228 = pneg %p39
      %p229 = pneg %p36
      %p230 = pneg %p60
      %p231 = pneg %p57
      %p232 = pneg %p81
      %p233 = pneg %p78
      %p234 = pneg %p102
      %p235 = pneg %p99
      %p236 = pneg %p128
      %p237 = pneg %p125
      %p238 = scmp.lt.s32.totalorder %s18, 1
      %s239 = scalar_select %p238, %s18, 1
      %s240 = smul.addr %s239, 32
      %s241 = smul.addr %s240, 8
      %s242 = scalar_lea.vmem %s4, %s241
      %p243 = pneg %p154
      %p244 = pneg %p151
      %p245 = scmp.lt.s32.totalorder %s18, 1
      %s246 = scalar_select %p245, %s18, 1
      %s247 = scalar_lea.vmem %s5, %s246
      %p248 = pneg %p180
      %p249 = pneg %p177
      %p250 = scmp.lt.s32.totalorder %s18, 1
      %s251 = scalar_select %p250, %s18, 1
      %s252 = scalar_lea.vmem %s6, %s251
      %p253 = scmp.lt.s32.totalorder %s18, 1
      %s254 = scalar_select %p253, %s18, 1
      %s255 = smul.addr %s254, 32
      %s256 = smul.addr %s255, 8
      %s257 = scalar_lea.vmem %s0, %s256
      %p258 = scmp.lt.s32.totalorder %s18, 1
      %s259 = scalar_select %p258, %s18, 1
      %s260 = smul.addr %s259, 32
      %s261 = smul.addr %s260, 8
      %s262 = scalar_lea.vmem %s4, %s261
      %p263 = scmp.lt.s32.totalorder %s18, 1
      %s264 = scalar_select %p263, %s18, 1
      %s265 = scalar_lea.vmem %s5, %s264
      %p266 = scmp.lt.s32.totalorder %s18, 1
      %s267 = scalar_select %p266, %s18, 1
      %s268 = scalar_lea.vmem %s6, %s267
      %v269 = vld [vmem:[%s257] sm:$0xff]
      %v270 = vld [vmem:[%s257 + $0x8] sm:$0xff]
      %v271 = vld [vmem:[%s257 + $0x10] sm:$0xff]
      %v272 = vld [vmem:[%s257 + $0x18] sm:$0xff]
      %v273 = vld [vmem:[%s257 + $0x20] sm:$0xff]
      %v274 = vld [vmem:[%s257 + $0x28] sm:$0xff]
      %v275 = vld [vmem:[%s257 + $0x30] sm:$0xff]
      %v276 = vld [vmem:[%s257 + $0x38] sm:$0xff]
      %v277 = vld [vmem:[%s257 + $0x40] sm:$0xff]
      %v278 = vld [vmem:[%s257 + $0x48] sm:$0xff]
      %v279 = vld [vmem:[%s257 + $0x50] sm:$0xff]
      %v280 = vld [vmem:[%s257 + $0x58] sm:$0xff]
      %v281 = vld [vmem:[%s257 + $0x60] sm:$0xff]
      %v282 = vld [vmem:[%s257 + $0x68] sm:$0xff]
      %v283 = vld [vmem:[%s257 + $0x70] sm:$0xff]
      %v284 = vld [vmem:[%s257 + $0x78] sm:$0xff]
      %v285 = vld [vmem:[%s257 + $0x80] sm:$0xff]
      %v286 = vld [vmem:[%s257 + $0x88] sm:$0xff]
      %v287 = vld [vmem:[%s257 + $0x90] sm:$0xff]
      %v288 = vld [vmem:[%s257 + $0x98] sm:$0xff]
      %v289 = vld [vmem:[%s257 + $0xa0] sm:$0xff]
      %v290 = vld [vmem:[%s257 + $0xa8] sm:$0xff]
      %v291 = vld [vmem:[%s257 + $0xb0] sm:$0xff]
      %v292 = vld [vmem:[%s257 + $0xb8] sm:$0xff]
      %v293 = vld [vmem:[%s257 + $0xc0] sm:$0xff]
      %v294 = vld [vmem:[%s257 + $0xc8] sm:$0xff]
      %v295 = vld [vmem:[%s257 + $0xd0] sm:$0xff]
      %v296 = vld [vmem:[%s257 + $0xd8] sm:$0xff]
      %v297 = vld [vmem:[%s257 + $0xe0] sm:$0xff]
      %v298 = vld [vmem:[%s257 + $0xe8] sm:$0xff]
      %v299 = vld [vmem:[%s257 + $0xf0] sm:$0xff]
      %v300 = vld [vmem:[%s257 + $0xf8] sm:$0xff]
      %v301 = vld [vmem:[%s2] sm:$0x1]
      %v302 = vld [vmem:[%s3] sm:$0x1]
      %v304 = vperm.slane %v301, 0
      %v306 = vmul.f32 %v269, %v304
      %v307 = vmul.f32 %v270, %v304
      %v308 = vmul.f32 %v271, %v304
      %v309 = vmul.f32 %v272, %v304
      %v310 = vmul.f32 %v273, %v304
      %v311 = vmul.f32 %v274, %v304
      %v312 = vmul.f32 %v275, %v304
      %v313 = vmul.f32 %v276, %v304
      %v314 = vmul.f32 %v277, %v304
      %v315 = vmul.f32 %v278, %v304
      %v316 = vmul.f32 %v279, %v304
      %v317 = vmul.f32 %v280, %v304
      %v318 = vmul.f32 %v281, %v304
      %v319 = vmul.f32 %v282, %v304
      %v320 = vmul.f32 %v283, %v304
      %v321 = vmul.f32 %v284, %v304
      %v322 = vmul.f32 %v285, %v304
      %v323 = vmul.f32 %v286, %v304
      %v324 = vmul.f32 %v287, %v304
      %v325 = vmul.f32 %v288, %v304
      %v326 = vmul.f32 %v289, %v304
      %v327 = vmul.f32 %v290, %v304
      %v328 = vmul.f32 %v291, %v304
      %v329 = vmul.f32 %v292, %v304
      %v330 = vmul.f32 %v293, %v304
      %v331 = vmul.f32 %v294, %v304
      %v332 = vmul.f32 %v295, %v304
      %v333 = vmul.f32 %v296, %v304
      %v334 = vmul.f32 %v297, %v304
      %v335 = vmul.f32 %v298, %v304
      %v336 = vmul.f32 %v299, %v304
      %v337 = vmul.f32 %v300, %v304
      %v339 = vperm.slane %v302, 0
      %v341 = vadd.f32 %v306, %v339
      %v342 = vadd.f32 %v307, %v339
      %v343 = vadd.f32 %v308, %v339
      %v344 = vadd.f32 %v309, %v339
      %v345 = vadd.f32 %v310, %v339
      %v346 = vadd.f32 %v311, %v339
      %v347 = vadd.f32 %v312, %v339
      %v348 = vadd.f32 %v313, %v339
      %v349 = vadd.f32 %v314, %v339
      %v350 = vadd.f32 %v315, %v339
      %v351 = vadd.f32 %v316, %v339
      %v352 = vadd.f32 %v317, %v339
      %v353 = vadd.f32 %v318, %v339
      %v354 = vadd.f32 %v319, %v339
      %v355 = vadd.f32 %v320, %v339
      %v356 = vadd.f32 %v321, %v339
      %v357 = vadd.f32 %v322, %v339
      %v358 = vadd.f32 %v323, %v339
      %v359 = vadd.f32 %v324, %v339
      %v360 = vadd.f32 %v325, %v339
      %v361 = vadd.f32 %v326, %v339
      %v362 = vadd.f32 %v327, %v339
      %v363 = vadd.f32 %v328, %v339
      %v364 = vadd.f32 %v329, %v339
      %v365 = vadd.f32 %v330, %v339
      %v366 = vadd.f32 %v331, %v339
      %v367 = vadd.f32 %v332, %v339
      %v368 = vadd.f32 %v333, %v339
      %v369 = vadd.f32 %v334, %v339
      %v370 = vadd.f32 %v335, %v339
      %v371 = vadd.f32 %v336, %v339
      %v372 = vadd.f32 %v337, %v339
      %v373 = vmax.f32 %v341, 0.0
      %v374 = vmax.f32 %v342, 0.0
      %v375 = vmax.f32 %v343, 0.0
      %v376 = vmax.f32 %v344, 0.0
      %v377 = vmax.f32 %v345, 0.0
      %v378 = vmax.f32 %v346, 0.0
      %v379 = vmax.f32 %v347, 0.0
      %v380 = vmax.f32 %v348, 0.0
      %v381 = vmax.f32 %v349, 0.0
      %v382 = vmax.f32 %v350, 0.0
      %v383 = vmax.f32 %v351, 0.0
      %v384 = vmax.f32 %v352, 0.0
      %v385 = vmax.f32 %v353, 0.0
      %v386 = vmax.f32 %v354, 0.0
      %v387 = vmax.f32 %v355, 0.0
      %v388 = vmax.f32 %v356, 0.0
      %v389 = vmax.f32 %v357, 0.0
      %v390 = vmax.f32 %v358, 0.0
      %v391 = vmax.f32 %v359, 0.0
      %v392 = vmax.f32 %v360, 0.0
      %v393 = vmax.f32 %v361, 0.0
      %v394 = vmax.f32 %v362, 0.0
      %v395 = vmax.f32 %v363, 0.0
      %v396 = vmax.f32 %v364, 0.0
      %v397 = vmax.f32 %v365, 0.0
      %v398 = vmax.f32 %v366, 0.0
      %v399 = vmax.f32 %v367, 0.0
      %v400 = vmax.f32 %v368, 0.0
      %v401 = vmax.f32 %v369, 0.0
      %v402 = vmax.f32 %v370, 0.0
      %v403 = vmax.f32 %v371, 0.0
      %v404 = vmax.f32 %v372, 0.0
      %vm405 = vcmask 64512
      %406 = vst.msk [vmem:[#allocation2] sm:$0xff] %vm405, 0.0
      %407 = vst.msk [vmem:[#allocation2 + $0x8] sm:$0xff] %vm405, 0.0
      %vm408 = vcmask 58368
      %409 = vst.msk [vmem:[#allocation2 + $0x10] sm:$0x3] %vm408, 0.0
      %410 = vst.msk [vmem:[#allocation2 + $0x18] sm:$0xff] %vm405, 0.0
      %411 = vst.msk [vmem:[#allocation2 + $0x20] sm:$0xff] %vm405, 0.0
      %412 = vst.msk [vmem:[#allocation2 + $0x28] sm:$0x3] %vm408, 0.0
      %413 = vst.msk [vmem:[#allocation2 + $0x30] sm:$0xff] %vm405, 0.0
      %414 = vst.msk [vmem:[#allocation2 + $0x38] sm:$0xff] %vm405, 0.0
      %415 = vst.msk [vmem:[#allocation2 + $0x40] sm:$0x3] %vm408, 0.0
      %416 = vst.msk [vmem:[#allocation2 + $0x48] sm:$0xff] %vm405, 0.0
      %417 = vst.msk [vmem:[#allocation2 + $0x50] sm:$0xff] %vm405, 0.0
      %418 = vst.msk [vmem:[#allocation2 + $0x58] sm:$0x3] %vm408, 0.0
      %419 = vst.msk [vmem:[#allocation2 + $0x60] sm:$0xff] %vm405, 0.0
      %420 = vst.msk [vmem:[#allocation2 + $0x68] sm:$0xff] %vm405, 0.0
      %421 = vst.msk [vmem:[#allocation2 + $0x70] sm:$0x3] %vm408, 0.0
      %422 = vst.msk [vmem:[#allocation2 + $0x78] sm:$0xff] %vm405, 0.0
      %423 = vst.msk [vmem:[#allocation2 + $0x80] sm:$0xff] %vm405, 0.0
      %424 = vst.msk [vmem:[#allocation2 + $0x88] sm:$0x3] %vm408, 0.0
      %425 = vst.msk [vmem:[#allocation2 + $0x90] sm:$0xff] %vm405, 0.0
      %426 = vst.msk [vmem:[#allocation2 + $0x98] sm:$0xff] %vm405, 0.0
      %427 = vst.msk [vmem:[#allocation2 + $0xa0] sm:$0x3] %vm408, 0.0
      %428 = vst.msk [vmem:[#allocation2 + $0xa8] sm:$0xff] %vm405, 0.0
      %429 = vst.msk [vmem:[#allocation2 + $0xb0] sm:$0xff] %vm405, 0.0
      %430 = vst.msk [vmem:[#allocation2 + $0xb8] sm:$0x3] %vm408, 0.0
      %431 = vst.msk [vmem:[#allocation2 + $0xc0] sm:$0xff] %vm405, 0.0
      %432 = vst.msk [vmem:[#allocation2 + $0xc8] sm:$0xff] %vm405, 0.0
      %433 = vst.msk [vmem:[#allocation2 + $0xd0] sm:$0x3] %vm408, 0.0
      %434 = vst.msk [vmem:[#allocation2 + $0xd8] sm:$0xff] %vm405, 0.0
      %435 = vst.msk [vmem:[#allocation2 + $0xe0] sm:$0xff] %vm405, 0.0
      %436 = vst.msk [vmem:[#allocation2 + $0xe8] sm:$0x3] %vm408, 0.0
      %437 = vst.msk [vmem:[#allocation2 + $0xf0] sm:$0xff] %vm405, 0.0
      %438 = vst.msk [vmem:[#allocation2 + $0xf8] sm:$0xff] %vm405, 0.0
      %439 = vst.msk [vmem:[#allocation2 + $0x100] sm:$0x3] %vm408, 0.0
      %440 = vst.msk [vmem:[#allocation2 + $0x108] sm:$0xff] %vm405, 0.0
      %441 = vst.msk [vmem:[#allocation2 + $0x110] sm:$0xff] %vm405, 0.0
      %442 = vst.msk [vmem:[#allocation2 + $0x118] sm:$0x3] %vm408, 0.0
      %443 = vst.msk [vmem:[#allocation2 + $0x120] sm:$0xff] %vm405, 0.0
      %444 = vst.msk [vmem:[#allocation2 + $0x128] sm:$0xff] %vm405, 0.0
      %445 = vst.msk [vmem:[#allocation2 + $0x130] sm:$0x3] %vm408, 0.0
      %446 = vst.msk [vmem:[#allocation2 + $0x138] sm:$0xff] %vm405, 0.0
      %447 = vst.msk [vmem:[#allocation2 + $0x140] sm:$0xff] %vm405, 0.0
      %448 = vst.msk [vmem:[#allocation2 + $0x148] sm:$0x3] %vm408, 0.0
      %449 = vst.msk [vmem:[#allocation2 + $0x150] sm:$0xff] %vm405, 0.0
      %450 = vst.msk [vmem:[#allocation2 + $0x158] sm:$0xff] %vm405, 0.0
      %451 = vst.msk [vmem:[#allocation2 + $0x160] sm:$0x3] %vm408, 0.0
      %452 = vst.msk [vmem:[#allocation2 + $0x168] sm:$0xff] %vm405, 0.0
      %453 = vst.msk [vmem:[#allocation2 + $0x170] sm:$0xff] %vm405, 0.0
      %454 = vst.msk [vmem:[#allocation2 + $0x178] sm:$0x3] %vm408, 0.0
      %455 = vst.msk [vmem:[#allocation2 + $0x180] sm:$0xff] %vm405, 0.0
      %456 = vst.msk [vmem:[#allocation2 + $0x188] sm:$0xff] %vm405, 0.0
      %457 = vst.msk [vmem:[#allocation2 + $0x190] sm:$0x3] %vm408, 0.0
      %458 = vst.msk [vmem:[#allocation2 + $0x198] sm:$0xff] %vm405, 0.0
      %459 = vst.msk [vmem:[#allocation2 + $0x1a0] sm:$0xff] %vm405, 0.0
      %460 = vst.msk [vmem:[#allocation2 + $0x1a8] sm:$0x3] %vm408, 0.0
      %s461 = scalar_lea.vmem [#allocation2], 24
      %462 = vst.msk [vmem:[%s461 + $0x1] sm:$0xff] %vm405, %v373
      %463 = vst.msk [vmem:[%s461 + $0x9] sm:$0xff] %vm405, %v374
      %464 = vst.msk [vmem:[%s461 + $0x19] sm:$0xff] %vm405, %v375
      %465 = vst.msk [vmem:[%s461 + $0x21] sm:$0xff] %vm405, %v376
      %466 = vst.msk [vmem:[%s461 + $0x31] sm:$0xff] %vm405, %v377
      %467 = vst.msk [vmem:[%s461 + $0x39] sm:$0xff] %vm405, %v378
      %468 = vst.msk [vmem:[%s461 + $0x49] sm:$0xff] %vm405, %v379
      %469 = vst.msk [vmem:[%s461 + $0x51] sm:$0xff] %vm405, %v380
      %470 = vst.msk [vmem:[%s461 + $0x61] sm:$0xff] %vm405, %v381
      %471 = vst.msk [vmem:[%s461 + $0x69] sm:$0xff] %vm405, %v382
      %472 = vst.msk [vmem:[%s461 + $0x79] sm:$0xff] %vm405, %v383
      %473 = vst.msk [vmem:[%s461 + $0x81] sm:$0xff] %vm405, %v384
      %474 = vst.msk [vmem:[%s461 + $0x91] sm:$0xff] %vm405, %v385
      %475 = vst.msk [vmem:[%s461 + $0x99] sm:$0xff] %vm405, %v386
      %476 = vst.msk [vmem:[%s461 + $0xa9] sm:$0xff] %vm405, %v387
      %477 = vst.msk [vmem:[%s461 + $0xb1] sm:$0xff] %vm405, %v388
      %478 = vst.msk [vmem:[%s461 + $0xc1] sm:$0xff] %vm405, %v389
      %479 = vst.msk [vmem:[%s461 + $0xc9] sm:$0xff] %vm405, %v390
      %480 = vst.msk [vmem:[%s461 + $0xd9] sm:$0xff] %vm405, %v391
      %481 = vst.msk [vmem:[%s461 + $0xe1] sm:$0xff] %vm405, %v392
      %482 = vst.msk [vmem:[%s461 + $0xf1] sm:$0xff] %vm405, %v393
      %483 = vst.msk [vmem:[%s461 + $0xf9] sm:$0xff] %vm405, %v394
      %484 = vst.msk [vmem:[%s461 + $0x109] sm:$0xff] %vm405, %v395
      %485 = vst.msk [vmem:[%s461 + $0x111] sm:$0xff] %vm405, %v396
      %486 = vst.msk [vmem:[%s461 + $0x121] sm:$0xff] %vm405, %v397
      %487 = vst.msk [vmem:[%s461 + $0x129] sm:$0xff] %vm405, %v398
      %488 = vst.msk [vmem:[%s461 + $0x139] sm:$0xff] %vm405, %v399
      %489 = vst.msk [vmem:[%s461 + $0x141] sm:$0xff] %vm405, %v400
      %490 = vst.msk [vmem:[%s461 + $0x151] sm:$0xff] %vm405, %v401
      %491 = vst.msk [vmem:[%s461 + $0x159] sm:$0xff] %vm405, %v402
      %492 = vst.msk [vmem:[%s461 + $0x169] sm:$0xff] %vm405, %v403
      %493 = vst.msk [vmem:[%s461 + $0x171] sm:$0xff] %vm405, %v404
      %v494 = vld [vmem:[#allocation2] sm:$0xff]
      %v495 = vld [vmem:[#allocation2 + $0x8] sm:$0xff]
      %v496 = vld [vmem:[#allocation2 + $0x18] sm:$0xff]
      %v497 = vld [vmem:[#allocation2 + $0x20] sm:$0xff]
      %v498 = vld [vmem:[#allocation2 + $0x30] sm:$0xff]
      %v499 = vld [vmem:[#allocation2 + $0x38] sm:$0xff]
      %v500 = vld [vmem:[#allocation2 + $0x48] sm:$0xff]
      %v501 = vld [vmem:[#allocation2 + $0x50] sm:$0xff]
      %v502 = vld [vmem:[#allocation2 + $0x60] sm:$0xff]
      %v503 = vld [vmem:[#allocation2 + $0x68] sm:$0xff]
      %v504 = vld [vmem:[#allocation2 + $0x78] sm:$0xff]
      %v505 = vld [vmem:[#allocation2 + $0x80] sm:$0xff]
      %v506 = vld [vmem:[#allocation2 + $0x90] sm:$0xff]
      %v507 = vld [vmem:[#allocation2 + $0x98] sm:$0xff]
      %v508 = vld [vmem:[#allocation2 + $0xa8] sm:$0xff]
      %v509 = vld [vmem:[#allocation2 + $0xb0] sm:$0xff]
      %v510 = vld [vmem:[#allocation2 + $0xc0] sm:$0xff]
      %v511 = vld [vmem:[#allocation2 + $0xc8] sm:$0xff]
      %v512 = vld [vmem:[#allocation2 + $0xd8] sm:$0xff]
      %v513 = vld [vmem:[#allocation2 + $0xe0] sm:$0xff]
      %v514 = vld [vmem:[#allocation2 + $0xf0] sm:$0xff]
      %v515 = vld [vmem:[#allocation2 + $0xf8] sm:$0xff]
      %v516 = vld [vmem:[#allocation2 + $0x108] sm:$0xff]
      %v517 = vld [vmem:[#allocation2 + $0x110] sm:$0xff]
      %v518 = vld [vmem:[#allocation2 + $0x120] sm:$0xff]
      %v519 = vld [vmem:[#allocation2 + $0x128] sm:$0xff]
      %v520 = vld [vmem:[#allocation2 + $0x138] sm:$0xff]
      %v521 = vld [vmem:[#allocation2 + $0x140] sm:$0xff]
      %v522 = vld [vmem:[#allocation2 + $0x150] sm:$0xff]
      %v523 = vld [vmem:[#allocation2 + $0x158] sm:$0xff]
      %v524 = vld [vmem:[#allocation2 + $0x168] sm:$0xff]
      %v525 = vld [vmem:[#allocation2 + $0x170] sm:$0xff]
      %526 = vst.msk [vmem:[#allocation3] sm:$0xff] %vm405, %v494
      %527 = vst.msk [vmem:[#allocation3 + $0x8] sm:$0xff] %vm405, %v495
      %528 = vst.msk [vmem:[#allocation3 + $0x10] sm:$0xff] %vm405, %v496
      %529 = vst.msk [vmem:[#allocation3 + $0x18] sm:$0xff] %vm405, %v497
      %530 = vst.msk [vmem:[#allocation3 + $0x20] sm:$0xff] %vm405, %v498
      %531 = vst.msk [vmem:[#allocation3 + $0x28] sm:$0xff] %vm405, %v499
      %532 = vst.msk [vmem:[#allocation3 + $0x30] sm:$0xff] %vm405, %v500
      %533 = vst.msk [vmem:[#allocation3 + $0x38] sm:$0xff] %vm405, %v501
      %534 = vst.msk [vmem:[#allocation3 + $0x40] sm:$0xff] %vm405, %v502
      %535 = vst.msk [vmem:[#allocation3 + $0x48] sm:$0xff] %vm405, %v503
      %536 = vst.msk [vmem:[#allocation3 + $0x50] sm:$0xff] %vm405, %v504
      %537 = vst.msk [vmem:[#allocation3 + $0x58] sm:$0xff] %vm405, %v505
      %538 = vst.msk [vmem:[#allocation3 + $0x60] sm:$0xff] %vm405, %v506
      %539 = vst.msk [vmem:[#allocation3 + $0x68] sm:$0xff] %vm405, %v507
      %540 = vst.msk [vmem:[#allocation3 + $0x70] sm:$0xff] %vm405, %v508
      %541 = vst.msk [vmem:[#allocation3 + $0x78] sm:$0xff] %vm405, %v509
      %542 = vst.msk [vmem:[#allocation3 + $0x80] sm:$0xff] %vm405, %v510
      %543 = vst.msk [vmem:[#allocation3 + $0x88] sm:$0xff] %vm405, %v511
      %544 = vst.msk [vmem:[#allocation3 + $0x90] sm:$0xff] %vm405, %v512
      %545 = vst.msk [vmem:[#allocation3 + $0x98] sm:$0xff] %vm405, %v513
      %546 = vst.msk [vmem:[#allocation3 + $0xa0] sm:$0xff] %vm405, %v514
      %547 = vst.msk [vmem:[#allocation3 + $0xa8] sm:$0xff] %vm405, %v515
      %548 = vst.msk [vmem:[#allocation3 + $0xb0] sm:$0xff] %vm405, %v516
      %549 = vst.msk [vmem:[#allocation3 + $0xb8] sm:$0xff] %vm405, %v517
      %550 = vst.msk [vmem:[#allocation3 + $0xc0] sm:$0xff] %vm405, %v518
      %551 = vst.msk [vmem:[#allocation3 + $0xc8] sm:$0xff] %vm405, %v519
      %552 = vst.msk [vmem:[#allocation3 + $0xd0] sm:$0xff] %vm405, %v520
      %553 = vst.msk [vmem:[#allocation3 + $0xd8] sm:$0xff] %vm405, %v521
      %554 = vst.msk [vmem:[#allocation3 + $0xe0] sm:$0xff] %vm405, %v522
      %555 = vst.msk [vmem:[#allocation3 + $0xe8] sm:$0xff] %vm405, %v523
      %556 = vst.msk [vmem:[#allocation3 + $0xf0] sm:$0xff] %vm405, %v524
      %557 = vst.msk [vmem:[#allocation3 + $0xf8] sm:$0xff] %vm405, %v525
      %v558 = vld [vmem:[#allocation2 + $0x1] sm:$0xff]
      %v559 = vld [vmem:[#allocation2 + $0x9] sm:$0xff]
      %v560 = vld [vmem:[#allocation2 + $0x19] sm:$0xff]
      %v561 = vld [vmem:[#allocation2 + $0x21] sm:$0xff]
      %v562 = vld [vmem:[#allocation2 + $0x31] sm:$0xff]
      %v563 = vld [vmem:[#allocation2 + $0x39] sm:$0xff]
      %v564 = vld [vmem:[#allocation2 + $0x49] sm:$0xff]
      %v565 = vld [vmem:[#allocation2 + $0x51] sm:$0xff]
      %v566 = vld [vmem:[#allocation2 + $0x61] sm:$0xff]
      %v567 = vld [vmem:[#allocation2 + $0x69] sm:$0xff]
      %v568 = vld [vmem:[#allocation2 + $0x79] sm:$0xff]
      %v569 = vld [vmem:[#allocation2 + $0x81] sm:$0xff]
      %v570 = vld [vmem:[#allocation2 + $0x91] sm:$0xff]
      %v571 = vld [vmem:[#allocation2 + $0x99] sm:$0xff]
      %v572 = vld [vmem:[#allocation2 + $0xa9] sm:$0xff]
      %v573 = vld [vmem:[#allocation2 + $0xb1] sm:$0xff]
      %v574 = vld [vmem:[#allocation2 + $0xc1] sm:$0xff]
      %v575 = vld [vmem:[#allocation2 + $0xc9] sm:$0xff]
      %v576 = vld [vmem:[#allocation2 + $0xd9] sm:$0xff]
      %v577 = vld [vmem:[#allocation2 + $0xe1] sm:$0xff]
      %v578 = vld [vmem:[#allocation2 + $0xf1] sm:$0xff]
      %v579 = vld [vmem:[#allocation2 + $0xf9] sm:$0xff]
      %v580 = vld [vmem:[#allocation2 + $0x109] sm:$0xff]
      %v581 = vld [vmem:[#allocation2 + $0x111] sm:$0xff]
      %v582 = vld [vmem:[#allocation2 + $0x121] sm:$0xff]
      %v583 = vld [vmem:[#allocation2 + $0x129] sm:$0xff]
      %v584 = vld [vmem:[#allocation2 + $0x139] sm:$0xff]
      %v585 = vld [vmem:[#allocation2 + $0x141] sm:$0xff]
      %v586 = vld [vmem:[#allocation2 + $0x151] sm:$0xff]
      %v587 = vld [vmem:[#allocation2 + $0x159] sm:$0xff]
      %v588 = vld [vmem:[#allocation2 + $0x169] sm:$0xff]
      %v589 = vld [vmem:[#allocation2 + $0x171] sm:$0xff]
      %622 = vrot.lane.b32.xlu0 %v558, 8
      %v623 = vpop.permute.xlu0 %622
      %624 = vrot.lane.b32.xlu0 %v559, 8
      %v625 = vpop.permute.xlu0 %624
      %626 = vrot.lane.b32.xlu0 %v560, 8
      %v627 = vpop.permute.xlu0 %626
      %628 = vrot.lane.b32.xlu0 %v561, 8
      %v629 = vpop.permute.xlu0 %628
      %630 = vrot.lane.b32.xlu0 %v562, 8
      %v631 = vpop.permute.xlu0 %630
      %632 = vrot.lane.b32.xlu0 %v563, 8
      %v633 = vpop.permute.xlu0 %632
      %634 = vrot.lane.b32.xlu0 %v564, 8
      %v635 = vpop.permute.xlu0 %634
      %636 = vrot.lane.b32.xlu0 %v565, 8
      %v637 = vpop.permute.xlu0 %636
      %638 = vrot.lane.b32.xlu0 %v566, 8
      %v639 = vpop.permute.xlu0 %638
      %640 = vrot.lane.b32.xlu0 %v567, 8
      %v641 = vpop.permute.xlu0 %640
      %642 = vrot.lane.b32.xlu0 %v568, 8
      %v643 = vpop.permute.xlu0 %642
      %644 = vrot.lane.b32.xlu0 %v569, 8
      %v645 = vpop.permute.xlu0 %644
      %646 = vrot.lane.b32.xlu0 %v570, 8
      %v647 = vpop.permute.xlu0 %646
      %648 = vrot.lane.b32.xlu0 %v571, 8
      %v649 = vpop.permute.xlu0 %648
      %650 = vrot.lane.b32.xlu0 %v572, 8
      %v651 = vpop.permute.xlu0 %650
      %652 = vrot.lane.b32.xlu0 %v573, 8
      %v653 = vpop.permute.xlu0 %652
      %654 = vrot.lane.b32.xlu0 %v574, 8
      %v655 = vpop.permute.xlu0 %654
      %656 = vrot.lane.b32.xlu0 %v575, 8
      %v657 = vpop.permute.xlu0 %656
      %658 = vrot.lane.b32.xlu0 %v576, 8
      %v659 = vpop.permute.xlu0 %658
      %660 = vrot.lane.b32.xlu0 %v577, 8
      %v661 = vpop.permute.xlu0 %660
      %662 = vrot.lane.b32.xlu0 %v578, 8
      %v663 = vpop.permute.xlu0 %662
      %664 = vrot.lane.b32.xlu0 %v579, 8
      %v665 = vpop.permute.xlu0 %664
      %666 = vrot.lane.b32.xlu0 %v580, 8
      %v667 = vpop.permute.xlu0 %666
      %668 = vrot.lane.b32.xlu0 %v581, 8
      %v669 = vpop.permute.xlu0 %668
      %670 = vrot.lane.b32.xlu0 %v582, 8
      %v671 = vpop.permute.xlu0 %670
      %672 = vrot.lane.b32.xlu0 %v583, 8
      %v673 = vpop.permute.xlu0 %672
      %674 = vrot.lane.b32.xlu0 %v584, 8
      %v675 = vpop.permute.xlu0 %674
      %676 = vrot.lane.b32.xlu0 %v585, 8
      %v677 = vpop.permute.xlu0 %676
      %678 = vrot.lane.b32.xlu0 %v586, 8
      %v679 = vpop.permute.xlu0 %678
      %680 = vrot.lane.b32.xlu0 %v587, 8
      %v681 = vpop.permute.xlu0 %680
      %682 = vrot.lane.b32.xlu0 %v588, 8
      %v683 = vpop.permute.xlu0 %682
      %684 = vrot.lane.b32.xlu0 %v589, 8
      %v685 = vpop.permute.xlu0 %684
      %vm718 = vcmask 130112
      %719 = vst.msk [vmem:[#allocation3] sm:$0xff] %vm718, %v623
      %720 = vst.msk [vmem:[#allocation3 + $0x8] sm:$0xff] %vm718, %v625
      %721 = vst.msk [vmem:[#allocation3 + $0x10] sm:$0xff] %vm718, %v627
      %722 = vst.msk [vmem:[#allocation3 + $0x18] sm:$0xff] %vm718, %v629
      %723 = vst.msk [vmem:[#allocation3 + $0x20] sm:$0xff] %vm718, %v631
      %724 = vst.msk [vmem:[#allocation3 + $0x28] sm:$0xff] %vm718, %v633
      %725 = vst.msk [vmem:[#allocation3 + $0x30] sm:$0xff] %vm718, %v635
      %726 = vst.msk [vmem:[#allocation3 + $0x38] sm:$0xff] %vm718, %v637
      %727 = vst.msk [vmem:[#allocation3 + $0x40] sm:$0xff] %vm718, %v639
      %728 = vst.msk [vmem:[#allocation3 + $0x48] sm:$0xff] %vm718, %v641
      %729 = vst.msk [vmem:[#allocation3 + $0x50] sm:$0xff] %vm718, %v643
      %730 = vst.msk [vmem:[#allocation3 + $0x58] sm:$0xff] %vm718, %v645
      %731 = vst.msk [vmem:[#allocation3 + $0x60] sm:$0xff] %vm718, %v647
      %732 = vst.msk [vmem:[#allocation3 + $0x68] sm:$0xff] %vm718, %v649
      %733 = vst.msk [vmem:[#allocation3 + $0x70] sm:$0xff] %vm718, %v651
      %734 = vst.msk [vmem:[#allocation3 + $0x78] sm:$0xff] %vm718, %v653
      %735 = vst.msk [vmem:[#allocation3 + $0x80] sm:$0xff] %vm718, %v655
      %736 = vst.msk [vmem:[#allocation3 + $0x88] sm:$0xff] %vm718, %v657
      %737 = vst.msk [vmem:[#allocation3 + $0x90] sm:$0xff] %vm718, %v659
      %738 = vst.msk [vmem:[#allocation3 + $0x98] sm:$0xff] %vm718, %v661
      %739 = vst.msk [vmem:[#allocation3 + $0xa0] sm:$0xff] %vm718, %v663
      %740 = vst.msk [vmem:[#allocation3 + $0xa8] sm:$0xff] %vm718, %v665
      %741 = vst.msk [vmem:[#allocation3 + $0xb0] sm:$0xff] %vm718, %v667
      %742 = vst.msk [vmem:[#allocation3 + $0xb8] sm:$0xff] %vm718, %v669
      %743 = vst.msk [vmem:[#allocation3 + $0xc0] sm:$0xff] %vm718, %v671
      %744 = vst.msk [vmem:[#allocation3 + $0xc8] sm:$0xff] %vm718, %v673
      %745 = vst.msk [vmem:[#allocation3 + $0xd0] sm:$0xff] %vm718, %v675
      %746 = vst.msk [vmem:[#allocation3 + $0xd8] sm:$0xff] %vm718, %v677
      %747 = vst.msk [vmem:[#allocation3 + $0xe0] sm:$0xff] %vm718, %v679
      %748 = vst.msk [vmem:[#allocation3 + $0xe8] sm:$0xff] %vm718, %v681
      %749 = vst.msk [vmem:[#allocation3 + $0xf0] sm:$0xff] %vm718, %v683
      %750 = vst.msk [vmem:[#allocation3 + $0xf8] sm:$0xff] %vm718, %v685
      %v751 = vld [vmem:[#allocation2 + $0x2] sm:$0xff]
      %v752 = vld [vmem:[#allocation2 + $0xa] sm:$0xff]
      %v753 = vld [vmem:[#allocation2 + $0x1a] sm:$0xff]
      %v754 = vld [vmem:[#allocation2 + $0x22] sm:$0xff]
      %v755 = vld [vmem:[#allocation2 + $0x32] sm:$0xff]
      %v756 = vld [vmem:[#allocation2 + $0x3a] sm:$0xff]
      %v757 = vld [vmem:[#allocation2 + $0x4a] sm:$0xff]
      %v758 = vld [vmem:[#allocation2 + $0x52] sm:$0xff]
      %v759 = vld [vmem:[#allocation2 + $0x62] sm:$0xff]
      %v760 = vld [vmem:[#allocation2 + $0x6a] sm:$0xff]
      %v761 = vld [vmem:[#allocation2 + $0x7a] sm:$0xff]
      %v762 = vld [vmem:[#allocation2 + $0x82] sm:$0xff]
      %v763 = vld [vmem:[#allocation2 + $0x92] sm:$0xff]
      %v764 = vld [vmem:[#allocation2 + $0x9a] sm:$0xff]
      %v765 = vld [vmem:[#allocation2 + $0xaa] sm:$0xff]
      %v766 = vld [vmem:[#allocation2 + $0xb2] sm:$0xff]
      %v767 = vld [vmem:[#allocation2 + $0xc2] sm:$0xff]
      %v768 = vld [vmem:[#allocation2 + $0xca] sm:$0xff]
      %v769 = vld [vmem:[#allocation2 + $0xda] sm:$0xff]
      %v770 = vld [vmem:[#allocation2 + $0xe2] sm:$0xff]
      %v771 = vld [vmem:[#allocation2 + $0xf2] sm:$0xff]
      %v772 = vld [vmem:[#allocation2 + $0xfa] sm:$0xff]
      %v773 = vld [vmem:[#allocation2 + $0x10a] sm:$0xff]
      %v774 = vld [vmem:[#allocation2 + $0x112] sm:$0xff]
      %v775 = vld [vmem:[#allocation2 + $0x122] sm:$0xff]
      %v776 = vld [vmem:[#allocation2 + $0x12a] sm:$0xff]
      %v777 = vld [vmem:[#allocation2 + $0x13a] sm:$0xff]
      %v778 = vld [vmem:[#allocation2 + $0x142] sm:$0xff]
      %v779 = vld [vmem:[#allocation2 + $0x152] sm:$0xff]
      %v780 = vld [vmem:[#allocation2 + $0x15a] sm:$0xff]
      %v781 = vld [vmem:[#allocation2 + $0x16a] sm:$0xff]
      %v782 = vld [vmem:[#allocation2 + $0x172] sm:$0xff]
      %815 = vrot.lane.b32.xlu0 %v751, 16
      %v816 = vpop.permute.xlu0 %815
      %817 = vrot.lane.b32.xlu0 %v752, 16
      %v818 = vpop.permute.xlu0 %817
      %819 = vrot.lane.b32.xlu0 %v753, 16
      %v820 = vpop.permute.xlu0 %819
      %821 = vrot.lane.b32.xlu0 %v754, 16
      %v822 = vpop.permute.xlu0 %821
      %823 = vrot.lane.b32.xlu0 %v755, 16
      %v824 = vpop.permute.xlu0 %823
      %825 = vrot.lane.b32.xlu0 %v756, 16
      %v826 = vpop.permute.xlu0 %825
      %827 = vrot.lane.b32.xlu0 %v757, 16
      %v828 = vpop.permute.xlu0 %827
      %829 = vrot.lane.b32.xlu0 %v758, 16
      %v830 = vpop.permute.xlu0 %829
      %831 = vrot.lane.b32.xlu0 %v759, 16
      %v832 = vpop.permute.xlu0 %831
      %833 = vrot.lane.b32.xlu0 %v760, 16
      %v834 = vpop.permute.xlu0 %833
      %835 = vrot.lane.b32.xlu0 %v761, 16
      %v836 = vpop.permute.xlu0 %835
      %837 = vrot.lane.b32.xlu0 %v762, 16
      %v838 = vpop.permute.xlu0 %837
      %839 = vrot.lane.b32.xlu0 %v763, 16
      %v840 = vpop.permute.xlu0 %839
      %841 = vrot.lane.b32.xlu0 %v764, 16
      %v842 = vpop.permute.xlu0 %841
      %843 = vrot.lane.b32.xlu0 %v765, 16
      %v844 = vpop.permute.xlu0 %843
      %845 = vrot.lane.b32.xlu0 %v766, 16
      %v846 = vpop.permute.xlu0 %845
      %847 = vrot.lane.b32.xlu0 %v767, 16
      %v848 = vpop.permute.xlu0 %847
      %849 = vrot.lane.b32.xlu0 %v768, 16
      %v850 = vpop.permute.xlu0 %849
      %851 = vrot.lane.b32.xlu0 %v769, 16
      %v852 = vpop.permute.xlu0 %851
      %853 = vrot.lane.b32.xlu0 %v770, 16
      %v854 = vpop.permute.xlu0 %853
      %855 = vrot.lane.b32.xlu0 %v771, 16
      %v856 = vpop.permute.xlu0 %855
      %857 = vrot.lane.b32.xlu0 %v772, 16
      %v858 = vpop.permute.xlu0 %857
      %859 = vrot.lane.b32.xlu0 %v773, 16
      %v860 = vpop.permute.xlu0 %859
      %861 = vrot.lane.b32.xlu0 %v774, 16
      %v862 = vpop.permute.xlu0 %861
      %863 = vrot.lane.b32.xlu0 %v775, 16
      %v864 = vpop.permute.xlu0 %863
      %865 = vrot.lane.b32.xlu0 %v776, 16
      %v866 = vpop.permute.xlu0 %865
      %867 = vrot.lane.b32.xlu0 %v777, 16
      %v868 = vpop.permute.xlu0 %867
      %869 = vrot.lane.b32.xlu0 %v778, 16
      %v870 = vpop.permute.xlu0 %869
      %871 = vrot.lane.b32.xlu0 %v779, 16
      %v872 = vpop.permute.xlu0 %871
      %873 = vrot.lane.b32.xlu0 %v780, 16
      %v874 = vpop.permute.xlu0 %873
      %875 = vrot.lane.b32.xlu0 %v781, 16
      %v876 = vpop.permute.xlu0 %875
      %877 = vrot.lane.b32.xlu0 %v782, 16
      %v878 = vpop.permute.xlu0 %877
      %vm911 = vcmask 195712
      %912 = vst.msk [vmem:[#allocation3] sm:$0xff] %vm911, %v816
      %913 = vst.msk [vmem:[#allocation3 + $0x8] sm:$0xff] %vm911, %v818
      %914 = vst.msk [vmem:[#allocation3 + $0x10] sm:$0xff] %vm911, %v820
      %915 = vst.msk [vmem:[#allocation3 + $0x18] sm:$0xff] %vm911, %v822
      %916 = vst.msk [vmem:[#allocation3 + $0x20] sm:$0xff] %vm911, %v824
      %917 = vst.msk [vmem:[#allocation3 + $0x28] sm:$0xff] %vm911, %v826
      %918 = vst.msk [vmem:[#allocation3 + $0x30] sm:$0xff] %vm911, %v828
      %919 = vst.msk [vmem:[#allocation3 + $0x38] sm:$0xff] %vm911, %v830
      %920 = vst.msk [vmem:[#allocation3 + $0x40] sm:$0xff] %vm911, %v832
      %921 = vst.msk [vmem:[#allocation3 + $0x48] sm:$0xff] %vm911, %v834
      %922 = vst.msk [vmem:[#allocation3 + $0x50] sm:$0xff] %vm911, %v836
      %923 = vst.msk [vmem:[#allocation3 + $0x58] sm:$0xff] %vm911, %v838
      %924 = vst.msk [vmem:[#allocation3 + $0x60] sm:$0xff] %vm911, %v840
      %925 = vst.msk [vmem:[#allocation3 + $0x68] sm:$0xff] %vm911, %v842
      %926 = vst.msk [vmem:[#allocation3 + $0x70] sm:$0xff] %vm911, %v844
      %927 = vst.msk [vmem:[#allocation3 + $0x78] sm:$0xff] %vm911, %v846
      %928 = vst.msk [vmem:[#allocation3 + $0x80] sm:$0xff] %vm911, %v848
      %929 = vst.msk [vmem:[#allocation3 + $0x88] sm:$0xff] %vm911, %v850
      %930 = vst.msk [vmem:[#allocation3 + $0x90] sm:$0xff] %vm911, %v852
      %931 = vst.msk [vmem:[#allocation3 + $0x98] sm:$0xff] %vm911, %v854
      %932 = vst.msk [vmem:[#allocation3 + $0xa0] sm:$0xff] %vm911, %v856
      %933 = vst.msk [vmem:[#allocation3 + $0xa8] sm:$0xff] %vm911, %v858
      %934 = vst.msk [vmem:[#allocation3 + $0xb0] sm:$0xff] %vm911, %v860
      %935 = vst.msk [vmem:[#allocation3 + $0xb8] sm:$0xff] %vm911, %v862
      %936 = vst.msk [vmem:[#allocation3 + $0xc0] sm:$0xff] %vm911, %v864
      %937 = vst.msk [vmem:[#allocation3 + $0xc8] sm:$0xff] %vm911, %v866
      %938 = vst.msk [vmem:[#allocation3 + $0xd0] sm:$0xff] %vm911, %v868
      %939 = vst.msk [vmem:[#allocation3 + $0xd8] sm:$0xff] %vm911, %v870
      %940 = vst.msk [vmem:[#allocation3 + $0xe0] sm:$0xff] %vm911, %v872
      %941 = vst.msk [vmem:[#allocation3 + $0xe8] sm:$0xff] %vm911, %v874
      %942 = vst.msk [vmem:[#allocation3 + $0xf0] sm:$0xff] %vm911, %v876
      %943 = vst.msk [vmem:[#allocation3 + $0xf8] sm:$0xff] %vm911, %v878
      %v944 = vld [vmem:[%s461] sm:$0xff]
      %v945 = vld [vmem:[%s461 + $0x8] sm:$0xff]
      %v946 = vld [vmem:[%s461 + $0x18] sm:$0xff]
      %v947 = vld [vmem:[%s461 + $0x20] sm:$0xff]
      %v948 = vld [vmem:[%s461 + $0x30] sm:$0xff]
      %v949 = vld [vmem:[%s461 + $0x38] sm:$0xff]
      %v950 = vld [vmem:[%s461 + $0x48] sm:$0xff]
      %v951 = vld [vmem:[%s461 + $0x50] sm:$0xff]
      %v952 = vld [vmem:[%s461 + $0x60] sm:$0xff]
      %v953 = vld [vmem:[%s461 + $0x68] sm:$0xff]
      %v954 = vld [vmem:[%s461 + $0x78] sm:$0xff]
      %v955 = vld [vmem:[%s461 + $0x80] sm:$0xff]
      %v956 = vld [vmem:[%s461 + $0x90] sm:$0xff]
      %v957 = vld [vmem:[%s461 + $0x98] sm:$0xff]
      %v958 = vld [vmem:[%s461 + $0xa8] sm:$0xff]
      %v959 = vld [vmem:[%s461 + $0xb0] sm:$0xff]
      %v960 = vld [vmem:[%s461 + $0xc0] sm:$0xff]
      %v961 = vld [vmem:[%s461 + $0xc8] sm:$0xff]
      %v962 = vld [vmem:[%s461 + $0xd8] sm:$0xff]
      %v963 = vld [vmem:[%s461 + $0xe0] sm:$0xff]
      %v964 = vld [vmem:[%s461 + $0xf0] sm:$0xff]
      %v965 = vld [vmem:[%s461 + $0xf8] sm:$0xff]
      %v966 = vld [vmem:[%s461 + $0x108] sm:$0xff]
      %v967 = vld [vmem:[%s461 + $0x110] sm:$0xff]
      %v968 = vld [vmem:[%s461 + $0x120] sm:$0xff]
      %v969 = vld [vmem:[%s461 + $0x128] sm:$0xff]
      %v970 = vld [vmem:[%s461 + $0x138] sm:$0xff]
      %v971 = vld [vmem:[%s461 + $0x140] sm:$0xff]
      %v972 = vld [vmem:[%s461 + $0x150] sm:$0xff]
      %v973 = vld [vmem:[%s461 + $0x158] sm:$0xff]
      %v974 = vld [vmem:[%s461 + $0x168] sm:$0xff]
      %v975 = vld [vmem:[%s461 + $0x170] sm:$0xff]
      %1008 = vrot.lane.b32.xlu0 %v944, 24
      %v1009 = vpop.permute.xlu0 %1008
      %1010 = vrot.lane.b32.xlu0 %v945, 24
      %v1011 = vpop.permute.xlu0 %1010
      %1012 = vrot.lane.b32.xlu0 %v946, 24
      %v1013 = vpop.permute.xlu0 %1012
      %1014 = vrot.lane.b32.xlu0 %v947, 24
      %v1015 = vpop.permute.xlu0 %1014
      %1016 = vrot.lane.b32.xlu0 %v948, 24
      %v1017 = vpop.permute.xlu0 %1016
      %1018 = vrot.lane.b32.xlu0 %v949, 24
      %v1019 = vpop.permute.xlu0 %1018
      %1020 = vrot.lane.b32.xlu0 %v950, 24
      %v1021 = vpop.permute.xlu0 %1020
      %1022 = vrot.lane.b32.xlu0 %v951, 24
      %v1023 = vpop.permute.xlu0 %1022
      %1024 = vrot.lane.b32.xlu0 %v952, 24
      %v1025 = vpop.permute.xlu0 %1024
      %1026 = vrot.lane.b32.xlu0 %v953, 24
      %v1027 = vpop.permute.xlu0 %1026
      %1028 = vrot.lane.b32.xlu0 %v954, 24
      %v1029 = vpop.permute.xlu0 %1028
      %1030 = vrot.lane.b32.xlu0 %v955, 24
      %v1031 = vpop.permute.xlu0 %1030
      %1032 = vrot.lane.b32.xlu0 %v956, 24
      %v1033 = vpop.permute.xlu0 %1032
      %1034 = vrot.lane.b32.xlu0 %v957, 24
      %v1035 = vpop.permute.xlu0 %1034
      %1036 = vrot.lane.b32.xlu0 %v958, 24
      %v1037 = vpop.permute.xlu0 %1036
      %1038 = vrot.lane.b32.xlu0 %v959, 24
      %v1039 = vpop.permute.xlu0 %1038
      %1040 = vrot.lane.b32.xlu0 %v960, 24
      %v1041 = vpop.permute.xlu0 %1040
      %1042 = vrot.lane.b32.xlu0 %v961, 24
      %v1043 = vpop.permute.xlu0 %1042
      %1044 = vrot.lane.b32.xlu0 %v962, 24
      %v1045 = vpop.permute.xlu0 %1044
      %1046 = vrot.lane.b32.xlu0 %v963, 24
      %v1047 = vpop.permute.xlu0 %1046
      %1048 = vrot.lane.b32.xlu0 %v964, 24
      %v1049 = vpop.permute.xlu0 %1048
      %1050 = vrot.lane.b32.xlu0 %v965, 24
      %v1051 = vpop.permute.xlu0 %1050
      %1052 = vrot.lane.b32.xlu0 %v966, 24
      %v1053 = vpop.permute.xlu0 %1052
      %1054 = vrot.lane.b32.xlu0 %v967, 24
      %v1055 = vpop.permute.xlu0 %1054
      %1056 = vrot.lane.b32.xlu0 %v968, 24
      %v1057 = vpop.permute.xlu0 %1056
      %1058 = vrot.lane.b32.xlu0 %v969, 24
      %v1059 = vpop.permute.xlu0 %1058
      %1060 = vrot.lane.b32.xlu0 %v970, 24
      %v1061 = vpop.permute.xlu0 %1060
      %1062 = vrot.lane.b32.xlu0 %v971, 24
      %v1063 = vpop.permute.xlu0 %1062
      %1064 = vrot.lane.b32.xlu0 %v972, 24
      %v1065 = vpop.permute.xlu0 %1064
      %1066 = vrot.lane.b32.xlu0 %v973, 24
      %v1067 = vpop.permute.xlu0 %1066
      %1068 = vrot.lane.b32.xlu0 %v974, 24
      %v1069 = vpop.permute.xlu0 %1068
      %1070 = vrot.lane.b32.xlu0 %v975, 24
      %v1071 = vpop.permute.xlu0 %1070
      %vm1104 = vcmask 261312
      %1105 = vst.msk [vmem:[#allocation3] sm:$0xff] %vm1104, %v1009
      %1106 = vst.msk [vmem:[#allocation3 + $0x8] sm:$0xff] %vm1104, %v1011
      %1107 = vst.msk [vmem:[#allocation3 + $0x10] sm:$0xff] %vm1104, %v1013
      %1108 = vst.msk [vmem:[#allocation3 + $0x18] sm:$0xff] %vm1104, %v1015
      %1109 = vst.msk [vmem:[#allocation3 + $0x20] sm:$0xff] %vm1104, %v1017
      %1110 = vst.msk [vmem:[#allocation3 + $0x28] sm:$0xff] %vm1104, %v1019
      %1111 = vst.msk [vmem:[#allocation3 + $0x30] sm:$0xff] %vm1104, %v1021
      %1112 = vst.msk [vmem:[#allocation3 + $0x38] sm:$0xff] %vm1104, %v1023
      %1113 = vst.msk [vmem:[#allocation3 + $0x40] sm:$0xff] %vm1104, %v1025
      %1114 = vst.msk [vmem:[#allocation3 + $0x48] sm:$0xff] %vm1104, %v1027
      %1115 = vst.msk [vmem:[#allocation3 + $0x50] sm:$0xff] %vm1104, %v1029
      %1116 = vst.msk [vmem:[#allocation3 + $0x58] sm:$0xff] %vm1104, %v1031
      %1117 = vst.msk [vmem:[#allocation3 + $0x60] sm:$0xff] %vm1104, %v1033
      %1118 = vst.msk [vmem:[#allocation3 + $0x68] sm:$0xff] %vm1104, %v1035
      %1119 = vst.msk [vmem:[#allocation3 + $0x70] sm:$0xff] %vm1104, %v1037
      %1120 = vst.msk [vmem:[#allocation3 + $0x78] sm:$0xff] %vm1104, %v1039
      %1121 = vst.msk [vmem:[#allocation3 + $0x80] sm:$0xff] %vm1104, %v1041
      %1122 = vst.msk [vmem:[#allocation3 + $0x88] sm:$0xff] %vm1104, %v1043
      %1123 = vst.msk [vmem:[#allocation3 + $0x90] sm:$0xff] %vm1104, %v1045
      %1124 = vst.msk [vmem:[#allocation3 + $0x98] sm:$0xff] %vm1104, %v1047
      %1125 = vst.msk [vmem:[#allocation3 + $0xa0] sm:$0xff] %vm1104, %v1049
      %1126 = vst.msk [vmem:[#allocation3 + $0xa8] sm:$0xff] %vm1104, %v1051
      %1127 = vst.msk [vmem:[#allocation3 + $0xb0] sm:$0xff] %vm1104, %v1053
      %1128 = vst.msk [vmem:[#allocation3 + $0xb8] sm:$0xff] %vm1104, %v1055
      %1129 = vst.msk [vmem:[#allocation3 + $0xc0] sm:$0xff] %vm1104, %v1057
      %1130 = vst.msk [vmem:[#allocation3 + $0xc8] sm:$0xff] %vm1104, %v1059
      %1131 = vst.msk [vmem:[#allocation3 + $0xd0] sm:$0xff] %vm1104, %v1061
      %1132 = vst.msk [vmem:[#allocation3 + $0xd8] sm:$0xff] %vm1104, %v1063
      %1133 = vst.msk [vmem:[#allocation3 + $0xe0] sm:$0xff] %vm1104, %v1065
      %1134 = vst.msk [vmem:[#allocation3 + $0xe8] sm:$0xff] %vm1104, %v1067
      %1135 = vst.msk [vmem:[#allocation3 + $0xf0] sm:$0xff] %vm1104, %v1069
      %1136 = vst.msk [vmem:[#allocation3 + $0xf8] sm:$0xff] %vm1104, %v1071
      %v1137 = vld [vmem:[%s461 + $0x1] sm:$0xff]
      %v1138 = vld [vmem:[%s461 + $0x9] sm:$0xff]
      %v1139 = vld [vmem:[%s461 + $0x19] sm:$0xff]
      %v1140 = vld [vmem:[%s461 + $0x21] sm:$0xff]
      %v1141 = vld [vmem:[%s461 + $0x31] sm:$0xff]
      %v1142 = vld [vmem:[%s461 + $0x39] sm:$0xff]
      %v1143 = vld [vmem:[%s461 + $0x49] sm:$0xff]
      %v1144 = vld [vmem:[%s461 + $0x51] sm:$0xff]
      %v1145 = vld [vmem:[%s461 + $0x61] sm:$0xff]
      %v1146 = vld [vmem:[%s461 + $0x69] sm:$0xff]
      %v1147 = vld [vmem:[%s461 + $0x79] sm:$0xff]
      %v1148 = vld [vmem:[%s461 + $0x81] sm:$0xff]
      %v1149 = vld [vmem:[%s461 + $0x91] sm:$0xff]
      %v1150 = vld [vmem:[%s461 + $0x99] sm:$0xff]
      %v1151 = vld [vmem:[%s461 + $0xa9] sm:$0xff]
      %v1152 = vld [vmem:[%s461 + $0xb1] sm:$0xff]
      %v1153 = vld [vmem:[%s461 + $0xc1] sm:$0xff]
      %v1154 = vld [vmem:[%s461 + $0xc9] sm:$0xff]
      %v1155 = vld [vmem:[%s461 + $0xd9] sm:$0xff]
      %v1156 = vld [vmem:[%s461 + $0xe1] sm:$0xff]
      %v1157 = vld [vmem:[%s461 + $0xf1] sm:$0xff]
      %v1158 = vld [vmem:[%s461 + $0xf9] sm:$0xff]
      %v1159 = vld [vmem:[%s461 + $0x109] sm:$0xff]
      %v1160 = vld [vmem:[%s461 + $0x111] sm:$0xff]
      %v1161 = vld [vmem:[%s461 + $0x121] sm:$0xff]
      %v1162 = vld [vmem:[%s461 + $0x129] sm:$0xff]
      %v1163 = vld [vmem:[%s461 + $0x139] sm:$0xff]
      %v1164 = vld [vmem:[%s461 + $0x141] sm:$0xff]
      %v1165 = vld [vmem:[%s461 + $0x151] sm:$0xff]
      %v1166 = vld [vmem:[%s461 + $0x159] sm:$0xff]
      %v1167 = vld [vmem:[%s461 + $0x169] sm:$0xff]
      %v1168 = vld [vmem:[%s461 + $0x171] sm:$0xff]
      %1201 = vrot.lane.b32.xlu0 %v1137, 32
      %v1202 = vpop.permute.xlu0 %1201
      %1203 = vrot.lane.b32.xlu0 %v1138, 32
      %v1204 = vpop.permute.xlu0 %1203
      %1205 = vrot.lane.b32.xlu0 %v1139, 32
      %v1206 = vpop.permute.xlu0 %1205
      %1207 = vrot.lane.b32.xlu0 %v1140, 32
      %v1208 = vpop.permute.xlu0 %1207
      %1209 = vrot.lane.b32.xlu0 %v1141, 32
      %v1210 = vpop.permute.xlu0 %1209
      %1211 = vrot.lane.b32.xlu0 %v1142, 32
      %v1212 = vpop.permute.xlu0 %1211
      %1213 = vrot.lane.b32.xlu0 %v1143, 32
      %v1214 = vpop.permute.xlu0 %1213
      %1215 = vrot.lane.b32.xlu0 %v1144, 32
      %v1216 = vpop.permute.xlu0 %1215
      %1217 = vrot.lane.b32.xlu0 %v1145, 32
      %v1218 = vpop.permute.xlu0 %1217
      %1219 = vrot.lane.b32.xlu0 %v1146, 32
      %v1220 = vpop.permute.xlu0 %1219
      %1221 = vrot.lane.b32.xlu0 %v1147, 32
      %v1222 = vpop.permute.xlu0 %1221
      %1223 = vrot.lane.b32.xlu0 %v1148, 32
      %v1224 = vpop.permute.xlu0 %1223
      %1225 = vrot.lane.b32.xlu0 %v1149, 32
      %v1226 = vpop.permute.xlu0 %1225
      %1227 = vrot.lane.b32.xlu0 %v1150, 32
      %v1228 = vpop.permute.xlu0 %1227
      %1229 = vrot.lane.b32.xlu0 %v1151, 32
      %v1230 = vpop.permute.xlu0 %1229
      %1231 = vrot.lane.b32.xlu0 %v1152, 32
      %v1232 = vpop.permute.xlu0 %1231
      %1233 = vrot.lane.b32.xlu0 %v1153, 32
      %v1234 = vpop.permute.xlu0 %1233
      %1235 = vrot.lane.b32.xlu0 %v1154, 32
      %v1236 = vpop.permute.xlu0 %1235
      %1237 = vrot.lane.b32.xlu0 %v1155, 32
      %v1238 = vpop.permute.xlu0 %1237
      %1239 = vrot.lane.b32.xlu0 %v1156, 32
      %v1240 = vpop.permute.xlu0 %1239
      %1241 = vrot.lane.b32.xlu0 %v1157, 32
      %v1242 = vpop.permute.xlu0 %1241
      %1243 = vrot.lane.b32.xlu0 %v1158, 32
      %v1244 = vpop.permute.xlu0 %1243
      %1245 = vrot.lane.b32.xlu0 %v1159, 32
      %v1246 = vpop.permute.xlu0 %1245
      %1247 = vrot.lane.b32.xlu0 %v1160, 32
      %v1248 = vpop.permute.xlu0 %1247
      %1249 = vrot.lane.b32.xlu0 %v1161, 32
      %v1250 = vpop.permute.xlu0 %1249
      %1251 = vrot.lane.b32.xlu0 %v1162, 32
      %v1252 = vpop.permute.xlu0 %1251
      %1253 = vrot.lane.b32.xlu0 %v1163, 32
      %v1254 = vpop.permute.xlu0 %1253
      %1255 = vrot.lane.b32.xlu0 %v1164, 32
      %v1256 = vpop.permute.xlu0 %1255
      %1257 = vrot.lane.b32.xlu0 %v1165, 32
      %v1258 = vpop.permute.xlu0 %1257
      %1259 = vrot.lane.b32.xlu0 %v1166, 32
      %v1260 = vpop.permute.xlu0 %1259
      %1261 = vrot.lane.b32.xlu0 %v1167, 32
      %v1262 = vpop.permute.xlu0 %1261
      %1263 = vrot.lane.b32.xlu0 %v1168, 32
      %v1264 = vpop.permute.xlu0 %1263
      %vm1297 = vcmask 326912
      %1298 = vst.msk [vmem:[#allocation3] sm:$0xff] %vm1297, %v1202
      %1299 = vst.msk [vmem:[#allocation3 + $0x8] sm:$0xff] %vm1297, %v1204
      %1300 = vst.msk [vmem:[#allocation3 + $0x10] sm:$0xff] %vm1297, %v1206
      %1301 = vst.msk [vmem:[#allocation3 + $0x18] sm:$0xff] %vm1297, %v1208
      %1302 = vst.msk [vmem:[#allocation3 + $0x20] sm:$0xff] %vm1297, %v1210
      %1303 = vst.msk [vmem:[#allocation3 + $0x28] sm:$0xff] %vm1297, %v1212
      %1304 = vst.msk [vmem:[#allocation3 + $0x30] sm:$0xff] %vm1297, %v1214
      %1305 = vst.msk [vmem:[#allocation3 + $0x38] sm:$0xff] %vm1297, %v1216
      %1306 = vst.msk [vmem:[#allocation3 + $0x40] sm:$0xff] %vm1297, %v1218
      %1307 = vst.msk [vmem:[#allocation3 + $0x48] sm:$0xff] %vm1297, %v1220
      %1308 = vst.msk [vmem:[#allocation3 + $0x50] sm:$0xff] %vm1297, %v1222
      %1309 = vst.msk [vmem:[#allocation3 + $0x58] sm:$0xff] %vm1297, %v1224
      %1310 = vst.msk [vmem:[#allocation3 + $0x60] sm:$0xff] %vm1297, %v1226
      %1311 = vst.msk [vmem:[#allocation3 + $0x68] sm:$0xff] %vm1297, %v1228
      %1312 = vst.msk [vmem:[#allocation3 + $0x70] sm:$0xff] %vm1297, %v1230
      %1313 = vst.msk [vmem:[#allocation3 + $0x78] sm:$0xff] %vm1297, %v1232
      %1314 = vst.msk [vmem:[#allocation3 + $0x80] sm:$0xff] %vm1297, %v1234
      %1315 = vst.msk [vmem:[#allocation3 + $0x88] sm:$0xff] %vm1297, %v1236
      %1316 = vst.msk [vmem:[#allocation3 + $0x90] sm:$0xff] %vm1297, %v1238
      %1317 = vst.msk [vmem:[#allocation3 + $0x98] sm:$0xff] %vm1297, %v1240
      %1318 = vst.msk [vmem:[#allocation3 + $0xa0] sm:$0xff] %vm1297, %v1242
      %1319 = vst.msk [vmem:[#allocation3 + $0xa8] sm:$0xff] %vm1297, %v1244
      %1320 = vst.msk [vmem:[#allocation3 + $0xb0] sm:$0xff] %vm1297, %v1246
      %1321 = vst.msk [vmem:[#allocation3 + $0xb8] sm:$0xff] %vm1297, %v1248
      %1322 = vst.msk [vmem:[#allocation3 + $0xc0] sm:$0xff] %vm1297, %v1250
      %1323 = vst.msk [vmem:[#allocation3 + $0xc8] sm:$0xff] %vm1297, %v1252
      %1324 = vst.msk [vmem:[#allocation3 + $0xd0] sm:$0xff] %vm1297, %v1254
      %1325 = vst.msk [vmem:[#allocation3 + $0xd8] sm:$0xff] %vm1297, %v1256
      %1326 = vst.msk [vmem:[#allocation3 + $0xe0] sm:$0xff] %vm1297, %v1258
      %1327 = vst.msk [vmem:[#allocation3 + $0xe8] sm:$0xff] %vm1297, %v1260
      %1328 = vst.msk [vmem:[#allocation3 + $0xf0] sm:$0xff] %vm1297, %v1262
      %1329 = vst.msk [vmem:[#allocation3 + $0xf8] sm:$0xff] %vm1297, %v1264
      %v1330 = vld [vmem:[%s461 + $0x2] sm:$0xff]
      %v1331 = vld [vmem:[%s461 + $0xa] sm:$0xff]
      %v1332 = vld [vmem:[%s461 + $0x1a] sm:$0xff]
      %v1333 = vld [vmem:[%s461 + $0x22] sm:$0xff]
      %v1334 = vld [vmem:[%s461 + $0x32] sm:$0xff]
      %v1335 = vld [vmem:[%s461 + $0x3a] sm:$0xff]
      %v1336 = vld [vmem:[%s461 + $0x4a] sm:$0xff]
      %v1337 = vld [vmem:[%s461 + $0x52] sm:$0xff]
      %v1338 = vld [vmem:[%s461 + $0x62] sm:$0xff]
      %v1339 = vld [vmem:[%s461 + $0x6a] sm:$0xff]
      %v1340 = vld [vmem:[%s461 + $0x7a] sm:$0xff]
      %v1341 = vld [vmem:[%s461 + $0x82] sm:$0xff]
      %v1342 = vld [vmem:[%s461 + $0x92] sm:$0xff]
      %v1343 = vld [vmem:[%s461 + $0x9a] sm:$0xff]
      %v1344 = vld [vmem:[%s461 + $0xaa] sm:$0xff]
      %v1345 = vld [vmem:[%s461 + $0xb2] sm:$0xff]
      %v1346 = vld [vmem:[%s461 + $0xc2] sm:$0xff]
      %v1347 = vld [vmem:[%s461 + $0xca] sm:$0xff]
      %v1348 = vld [vmem:[%s461 + $0xda] sm:$0xff]
      %v1349 = vld [vmem:[%s461 + $0xe2] sm:$0xff]
      %v1350 = vld [vmem:[%s461 + $0xf2] sm:$0xff]
      %v1351 = vld [vmem:[%s461 + $0xfa] sm:$0xff]
      %v1352 = vld [vmem:[%s461 + $0x10a] sm:$0xff]
      %v1353 = vld [vmem:[%s461 + $0x112] sm:$0xff]
      %v1354 = vld [vmem:[%s461 + $0x122] sm:$0xff]
      %v1355 = vld [vmem:[%s461 + $0x12a] sm:$0xff]
      %v1356 = vld [vmem:[%s461 + $0x13a] sm:$0xff]
      %v1357 = vld [vmem:[%s461 + $0x142] sm:$0xff]
      %v1358 = vld [vmem:[%s461 + $0x152] sm:$0xff]
      %v1359 = vld [vmem:[%s461 + $0x15a] sm:$0xff]
      %v1360 = vld [vmem:[%s461 + $0x16a] sm:$0xff]
      %v1361 = vld [vmem:[%s461 + $0x172] sm:$0xff]
      %1394 = vrot.lane.b32.xlu0 %v1330, 40
      %v1395 = vpop.permute.xlu0 %1394
      %1396 = vrot.lane.b32.xlu0 %v1331, 40
      %v1397 = vpop.permute.xlu0 %1396
      %1398 = vrot.lane.b32.xlu0 %v1332, 40
      %v1399 = vpop.permute.xlu0 %1398
      %1400 = vrot.lane.b32.xlu0 %v1333, 40
      %v1401 = vpop.permute.xlu0 %1400
      %1402 = vrot.lane.b32.xlu0 %v1334, 40
      %v1403 = vpop.permute.xlu0 %1402
      %1404 = vrot.lane.b32.xlu0 %v1335, 40
      %v1405 = vpop.permute.xlu0 %1404
      %1406 = vrot.lane.b32.xlu0 %v1336, 40
      %v1407 = vpop.permute.xlu0 %1406
      %1408 = vrot.lane.b32.xlu0 %v1337, 40
      %v1409 = vpop.permute.xlu0 %1408
      %1410 = vrot.lane.b32.xlu0 %v1338, 40
      %v1411 = vpop.permute.xlu0 %1410
      %1412 = vrot.lane.b32.xlu0 %v1339, 40
      %v1413 = vpop.permute.xlu0 %1412
      %1414 = vrot.lane.b32.xlu0 %v1340, 40
      %v1415 = vpop.permute.xlu0 %1414
      %1416 = vrot.lane.b32.xlu0 %v1341, 40
      %v1417 = vpop.permute.xlu0 %1416
      %1418 = vrot.lane.b32.xlu0 %v1342, 40
      %v1419 = vpop.permute.xlu0 %1418
      %1420 = vrot.lane.b32.xlu0 %v1343, 40
      %v1421 = vpop.permute.xlu0 %1420
      %1422 = vrot.lane.b32.xlu0 %v1344, 40
      %v1423 = vpop.permute.xlu0 %1422
      %1424 = vrot.lane.b32.xlu0 %v1345, 40
      %v1425 = vpop.permute.xlu0 %1424
      %1426 = vrot.lane.b32.xlu0 %v1346, 40
      %v1427 = vpop.permute.xlu0 %1426
      %1428 = vrot.lane.b32.xlu0 %v1347, 40
      %v1429 = vpop.permute.xlu0 %1428
      %1430 = vrot.lane.b32.xlu0 %v1348, 40
      %v1431 = vpop.permute.xlu0 %1430
      %1432 = vrot.lane.b32.xlu0 %v1349, 40
      %v1433 = vpop.permute.xlu0 %1432
      %1434 = vrot.lane.b32.xlu0 %v1350, 40
      %v1435 = vpop.permute.xlu0 %1434
      %1436 = vrot.lane.b32.xlu0 %v1351, 40
      %v1437 = vpop.permute.xlu0 %1436
      %1438 = vrot.lane.b32.xlu0 %v1352, 40
      %v1439 = vpop.permute.xlu0 %1438
      %1440 = vrot.lane.b32.xlu0 %v1353, 40
      %v1441 = vpop.permute.xlu0 %1440
      %1442 = vrot.lane.b32.xlu0 %v1354, 40
      %v1443 = vpop.permute.xlu0 %1442
      %1444 = vrot.lane.b32.xlu0 %v1355, 40
      %v1445 = vpop.permute.xlu0 %1444
      %1446 = vrot.lane.b32.xlu0 %v1356, 40
      %v1447 = vpop.permute.xlu0 %1446
      %1448 = vrot.lane.b32.xlu0 %v1357, 40
      %v1449 = vpop.permute.xlu0 %1448
      %1450 = vrot.lane.b32.xlu0 %v1358, 40
      %v1451 = vpop.permute.xlu0 %1450
      %1452 = vrot.lane.b32.xlu0 %v1359, 40
      %v1453 = vpop.permute.xlu0 %1452
      %1454 = vrot.lane.b32.xlu0 %v1360, 40
      %v1455 = vpop.permute.xlu0 %1454
      %1456 = vrot.lane.b32.xlu0 %v1361, 40
      %v1457 = vpop.permute.xlu0 %1456
      %vm1490 = vcmask 392512
      %1491 = vst.msk [vmem:[#allocation3] sm:$0xff] %vm1490, %v1395
      %1492 = vst.msk [vmem:[#allocation3 + $0x8] sm:$0xff] %vm1490, %v1397
      %1493 = vst.msk [vmem:[#allocation3 + $0x10] sm:$0xff] %vm1490, %v1399
      %1494 = vst.msk [vmem:[#allocation3 + $0x18] sm:$0xff] %vm1490, %v1401
      %1495 = vst.msk [vmem:[#allocation3 + $0x20] sm:$0xff] %vm1490, %v1403
      %1496 = vst.msk [vmem:[#allocation3 + $0x28] sm:$0xff] %vm1490, %v1405
      %1497 = vst.msk [vmem:[#allocation3 + $0x30] sm:$0xff] %vm1490, %v1407
      %1498 = vst.msk [vmem:[#allocation3 + $0x38] sm:$0xff] %vm1490, %v1409
      %1499 = vst.msk [vmem:[#allocation3 + $0x40] sm:$0xff] %vm1490, %v1411
      %1500 = vst.msk [vmem:[#allocation3 + $0x48] sm:$0xff] %vm1490, %v1413
      %1501 = vst.msk [vmem:[#allocation3 + $0x50] sm:$0xff] %vm1490, %v1415
      %1502 = vst.msk [vmem:[#allocation3 + $0x58] sm:$0xff] %vm1490, %v1417
      %1503 = vst.msk [vmem:[#allocation3 + $0x60] sm:$0xff] %vm1490, %v1419
      %1504 = vst.msk [vmem:[#allocation3 + $0x68] sm:$0xff] %vm1490, %v1421
      %1505 = vst.msk [vmem:[#allocation3 + $0x70] sm:$0xff] %vm1490, %v1423
      %1506 = vst.msk [vmem:[#allocation3 + $0x78] sm:$0xff] %vm1490, %v1425
      %1507 = vst.msk [vmem:[#allocation3 + $0x80] sm:$0xff] %vm1490, %v1427
      %1508 = vst.msk [vmem:[#allocation3 + $0x88] sm:$0xff] %vm1490, %v1429
      %1509 = vst.msk [vmem:[#allocation3 + $0x90] sm:$0xff] %vm1490, %v1431
      %1510 = vst.msk [vmem:[#allocation3 + $0x98] sm:$0xff] %vm1490, %v1433
      %1511 = vst.msk [vmem:[#allocation3 + $0xa0] sm:$0xff] %vm1490, %v1435
      %1512 = vst.msk [vmem:[#allocation3 + $0xa8] sm:$0xff] %vm1490, %v1437
      %1513 = vst.msk [vmem:[#allocation3 + $0xb0] sm:$0xff] %vm1490, %v1439
      %1514 = vst.msk [vmem:[#allocation3 + $0xb8] sm:$0xff] %vm1490, %v1441
      %1515 = vst.msk [vmem:[#allocation3 + $0xc0] sm:$0xff] %vm1490, %v1443
      %1516 = vst.msk [vmem:[#allocation3 + $0xc8] sm:$0xff] %vm1490, %v1445
      %1517 = vst.msk [vmem:[#allocation3 + $0xd0] sm:$0xff] %vm1490, %v1447
      %1518 = vst.msk [vmem:[#allocation3 + $0xd8] sm:$0xff] %vm1490, %v1449
      %1519 = vst.msk [vmem:[#allocation3 + $0xe0] sm:$0xff] %vm1490, %v1451
      %1520 = vst.msk [vmem:[#allocation3 + $0xe8] sm:$0xff] %vm1490, %v1453
      %1521 = vst.msk [vmem:[#allocation3 + $0xf0] sm:$0xff] %vm1490, %v1455
      %1522 = vst.msk [vmem:[#allocation3 + $0xf8] sm:$0xff] %vm1490, %v1457
      %s1523 = scalar_lea.vmem [#allocation2], 48
      %v1524 = vld [vmem:[%s1523] sm:$0xff]
      %v1525 = vld [vmem:[%s1523 + $0x8] sm:$0xff]
      %v1526 = vld [vmem:[%s1523 + $0x18] sm:$0xff]
      %v1527 = vld [vmem:[%s1523 + $0x20] sm:$0xff]
      %v1528 = vld [vmem:[%s1523 + $0x30] sm:$0xff]
      %v1529 = vld [vmem:[%s1523 + $0x38] sm:$0xff]
      %v1530 = vld [vmem:[%s1523 + $0x48] sm:$0xff]
      %v1531 = vld [vmem:[%s1523 + $0x50] sm:$0xff]
      %v1532 = vld [vmem:[%s1523 + $0x60] sm:$0xff]
      %v1533 = vld [vmem:[%s1523 + $0x68] sm:$0xff]
      %v1534 = vld [vmem:[%s1523 + $0x78] sm:$0xff]
      %v1535 = vld [vmem:[%s1523 + $0x80] sm:$0xff]
      %v1536 = vld [vmem:[%s1523 + $0x90] sm:$0xff]
      %v1537 = vld [vmem:[%s1523 + $0x98] sm:$0xff]
      %v1538 = vld [vmem:[%s1523 + $0xa8] sm:$0xff]
      %v1539 = vld [vmem:[%s1523 + $0xb0] sm:$0xff]
      %v1540 = vld [vmem:[%s1523 + $0xc0] sm:$0xff]
      %v1541 = vld [vmem:[%s1523 + $0xc8] sm:$0xff]
      %v1542 = vld [vmem:[%s1523 + $0xd8] sm:$0xff]
      %v1543 = vld [vmem:[%s1523 + $0xe0] sm:$0xff]
      %v1544 = vld [vmem:[%s1523 + $0xf0] sm:$0xff]
      %v1545 = vld [vmem:[%s1523 + $0xf8] sm:$0xff]
      %v1546 = vld [vmem:[%s1523 + $0x108] sm:$0xff]
      %v1547 = vld [vmem:[%s1523 + $0x110] sm:$0xff]
      %v1548 = vld [vmem:[%s1523 + $0x120] sm:$0xff]
      %v1549 = vld [vmem:[%s1523 + $0x128] sm:$0xff]
      %v1550 = vld [vmem:[%s1523 + $0x138] sm:$0xff]
      %v1551 = vld [vmem:[%s1523 + $0x140] sm:$0xff]
      %v1552 = vld [vmem:[%s1523 + $0x150] sm:$0xff]
      %v1553 = vld [vmem:[%s1523 + $0x158] sm:$0xff]
      %v1554 = vld [vmem:[%s1523 + $0x168] sm:$0xff]
      %v1555 = vld [vmem:[%s1523 + $0x170] sm:$0xff]
      %1588 = vrot.lane.b32.xlu0 %v1524, 48
      %v1589 = vpop.permute.xlu0 %1588
      %1590 = vrot.lane.b32.xlu0 %v1525, 48
      %v1591 = vpop.permute.xlu0 %1590
      %1592 = vrot.lane.b32.xlu0 %v1526, 48
      %v1593 = vpop.permute.xlu0 %1592
      %1594 = vrot.lane.b32.xlu0 %v1527, 48
      %v1595 = vpop.permute.xlu0 %1594
      %1596 = vrot.lane.b32.xlu0 %v1528, 48
      %v1597 = vpop.permute.xlu0 %1596
      %1598 = vrot.lane.b32.xlu0 %v1529, 48
      %v1599 = vpop.permute.xlu0 %1598
      %1600 = vrot.lane.b32.xlu0 %v1530, 48
      %v1601 = vpop.permute.xlu0 %1600
      %1602 = vrot.lane.b32.xlu0 %v1531, 48
      %v1603 = vpop.permute.xlu0 %1602
      %1604 = vrot.lane.b32.xlu0 %v1532, 48
      %v1605 = vpop.permute.xlu0 %1604
      %1606 = vrot.lane.b32.xlu0 %v1533, 48
      %v1607 = vpop.permute.xlu0 %1606
      %1608 = vrot.lane.b32.xlu0 %v1534, 48
      %v1609 = vpop.permute.xlu0 %1608
      %1610 = vrot.lane.b32.xlu0 %v1535, 48
      %v1611 = vpop.permute.xlu0 %1610
      %1612 = vrot.lane.b32.xlu0 %v1536, 48
      %v1613 = vpop.permute.xlu0 %1612
      %1614 = vrot.lane.b32.xlu0 %v1537, 48
      %v1615 = vpop.permute.xlu0 %1614
      %1616 = vrot.lane.b32.xlu0 %v1538, 48
      %v1617 = vpop.permute.xlu0 %1616
      %1618 = vrot.lane.b32.xlu0 %v1539, 48
      %v1619 = vpop.permute.xlu0 %1618
      %1620 = vrot.lane.b32.xlu0 %v1540, 48
      %v1621 = vpop.permute.xlu0 %1620
      %1622 = vrot.lane.b32.xlu0 %v1541, 48
      %v1623 = vpop.permute.xlu0 %1622
      %1624 = vrot.lane.b32.xlu0 %v1542, 48
      %v1625 = vpop.permute.xlu0 %1624
      %1626 = vrot.lane.b32.xlu0 %v1543, 48
      %v1627 = vpop.permute.xlu0 %1626
      %1628 = vrot.lane.b32.xlu0 %v1544, 48
      %v1629 = vpop.permute.xlu0 %1628
      %1630 = vrot.lane.b32.xlu0 %v1545, 48
      %v1631 = vpop.permute.xlu0 %1630
      %1632 = vrot.lane.b32.xlu0 %v1546, 48
      %v1633 = vpop.permute.xlu0 %1632
      %1634 = vrot.lane.b32.xlu0 %v1547, 48
      %v1635 = vpop.permute.xlu0 %1634
      %1636 = vrot.lane.b32.xlu0 %v1548, 48
      %v1637 = vpop.permute.xlu0 %1636
      %1638 = vrot.lane.b32.xlu0 %v1549, 48
      %v1639 = vpop.permute.xlu0 %1638
      %1640 = vrot.lane.b32.xlu0 %v1550, 48
      %v1641 = vpop.permute.xlu0 %1640
      %1642 = vrot.lane.b32.xlu0 %v1551, 48
      %v1643 = vpop.permute.xlu0 %1642
      %1644 = vrot.lane.b32.xlu0 %v1552, 48
      %v1645 = vpop.permute.xlu0 %1644
      %1646 = vrot.lane.b32.xlu0 %v1553, 48
      %v1647 = vpop.permute.xlu0 %1646
      %1648 = vrot.lane.b32.xlu0 %v1554, 48
      %v1649 = vpop.permute.xlu0 %1648
      %1650 = vrot.lane.b32.xlu0 %v1555, 48
      %v1651 = vpop.permute.xlu0 %1650
      %vm1684 = vcmask 458112
      %1685 = vst.msk [vmem:[#allocation3] sm:$0xff] %vm1684, %v1589
      %1686 = vst.msk [vmem:[#allocation3 + $0x8] sm:$0xff] %vm1684, %v1591
      %1687 = vst.msk [vmem:[#allocation3 + $0x10] sm:$0xff] %vm1684, %v1593
      %1688 = vst.msk [vmem:[#allocation3 + $0x18] sm:$0xff] %vm1684, %v1595
      %1689 = vst.msk [vmem:[#allocation3 + $0x20] sm:$0xff] %vm1684, %v1597
      %1690 = vst.msk [vmem:[#allocation3 + $0x28] sm:$0xff] %vm1684, %v1599
      %1691 = vst.msk [vmem:[#allocation3 + $0x30] sm:$0xff] %vm1684, %v1601
      %1692 = vst.msk [vmem:[#allocation3 + $0x38] sm:$0xff] %vm1684, %v1603
      %1693 = vst.msk [vmem:[#allocation3 + $0x40] sm:$0xff] %vm1684, %v1605
      %1694 = vst.msk [vmem:[#allocation3 + $0x48] sm:$0xff] %vm1684, %v1607
      %1695 = vst.msk [vmem:[#allocation3 + $0x50] sm:$0xff] %vm1684, %v1609
      %1696 = vst.msk [vmem:[#allocation3 + $0x58] sm:$0xff] %vm1684, %v1611
      %1697 = vst.msk [vmem:[#allocation3 + $0x60] sm:$0xff] %vm1684, %v1613
      %1698 = vst.msk [vmem:[#allocation3 + $0x68] sm:$0xff] %vm1684, %v1615
      %1699 = vst.msk [vmem:[#allocation3 + $0x70] sm:$0xff] %vm1684, %v1617
      %1700 = vst.msk [vmem:[#allocation3 + $0x78] sm:$0xff] %vm1684, %v1619
      %1701 = vst.msk [vmem:[#allocation3 + $0x80] sm:$0xff] %vm1684, %v1621
      %1702 = vst.msk [vmem:[#allocation3 + $0x88] sm:$0xff] %vm1684, %v1623
      %1703 = vst.msk [vmem:[#allocation3 + $0x90] sm:$0xff] %vm1684, %v1625
      %1704 = vst.msk [vmem:[#allocation3 + $0x98] sm:$0xff] %vm1684, %v1627
      %1705 = vst.msk [vmem:[#allocation3 + $0xa0] sm:$0xff] %vm1684, %v1629
      %1706 = vst.msk [vmem:[#allocation3 + $0xa8] sm:$0xff] %vm1684, %v1631
      %1707 = vst.msk [vmem:[#allocation3 + $0xb0] sm:$0xff] %vm1684, %v1633
      %1708 = vst.msk [vmem:[#allocation3 + $0xb8] sm:$0xff] %vm1684, %v1635
      %1709 = vst.msk [vmem:[#allocation3 + $0xc0] sm:$0xff] %vm1684, %v1637
      %1710 = vst.msk [vmem:[#allocation3 + $0xc8] sm:$0xff] %vm1684, %v1639
      %1711 = vst.msk [vmem:[#allocation3 + $0xd0] sm:$0xff] %vm1684, %v1641
      %1712 = vst.msk [vmem:[#allocation3 + $0xd8] sm:$0xff] %vm1684, %v1643
      %1713 = vst.msk [vmem:[#allocation3 + $0xe0] sm:$0xff] %vm1684, %v1645
      %1714 = vst.msk [vmem:[#allocation3 + $0xe8] sm:$0xff] %vm1684, %v1647
      %1715 = vst.msk [vmem:[#allocation3 + $0xf0] sm:$0xff] %vm1684, %v1649
      %1716 = vst.msk [vmem:[#allocation3 + $0xf8] sm:$0xff] %vm1684, %v1651
      %v1717 = vld [vmem:[%s1523 + $0x1] sm:$0xff]
      %v1718 = vld [vmem:[%s1523 + $0x9] sm:$0xff]
      %v1719 = vld [vmem:[%s1523 + $0x19] sm:$0xff]
      %v1720 = vld [vmem:[%s1523 + $0x21] sm:$0xff]
      %v1721 = vld [vmem:[%s1523 + $0x31] sm:$0xff]
      %v1722 = vld [vmem:[%s1523 + $0x39] sm:$0xff]
      %v1723 = vld [vmem:[%s1523 + $0x49] sm:$0xff]
      %v1724 = vld [vmem:[%s1523 + $0x51] sm:$0xff]
      %v1725 = vld [vmem:[%s1523 + $0x61] sm:$0xff]
      %v1726 = vld [vmem:[%s1523 + $0x69] sm:$0xff]
      %v1727 = vld [vmem:[%s1523 + $0x79] sm:$0xff]
      %v1728 = vld [vmem:[%s1523 + $0x81] sm:$0xff]
      %v1729 = vld [vmem:[%s1523 + $0x91] sm:$0xff]
      %v1730 = vld [vmem:[%s1523 + $0x99] sm:$0xff]
      %v1731 = vld [vmem:[%s1523 + $0xa9] sm:$0xff]
      %v1732 = vld [vmem:[%s1523 + $0xb1] sm:$0xff]
      %v1733 = vld [vmem:[%s1523 + $0xc1] sm:$0xff]
      %v1734 = vld [vmem:[%s1523 + $0xc9] sm:$0xff]
      %v1735 = vld [vmem:[%s1523 + $0xd9] sm:$0xff]
      %v1736 = vld [vmem:[%s1523 + $0xe1] sm:$0xff]
      %v1737 = vld [vmem:[%s1523 + $0xf1] sm:$0xff]
      %v1738 = vld [vmem:[%s1523 + $0xf9] sm:$0xff]
      %v1739 = vld [vmem:[%s1523 + $0x109] sm:$0xff]
      %v1740 = vld [vmem:[%s1523 + $0x111] sm:$0xff]
      %v1741 = vld [vmem:[%s1523 + $0x121] sm:$0xff]
      %v1742 = vld [vmem:[%s1523 + $0x129] sm:$0xff]
      %v1743 = vld [vmem:[%s1523 + $0x139] sm:$0xff]
      %v1744 = vld [vmem:[%s1523 + $0x141] sm:$0xff]
      %v1745 = vld [vmem:[%s1523 + $0x151] sm:$0xff]
      %v1746 = vld [vmem:[%s1523 + $0x159] sm:$0xff]
      %v1747 = vld [vmem:[%s1523 + $0x169] sm:$0xff]
      %v1748 = vld [vmem:[%s1523 + $0x171] sm:$0xff]
      %1781 = vrot.lane.b32.xlu0 %v1717, 56
      %v1782 = vpop.permute.xlu0 %1781
      %1783 = vrot.lane.b32.xlu0 %v1718, 56
      %v1784 = vpop.permute.xlu0 %1783
      %1785 = vrot.lane.b32.xlu0 %v1719, 56
      %v1786 = vpop.permute.xlu0 %1785
      %1787 = vrot.lane.b32.xlu0 %v1720, 56
      %v1788 = vpop.permute.xlu0 %1787
      %1789 = vrot.lane.b32.xlu0 %v1721, 56
      %v1790 = vpop.permute.xlu0 %1789
      %1791 = vrot.lane.b32.xlu0 %v1722, 56
      %v1792 = vpop.permute.xlu0 %1791
      %1793 = vrot.lane.b32.xlu0 %v1723, 56
      %v1794 = vpop.permute.xlu0 %1793
      %1795 = vrot.lane.b32.xlu0 %v1724, 56
      %v1796 = vpop.permute.xlu0 %1795
      %1797 = vrot.lane.b32.xlu0 %v1725, 56
      %v1798 = vpop.permute.xlu0 %1797
      %1799 = vrot.lane.b32.xlu0 %v1726, 56
      %v1800 = vpop.permute.xlu0 %1799
      %1801 = vrot.lane.b32.xlu0 %v1727, 56
      %v1802 = vpop.permute.xlu0 %1801
      %1803 = vrot.lane.b32.xlu0 %v1728, 56
      %v1804 = vpop.permute.xlu0 %1803
      %1805 = vrot.lane.b32.xlu0 %v1729, 56
      %v1806 = vpop.permute.xlu0 %1805
      %1807 = vrot.lane.b32.xlu0 %v1730, 56
      %v1808 = vpop.permute.xlu0 %1807
      %1809 = vrot.lane.b32.xlu0 %v1731, 56
      %v1810 = vpop.permute.xlu0 %1809
      %1811 = vrot.lane.b32.xlu0 %v1732, 56
      %v1812 = vpop.permute.xlu0 %1811
      %1813 = vrot.lane.b32.xlu0 %v1733, 56
      %v1814 = vpop.permute.xlu0 %1813
      %1815 = vrot.lane.b32.xlu0 %v1734, 56
      %v1816 = vpop.permute.xlu0 %1815
      %1817 = vrot.lane.b32.xlu0 %v1735, 56
      %v1818 = vpop.permute.xlu0 %1817
      %1819 = vrot.lane.b32.xlu0 %v1736, 56
      %v1820 = vpop.permute.xlu0 %1819
      %1821 = vrot.lane.b32.xlu0 %v1737, 56
      %v1822 = vpop.permute.xlu0 %1821
      %1823 = vrot.lane.b32.xlu0 %v1738, 56
      %v1824 = vpop.permute.xlu0 %1823
      %1825 = vrot.lane.b32.xlu0 %v1739, 56
      %v1826 = vpop.permute.xlu0 %1825
      %1827 = vrot.lane.b32.xlu0 %v1740, 56
      %v1828 = vpop.permute.xlu0 %1827
      %1829 = vrot.lane.b32.xlu0 %v1741, 56
      %v1830 = vpop.permute.xlu0 %1829
      %1831 = vrot.lane.b32.xlu0 %v1742, 56
      %v1832 = vpop.permute.xlu0 %1831
      %1833 = vrot.lane.b32.xlu0 %v1743, 56
      %v1834 = vpop.permute.xlu0 %1833
      %1835 = vrot.lane.b32.xlu0 %v1744, 56
      %v1836 = vpop.permute.xlu0 %1835
      %1837 = vrot.lane.b32.xlu0 %v1745, 56
      %v1838 = vpop.permute.xlu0 %1837
      %1839 = vrot.lane.b32.xlu0 %v1746, 56
      %v1840 = vpop.permute.xlu0 %1839
      %1841 = vrot.lane.b32.xlu0 %v1747, 56
      %v1842 = vpop.permute.xlu0 %1841
      %1843 = vrot.lane.b32.xlu0 %v1748, 56
      %v1844 = vpop.permute.xlu0 %1843
      %vm1877 = vcmask 523712
      %1878 = vst.msk [vmem:[#allocation3] sm:$0xff] %vm1877, %v1782
      %1879 = vst.msk [vmem:[#allocation3 + $0x8] sm:$0xff] %vm1877, %v1784
      %1880 = vst.msk [vmem:[#allocation3 + $0x10] sm:$0xff] %vm1877, %v1786
      %1881 = vst.msk [vmem:[#allocation3 + $0x18] sm:$0xff] %vm1877, %v1788
      %1882 = vst.msk [vmem:[#allocation3 + $0x20] sm:$0xff] %vm1877, %v1790
      %1883 = vst.msk [vmem:[#allocation3 + $0x28] sm:$0xff] %vm1877, %v1792
      %1884 = vst.msk [vmem:[#allocation3 + $0x30] sm:$0xff] %vm1877, %v1794
      %1885 = vst.msk [vmem:[#allocation3 + $0x38] sm:$0xff] %vm1877, %v1796
      %1886 = vst.msk [vmem:[#allocation3 + $0x40] sm:$0xff] %vm1877, %v1798
      %1887 = vst.msk [vmem:[#allocation3 + $0x48] sm:$0xff] %vm1877, %v1800
      %1888 = vst.msk [vmem:[#allocation3 + $0x50] sm:$0xff] %vm1877, %v1802
      %1889 = vst.msk [vmem:[#allocation3 + $0x58] sm:$0xff] %vm1877, %v1804
      %1890 = vst.msk [vmem:[#allocation3 + $0x60] sm:$0xff] %vm1877, %v1806
      %1891 = vst.msk [vmem:[#allocation3 + $0x68] sm:$0xff] %vm1877, %v1808
      %1892 = vst.msk [vmem:[#allocation3 + $0x70] sm:$0xff] %vm1877, %v1810
      %1893 = vst.msk [vmem:[#allocation3 + $0x78] sm:$0xff] %vm1877, %v1812
      %1894 = vst.msk [vmem:[#allocation3 + $0x80] sm:$0xff] %vm1877, %v1814
      %1895 = vst.msk [vmem:[#allocation3 + $0x88] sm:$0xff] %vm1877, %v1816
      %1896 = vst.msk [vmem:[#allocation3 + $0x90] sm:$0xff] %vm1877, %v1818
      %1897 = vst.msk [vmem:[#allocation3 + $0x98] sm:$0xff] %vm1877, %v1820
      %1898 = vst.msk [vmem:[#allocation3 + $0xa0] sm:$0xff] %vm1877, %v1822
      %1899 = vst.msk [vmem:[#allocation3 + $0xa8] sm:$0xff] %vm1877, %v1824
      %1900 = vst.msk [vmem:[#allocation3 + $0xb0] sm:$0xff] %vm1877, %v1826
      %1901 = vst.msk [vmem:[#allocation3 + $0xb8] sm:$0xff] %vm1877, %v1828
      %1902 = vst.msk [vmem:[#allocation3 + $0xc0] sm:$0xff] %vm1877, %v1830
      %1903 = vst.msk [vmem:[#allocation3 + $0xc8] sm:$0xff] %vm1877, %v1832
      %1904 = vst.msk [vmem:[#allocation3 + $0xd0] sm:$0xff] %vm1877, %v1834
      %1905 = vst.msk [vmem:[#allocation3 + $0xd8] sm:$0xff] %vm1877, %v1836
      %1906 = vst.msk [vmem:[#allocation3 + $0xe0] sm:$0xff] %vm1877, %v1838
      %1907 = vst.msk [vmem:[#allocation3 + $0xe8] sm:$0xff] %vm1877, %v1840
      %1908 = vst.msk [vmem:[#allocation3 + $0xf0] sm:$0xff] %vm1877, %v1842
      %1909 = vst.msk [vmem:[#allocation3 + $0xf8] sm:$0xff] %vm1877, %v1844
      %v1910 = vld [vmem:[%s1523 + $0x2] sm:$0xff]
      %v1911 = vld [vmem:[%s1523 + $0xa] sm:$0xff]
      %v1912 = vld [vmem:[%s1523 + $0x1a] sm:$0xff]
      %v1913 = vld [vmem:[%s1523 + $0x22] sm:$0xff]
      %v1914 = vld [vmem:[%s1523 + $0x32] sm:$0xff]
      %v1915 = vld [vmem:[%s1523 + $0x3a] sm:$0xff]
      %v1916 = vld [vmem:[%s1523 + $0x4a] sm:$0xff]
      %v1917 = vld [vmem:[%s1523 + $0x52] sm:$0xff]
      %v1918 = vld [vmem:[%s1523 + $0x62] sm:$0xff]
      %v1919 = vld [vmem:[%s1523 + $0x6a] sm:$0xff]
      %v1920 = vld [vmem:[%s1523 + $0x7a] sm:$0xff]
      %v1921 = vld [vmem:[%s1523 + $0x82] sm:$0xff]
      %v1922 = vld [vmem:[%s1523 + $0x92] sm:$0xff]
      %v1923 = vld [vmem:[%s1523 + $0x9a] sm:$0xff]
      %v1924 = vld [vmem:[%s1523 + $0xaa] sm:$0xff]
      %v1925 = vld [vmem:[%s1523 + $0xb2] sm:$0xff]
      %v1926 = vld [vmem:[%s1523 + $0xc2] sm:$0xff]
      %v1927 = vld [vmem:[%s1523 + $0xca] sm:$0xff]
      %v1928 = vld [vmem:[%s1523 + $0xda] sm:$0xff]
      %v1929 = vld [vmem:[%s1523 + $0xe2] sm:$0xff]
      %v1930 = vld [vmem:[%s1523 + $0xf2] sm:$0xff]
      %v1931 = vld [vmem:[%s1523 + $0xfa] sm:$0xff]
      %v1932 = vld [vmem:[%s1523 + $0x10a] sm:$0xff]
      %v1933 = vld [vmem:[%s1523 + $0x112] sm:$0xff]
      %v1934 = vld [vmem:[%s1523 + $0x122] sm:$0xff]
      %v1935 = vld [vmem:[%s1523 + $0x12a] sm:$0xff]
      %v1936 = vld [vmem:[%s1523 + $0x13a] sm:$0xff]
      %v1937 = vld [vmem:[%s1523 + $0x142] sm:$0xff]
      %v1938 = vld [vmem:[%s1523 + $0x152] sm:$0xff]
      %v1939 = vld [vmem:[%s1523 + $0x15a] sm:$0xff]
      %v1940 = vld [vmem:[%s1523 + $0x16a] sm:$0xff]
      %v1941 = vld [vmem:[%s1523 + $0x172] sm:$0xff]
      %1974 = vrot.lane.b32.xlu0 %v1910, 64
      %v1975 = vpop.permute.xlu0 %1974
      %1976 = vrot.lane.b32.xlu0 %v1911, 64
      %v1977 = vpop.permute.xlu0 %1976
      %1978 = vrot.lane.b32.xlu0 %v1912, 64
      %v1979 = vpop.permute.xlu0 %1978
      %1980 = vrot.lane.b32.xlu0 %v1913, 64
      %v1981 = vpop.permute.xlu0 %1980
      %1982 = vrot.lane.b32.xlu0 %v1914, 64
      %v1983 = vpop.permute.xlu0 %1982
      %1984 = vrot.lane.b32.xlu0 %v1915, 64
      %v1985 = vpop.permute.xlu0 %1984
      %1986 = vrot.lane.b32.xlu0 %v1916, 64
      %v1987 = vpop.permute.xlu0 %1986
      %1988 = vrot.lane.b32.xlu0 %v1917, 64
      %v1989 = vpop.permute.xlu0 %1988
      %1990 = vrot.lane.b32.xlu0 %v1918, 64
      %v1991 = vpop.permute.xlu0 %1990
      %1992 = vrot.lane.b32.xlu0 %v1919, 64
      %v1993 = vpop.permute.xlu0 %1992
      %1994 = vrot.lane.b32.xlu0 %v1920, 64
      %v1995 = vpop.permute.xlu0 %1994
      %1996 = vrot.lane.b32.xlu0 %v1921, 64
      %v1997 = vpop.permute.xlu0 %1996
      %1998 = vrot.lane.b32.xlu0 %v1922, 64
      %v1999 = vpop.permute.xlu0 %1998
      %2000 = vrot.lane.b32.xlu0 %v1923, 64
      %v2001 = vpop.permute.xlu0 %2000
      %2002 = vrot.lane.b32.xlu0 %v1924, 64
      %v2003 = vpop.permute.xlu0 %2002
      %2004 = vrot.lane.b32.xlu0 %v1925, 64
      %v2005 = vpop.permute.xlu0 %2004
      %2006 = vrot.lane.b32.xlu0 %v1926, 64
      %v2007 = vpop.permute.xlu0 %2006
      %2008 = vrot.lane.b32.xlu0 %v1927, 64
      %v2009 = vpop.permute.xlu0 %2008
      %2010 = vrot.lane.b32.xlu0 %v1928, 64
      %v2011 = vpop.permute.xlu0 %2010
      %2012 = vrot.lane.b32.xlu0 %v1929, 64
      %v2013 = vpop.permute.xlu0 %2012
      %2014 = vrot.lane.b32.xlu0 %v1930, 64
      %v2015 = vpop.permute.xlu0 %2014
      %2016 = vrot.lane.b32.xlu0 %v1931, 64
      %v2017 = vpop.permute.xlu0 %2016
      %2018 = vrot.lane.b32.xlu0 %v1932, 64
      %v2019 = vpop.permute.xlu0 %2018
      %2020 = vrot.lane.b32.xlu0 %v1933, 64
      %v2021 = vpop.permute.xlu0 %2020
      %2022 = vrot.lane.b32.xlu0 %v1934, 64
      %v2023 = vpop.permute.xlu0 %2022
      %2024 = vrot.lane.b32.xlu0 %v1935, 64
      %v2025 = vpop.permute.xlu0 %2024
      %2026 = vrot.lane.b32.xlu0 %v1936, 64
      %v2027 = vpop.permute.xlu0 %2026
      %2028 = vrot.lane.b32.xlu0 %v1937, 64
      %v2029 = vpop.permute.xlu0 %2028
      %2030 = vrot.lane.b32.xlu0 %v1938, 64
      %v2031 = vpop.permute.xlu0 %2030
      %2032 = vrot.lane.b32.xlu0 %v1939, 64
      %v2033 = vpop.permute.xlu0 %2032
      %2034 = vrot.lane.b32.xlu0 %v1940, 64
      %v2035 = vpop.permute.xlu0 %2034
      %2036 = vrot.lane.b32.xlu0 %v1941, 64
      %v2037 = vpop.permute.xlu0 %2036
      %vm2070 = vcmask 589312
      %2071 = vst.msk [vmem:[#allocation3] sm:$0xff] %vm2070, %v1975
      %2072 = vst.msk [vmem:[#allocation3 + $0x8] sm:$0xff] %vm2070, %v1977
      %2073 = vst.msk [vmem:[#allocation3 + $0x10] sm:$0xff] %vm2070, %v1979
      %2074 = vst.msk [vmem:[#allocation3 + $0x18] sm:$0xff] %vm2070, %v1981
      %2075 = vst.msk [vmem:[#allocation3 + $0x20] sm:$0xff] %vm2070, %v1983
      %2076 = vst.msk [vmem:[#allocation3 + $0x28] sm:$0xff] %vm2070, %v1985
      %2077 = vst.msk [vmem:[#allocation3 + $0x30] sm:$0xff] %vm2070, %v1987
      %2078 = vst.msk [vmem:[#allocation3 + $0x38] sm:$0xff] %vm2070, %v1989
      %2079 = vst.msk [vmem:[#allocation3 + $0x40] sm:$0xff] %vm2070, %v1991
      %2080 = vst.msk [vmem:[#allocation3 + $0x48] sm:$0xff] %vm2070, %v1993
      %2081 = vst.msk [vmem:[#allocation3 + $0x50] sm:$0xff] %vm2070, %v1995
      %2082 = vst.msk [vmem:[#allocation3 + $0x58] sm:$0xff] %vm2070, %v1997
      %2083 = vst.msk [vmem:[#allocation3 + $0x60] sm:$0xff] %vm2070, %v1999
      %2084 = vst.msk [vmem:[#allocation3 + $0x68] sm:$0xff] %vm2070, %v2001
      %2085 = vst.msk [vmem:[#allocation3 + $0x70] sm:$0xff] %vm2070, %v2003
      %2086 = vst.msk [vmem:[#allocation3 + $0x78] sm:$0xff] %vm2070, %v2005
      %2087 = vst.msk [vmem:[#allocation3 + $0x80] sm:$0xff] %vm2070, %v2007
      %2088 = vst.msk [vmem:[#allocation3 + $0x88] sm:$0xff] %vm2070, %v2009
      %2089 = vst.msk [vmem:[#allocation3 + $0x90] sm:$0xff] %vm2070, %v2011
      %2090 = vst.msk [vmem:[#allocation3 + $0x98] sm:$0xff] %vm2070, %v2013
      %2091 = vst.msk [vmem:[#allocation3 + $0xa0] sm:$0xff] %vm2070, %v2015
      %2092 = vst.msk [vmem:[#allocation3 + $0xa8] sm:$0xff] %vm2070, %v2017
      %2093 = vst.msk [vmem:[#allocation3 + $0xb0] sm:$0xff] %vm2070, %v2019
      %2094 = vst.msk [vmem:[#allocation3 + $0xb8] sm:$0xff] %vm2070, %v2021
      %2095 = vst.msk [vmem:[#allocation3 + $0xc0] sm:$0xff] %vm2070, %v2023
      %2096 = vst.msk [vmem:[#allocation3 + $0xc8] sm:$0xff] %vm2070, %v2025
      %2097 = vst.msk [vmem:[#allocation3 + $0xd0] sm:$0xff] %vm2070, %v2027
      %2098 = vst.msk [vmem:[#allocation3 + $0xd8] sm:$0xff] %vm2070, %v2029
      %2099 = vst.msk [vmem:[#allocation3 + $0xe0] sm:$0xff] %vm2070, %v2031
      %2100 = vst.msk [vmem:[#allocation3 + $0xe8] sm:$0xff] %vm2070, %v2033
      %2101 = vst.msk [vmem:[#allocation3 + $0xf0] sm:$0xff] %vm2070, %v2035
      %2102 = vst.msk [vmem:[#allocation3 + $0xf8] sm:$0xff] %vm2070, %v2037
      %v2103 = vld [vmem:[#allocation3] sm:$0xff]
      %v2104 = vld [vmem:[#allocation3 + $0x8] sm:$0xff]
      %v2105 = vld [vmem:[#allocation3 + $0x10] sm:$0xff]
      %v2106 = vld [vmem:[#allocation3 + $0x18] sm:$0xff]
      %v2107 = vld [vmem:[#allocation3 + $0x20] sm:$0xff]
      %v2108 = vld [vmem:[#allocation3 + $0x28] sm:$0xff]
      %v2109 = vld [vmem:[#allocation3 + $0x30] sm:$0xff]
      %v2110 = vld [vmem:[#allocation3 + $0x38] sm:$0xff]
      %v2111 = vld [vmem:[#allocation3 + $0x40] sm:$0xff]
      %v2112 = vld [vmem:[#allocation3 + $0x48] sm:$0xff]
      %v2113 = vld [vmem:[#allocation3 + $0x50] sm:$0xff]
      %v2114 = vld [vmem:[#allocation3 + $0x58] sm:$0xff]
      %v2115 = vld [vmem:[#allocation3 + $0x60] sm:$0xff]
      %v2116 = vld [vmem:[#allocation3 + $0x68] sm:$0xff]
      %v2117 = vld [vmem:[#allocation3 + $0x70] sm:$0xff]
      %v2118 = vld [vmem:[#allocation3 + $0x78] sm:$0xff]
      %v2119 = vld [vmem:[#allocation3 + $0x80] sm:$0xff]
      %v2120 = vld [vmem:[#allocation3 + $0x88] sm:$0xff]
      %v2121 = vld [vmem:[#allocation3 + $0x90] sm:$0xff]
      %v2122 = vld [vmem:[#allocation3 + $0x98] sm:$0xff]
      %v2123 = vld [vmem:[#allocation3 + $0xa0] sm:$0xff]
      %v2124 = vld [vmem:[#allocation3 + $0xa8] sm:$0xff]
      %v2125 = vld [vmem:[#allocation3 + $0xb0] sm:$0xff]
      %v2126 = vld [vmem:[#allocation3 + $0xb8] sm:$0xff]
      %v2127 = vld [vmem:[#allocation3 + $0xc0] sm:$0xff]
      %v2128 = vld [vmem:[#allocation3 + $0xc8] sm:$0xff]
      %v2129 = vld [vmem:[#allocation3 + $0xd0] sm:$0xff]
      %v2130 = vld [vmem:[#allocation3 + $0xd8] sm:$0xff]
      %v2131 = vld [vmem:[#allocation3 + $0xe0] sm:$0xff]
      %v2132 = vld [vmem:[#allocation3 + $0xe8] sm:$0xff]
      %v2133 = vld [vmem:[#allocation3 + $0xf0] sm:$0xff]
      %v2134 = vld [vmem:[#allocation3 + $0xf8] sm:$0xff]
      %v2135 = vld [vmem:[%s1] sm:$0xff]
      %v2136 = vld [vmem:[%s1 + $0x8] sm:$0xff]
      %v2137 = vld [vmem:[%s1 + $0x10] sm:$0xff]
      %v2138 = vld [vmem:[%s1 + $0x18] sm:$0xff]
      %v2139 = vld [vmem:[%s1 + $0x20] sm:$0xff]
      %v2140 = vld [vmem:[%s1 + $0x28] sm:$0xff]
      %v2141 = vld [vmem:[%s1 + $0x30] sm:$0xff]
      %v2142 = vld [vmem:[%s1 + $0x38] sm:$0xff]
      %v2143 = vld [vmem:[%s1 + $0x40] sm:$0xff]
      %vm2144 = vcmask 588800
      %v2146 = vsel %vm2144, %v2103, 0
      %v2149 = vsel %vm2144, %v2104, 0
      %v2152 = vsel %vm2144, %v2105, 0
      %v2155 = vsel %vm2144, %v2106, 0
      %v2158 = vsel %vm2144, %v2107, 0
      %v2161 = vsel %vm2144, %v2108, 0
      %v2164 = vsel %vm2144, %v2109, 0
      %v2167 = vsel %vm2144, %v2110, 0
      %v2170 = vsel %vm2144, %v2111, 0
      %v2173 = vsel %vm2144, %v2112, 0
      %v2176 = vsel %vm2144, %v2113, 0
      %v2179 = vsel %vm2144, %v2114, 0
      %v2182 = vsel %vm2144, %v2115, 0
      %v2185 = vsel %vm2144, %v2116, 0
      %v2188 = vsel %vm2144, %v2117, 0
      %v2191 = vsel %vm2144, %v2118, 0
      %v2194 = vsel %vm2144, %v2119, 0
      %v2197 = vsel %vm2144, %v2120, 0
      %v2200 = vsel %vm2144, %v2121, 0
      %v2203 = vsel %vm2144, %v2122, 0
      %v2206 = vsel %vm2144, %v2123, 0
      %v2209 = vsel %vm2144, %v2124, 0
      %v2212 = vsel %vm2144, %v2125, 0
      %v2215 = vsel %vm2144, %v2126, 0
      %v2218 = vsel %vm2144, %v2127, 0
      %v2221 = vsel %vm2144, %v2128, 0
      %v2224 = vsel %vm2144, %v2129, 0
      %v2227 = vsel %vm2144, %v2130, 0
      %v2230 = vsel %vm2144, %v2131, 0
      %v2233 = vsel %vm2144, %v2132, 0
      %v2236 = vsel %vm2144, %v2133, 0
      %v2239 = vsel %vm2144, %v2134, 0
      %2241 = vmatpush.msra.mxu0 0.0
      %2242 = vmatpush.msra.mxu0 0.0
      %2243 = vmatpush.msra.mxu0 0.0
      %2244 = vmatpush.msra.mxu0 0.0
      %2245 = vmatpush.msra.mxu0 0.0
      %2246 = vmatpush.msra.mxu0 0.0
      %2247 = vmatpush.msra.mxu0 0.0
      %2248 = vmatpush.msra.mxu0 %v2143
      %2249 = vmatpush.msra.mxu0 %v2142
      %2250 = vmatpush.msra.mxu0 %v2141
      %2251 = vmatpush.msra.mxu0 %v2140
      %2252 = vmatpush.msra.mxu0 %v2139
      %2253 = vmatpush.msra.mxu0 %v2138
      %2254 = vmatpush.msra.mxu0 %v2137
      %2255 = vmatpush.msra.mxu0 %v2136
      %2256 = vmatpush.msra.mxu0 %v2135
      %2257 = vmatmul.f32.gmra.mxu0 %v2146
      %v2258 = vpop.f32.mrf.mxu0
      %v2259 = vadd.f32 0.0, %v2258
      %2260 = vmatmul.f32.gmra.mxu0 %v2149
      %v2261 = vpop.f32.mrf.mxu0
      %v2262 = vadd.f32 0.0, %v2261
      %2263 = vmatmul.f32.gmra.mxu0 %v2152
      %v2264 = vpop.f32.mrf.mxu0
      %v2265 = vadd.f32 0.0, %v2264
      %2266 = vmatmul.f32.gmra.mxu0 %v2155
      %v2267 = vpop.f32.mrf.mxu0
      %v2268 = vadd.f32 0.0, %v2267
      %2269 = vmatmul.f32.gmra.mxu0 %v2158
      %v2270 = vpop.f32.mrf.mxu0
      %v2271 = vadd.f32 0.0, %v2270
      %2272 = vmatmul.f32.gmra.mxu0 %v2161
      %v2273 = vpop.f32.mrf.mxu0
      %v2274 = vadd.f32 0.0, %v2273
      %2275 = vmatmul.f32.gmra.mxu0 %v2164
      %v2276 = vpop.f32.mrf.mxu0
      %v2277 = vadd.f32 0.0, %v2276
      %2278 = vmatmul.f32.gmra.mxu0 %v2167
      %v2279 = vpop.f32.mrf.mxu0
      %v2280 = vadd.f32 0.0, %v2279
      %2281 = vmatmul.f32.gmra.mxu0 %v2170
      %v2282 = vpop.f32.mrf.mxu0
      %v2283 = vadd.f32 0.0, %v2282
      %2284 = vmatmul.f32.gmra.mxu0 %v2173
      %v2285 = vpop.f32.mrf.mxu0
      %v2286 = vadd.f32 0.0, %v2285
      %2287 = vmatmul.f32.gmra.mxu0 %v2176
      %v2288 = vpop.f32.mrf.mxu0
      %v2289 = vadd.f32 0.0, %v2288
      %2290 = vmatmul.f32.gmra.mxu0 %v2179
      %v2291 = vpop.f32.mrf.mxu0
      %v2292 = vadd.f32 0.0, %v2291
      %2293 = vmatmul.f32.gmra.mxu0 %v2182
      %v2294 = vpop.f32.mrf.mxu0
      %v2295 = vadd.f32 0.0, %v2294
      %2296 = vmatmul.f32.gmra.mxu0 %v2185
      %v2297 = vpop.f32.mrf.mxu0
      %v2298 = vadd.f32 0.0, %v2297
      %2299 = vmatmul.f32.gmra.mxu0 %v2188
      %v2300 = vpop.f32.mrf.mxu0
      %v2301 = vadd.f32 0.0, %v2300
      %2302 = vmatmul.f32.gmra.mxu0 %v2191
      %v2303 = vpop.f32.mrf.mxu0
      %v2304 = vadd.f32 0.0, %v2303
      %2305 = vmatmul.f32.gmra.mxu0 %v2194
      %v2306 = vpop.f32.mrf.mxu0
      %v2307 = vadd.f32 0.0, %v2306
      %2308 = vmatmul.f32.gmra.mxu0 %v2197
      %v2309 = vpop.f32.mrf.mxu0
      %v2310 = vadd.f32 0.0, %v2309
      %2311 = vmatmul.f32.gmra.mxu0 %v2200
      %v2312 = vpop.f32.mrf.mxu0
      %v2313 = vadd.f32 0.0, %v2312
      %2314 = vmatmul.f32.gmra.mxu0 %v2203
      %v2315 = vpop.f32.mrf.mxu0
      %v2316 = vadd.f32 0.0, %v2315
      %2317 = vmatmul.f32.gmra.mxu0 %v2206
      %v2318 = vpop.f32.mrf.mxu0
      %v2319 = vadd.f32 0.0, %v2318
      %2320 = vmatmul.f32.gmra.mxu0 %v2209
      %v2321 = vpop.f32.mrf.mxu0
      %v2322 = vadd.f32 0.0, %v2321
      %2323 = vmatmul.f32.gmra.mxu0 %v2212
      %v2324 = vpop.f32.mrf.mxu0
      %v2325 = vadd.f32 0.0, %v2324
      %2326 = vmatmul.f32.gmra.mxu0 %v2215
      %v2327 = vpop.f32.mrf.mxu0
      %v2328 = vadd.f32 0.0, %v2327
      %2329 = vmatmul.f32.gmra.mxu0 %v2218
      %v2330 = vpop.f32.mrf.mxu0
      %v2331 = vadd.f32 0.0, %v2330
      %2332 = vmatmul.f32.gmra.mxu0 %v2221
      %v2333 = vpop.f32.mrf.mxu0
      %v2334 = vadd.f32 0.0, %v2333
      %2335 = vmatmul.f32.gmra.mxu0 %v2224
      %v2336 = vpop.f32.mrf.mxu0
      %v2337 = vadd.f32 0.0, %v2336
      %2338 = vmatmul.f32.gmra.mxu0 %v2227
      %v2339 = vpop.f32.mrf.mxu0
      %v2340 = vadd.f32 0.0, %v2339
      %2341 = vmatmul.f32.gmra.mxu0 %v2230
      %v2342 = vpop.f32.mrf.mxu0
      %v2343 = vadd.f32 0.0, %v2342
      %2344 = vmatmul.f32.gmra.mxu0 %v2233
      %v2345 = vpop.f32.mrf.mxu0
      %v2346 = vadd.f32 0.0, %v2345
      %2347 = vmatmul.f32.gmra.mxu0 %v2236
      %v2348 = vpop.f32.mrf.mxu0
      %v2349 = vadd.f32 0.0, %v2348
      %2350 = vmatmul.f32.gmra.mxu0 %v2239
      %v2351 = vpop.f32.mrf.mxu0
      %v2352 = vadd.f32 0.0, %v2351
      %2353 = vdwg.mxu0
      %2354 = vst.msk [vmem:[%s262] sm:$0xff] %vm405, %v2259
      %2355 = vst.msk [vmem:[%s262 + $0x8] sm:$0xff] %vm405, %v2262
      %2356 = vst.msk [vmem:[%s262 + $0x10] sm:$0xff] %vm405, %v2265
      %2357 = vst.msk [vmem:[%s262 + $0x18] sm:$0xff] %vm405, %v2268
      %2358 = vst.msk [vmem:[%s262 + $0x20] sm:$0xff] %vm405, %v2271
      %2359 = vst.msk [vmem:[%s262 + $0x28] sm:$0xff] %vm405, %v2274
      %2360 = vst.msk [vmem:[%s262 + $0x30] sm:$0xff] %vm405, %v2277
      %2361 = vst.msk [vmem:[%s262 + $0x38] sm:$0xff] %vm405, %v2280
      %2362 = vst.msk [vmem:[%s262 + $0x40] sm:$0xff] %vm405, %v2283
      %2363 = vst.msk [vmem:[%s262 + $0x48] sm:$0xff] %vm405, %v2286
      %2364 = vst.msk [vmem:[%s262 + $0x50] sm:$0xff] %vm405, %v2289
      %2365 = vst.msk [vmem:[%s262 + $0x58] sm:$0xff] %vm405, %v2292
      %2366 = vst.msk [vmem:[%s262 + $0x60] sm:$0xff] %vm405, %v2295
      %2367 = vst.msk [vmem:[%s262 + $0x68] sm:$0xff] %vm405, %v2298
      %2368 = vst.msk [vmem:[%s262 + $0x70] sm:$0xff] %vm405, %v2301
      %2369 = vst.msk [vmem:[%s262 + $0x78] sm:$0xff] %vm405, %v2304
      %2370 = vst.msk [vmem:[%s262 + $0x80] sm:$0xff] %vm405, %v2307
      %2371 = vst.msk [vmem:[%s262 + $0x88] sm:$0xff] %vm405, %v2310
      %2372 = vst.msk [vmem:[%s262 + $0x90] sm:$0xff] %vm405, %v2313
      %2373 = vst.msk [vmem:[%s262 + $0x98] sm:$0xff] %vm405, %v2316
      %2374 = vst.msk [vmem:[%s262 + $0xa0] sm:$0xff] %vm405, %v2319
      %2375 = vst.msk [vmem:[%s262 + $0xa8] sm:$0xff] %vm405, %v2322
      %2376 = vst.msk [vmem:[%s262 + $0xb0] sm:$0xff] %vm405, %v2325
      %2377 = vst.msk [vmem:[%s262 + $0xb8] sm:$0xff] %vm405, %v2328
      %2378 = vst.msk [vmem:[%s262 + $0xc0] sm:$0xff] %vm405, %v2331
      %2379 = vst.msk [vmem:[%s262 + $0xc8] sm:$0xff] %vm405, %v2334
      %2380 = vst.msk [vmem:[%s262 + $0xd0] sm:$0xff] %vm405, %v2337
      %2381 = vst.msk [vmem:[%s262 + $0xd8] sm:$0xff] %vm405, %v2340
      %2382 = vst.msk [vmem:[%s262 + $0xe0] sm:$0xff] %vm405, %v2343
      %2383 = vst.msk [vmem:[%s262 + $0xe8] sm:$0xff] %vm405, %v2346
      %2384 = vst.msk [vmem:[%s262 + $0xf0] sm:$0xff] %vm405, %v2349
      %2385 = vst.msk [vmem:[%s262 + $0xf8] sm:$0xff] %vm405, %v2352
      %v2386 = vsel %vm405, %v2259, 0.0
      %v2387 = vsel %vm405, %v2262, 0.0
      %v2388 = vadd.f32 %v2386, %v2387
      %v2389 = vsel %vm405, %v2265, 0.0
      %v2390 = vadd.f32 %v2388, %v2389
      %v2391 = vsel %vm405, %v2268, 0.0
      %v2392 = vadd.f32 %v2390, %v2391
      %v2393 = vsel %vm405, %v2271, 0.0
      %v2394 = vadd.f32 %v2392, %v2393
      %v2395 = vsel %vm405, %v2274, 0.0
      %v2396 = vadd.f32 %v2394, %v2395
      %v2397 = vsel %vm405, %v2277, 0.0
      %v2398 = vadd.f32 %v2396, %v2397
      %v2399 = vsel %vm405, %v2280, 0.0
      %v2400 = vadd.f32 %v2398, %v2399
      %v2401 = vsel %vm405, %v2283, 0.0
      %v2402 = vadd.f32 %v2400, %v2401
      %v2403 = vsel %vm405, %v2286, 0.0
      %v2404 = vadd.f32 %v2402, %v2403
      %v2405 = vsel %vm405, %v2289, 0.0
      %v2406 = vadd.f32 %v2404, %v2405
      %v2407 = vsel %vm405, %v2292, 0.0
      %v2408 = vadd.f32 %v2406, %v2407
      %v2409 = vsel %vm405, %v2295, 0.0
      %v2410 = vadd.f32 %v2408, %v2409
      %v2411 = vsel %vm405, %v2298, 0.0
      %v2412 = vadd.f32 %v2410, %v2411
      %v2413 = vsel %vm405, %v2301, 0.0
      %v2414 = vadd.f32 %v2412, %v2413
      %v2415 = vsel %vm405, %v2304, 0.0
      %v2416 = vadd.f32 %v2414, %v2415
      %v2417 = vsel %vm405, %v2307, 0.0
      %v2418 = vadd.f32 %v2416, %v2417
      %v2419 = vsel %vm405, %v2310, 0.0
      %v2420 = vadd.f32 %v2418, %v2419
      %v2421 = vsel %vm405, %v2313, 0.0
      %v2422 = vadd.f32 %v2420, %v2421
      %v2423 = vsel %vm405, %v2316, 0.0
      %v2424 = vadd.f32 %v2422, %v2423
      %v2425 = vsel %vm405, %v2319, 0.0
      %v2426 = vadd.f32 %v2424, %v2425
      %v2427 = vsel %vm405, %v2322, 0.0
      %v2428 = vadd.f32 %v2426, %v2427
      %v2429 = vsel %vm405, %v2325, 0.0
      %v2430 = vadd.f32 %v2428, %v2429
      %v2431 = vsel %vm405, %v2328, 0.0
      %v2432 = vadd.f32 %v2430, %v2431
      %v2433 = vsel %vm405, %v2331, 0.0
      %v2434 = vadd.f32 %v2432, %v2433
      %v2435 = vsel %vm405, %v2334, 0.0
      %v2436 = vadd.f32 %v2434, %v2435
      %v2437 = vsel %vm405, %v2337, 0.0
      %v2438 = vadd.f32 %v2436, %v2437
      %v2439 = vsel %vm405, %v2340, 0.0
      %v2440 = vadd.f32 %v2438, %v2439
      %v2441 = vsel %vm405, %v2343, 0.0
      %v2442 = vadd.f32 %v2440, %v2441
      %v2443 = vsel %vm405, %v2346, 0.0
      %v2444 = vadd.f32 %v2442, %v2443
      %v2445 = vsel %vm405, %v2349, 0.0
      %v2446 = vadd.f32 %v2444, %v2445
      %v2447 = vsel %vm405, %v2352, 0.0
      %v2448 = vadd.f32 %v2446, %v2447
      %v2449 = vrot.slane %v2448, 4
      %v2450 = vadd.f32 %v2448, %v2449
      %v2451 = vrot.slane %v2450, 2
      %v2452 = vadd.f32 %v2450, %v2451
      %v2453 = vrot.slane %v2452, 1
      %v2454 = vadd.f32 %v2452, %v2453
      %vm2455 = vcmask 57344
      %2456 = vst.msk [vmem:[%s265] sm:$0x1] %vm2455, %v2454
      %v2457 = vmul.f32 %v2259, %v2259
      %v2458 = vmul.f32 %v2262, %v2262
      %v2459 = vmul.f32 %v2265, %v2265
      %v2460 = vmul.f32 %v2268, %v2268
      %v2461 = vmul.f32 %v2271, %v2271
      %v2462 = vmul.f32 %v2274, %v2274
      %v2463 = vmul.f32 %v2277, %v2277
      %v2464 = vmul.f32 %v2280, %v2280
      %v2465 = vmul.f32 %v2283, %v2283
      %v2466 = vmul.f32 %v2286, %v2286
      %v2467 = vmul.f32 %v2289, %v2289
      %v2468 = vmul.f32 %v2292, %v2292
      %v2469 = vmul.f32 %v2295, %v2295
      %v2470 = vmul.f32 %v2298, %v2298
      %v2471 = vmul.f32 %v2301, %v2301
      %v2472 = vmul.f32 %v2304, %v2304
      %v2473 = vmul.f32 %v2307, %v2307
      %v2474 = vmul.f32 %v2310, %v2310
      %v2475 = vmul.f32 %v2313, %v2313
      %v2476 = vmul.f32 %v2316, %v2316
      %v2477 = vmul.f32 %v2319, %v2319
      %v2478 = vmul.f32 %v2322, %v2322
      %v2479 = vmul.f32 %v2325, %v2325
      %v2480 = vmul.f32 %v2328, %v2328
      %v2481 = vmul.f32 %v2331, %v2331
      %v2482 = vmul.f32 %v2334, %v2334
      %v2483 = vmul.f32 %v2337, %v2337
      %v2484 = vmul.f32 %v2340, %v2340
      %v2485 = vmul.f32 %v2343, %v2343
      %v2486 = vmul.f32 %v2346, %v2346
      %v2487 = vmul.f32 %v2349, %v2349
      %v2488 = vmul.f32 %v2352, %v2352
      %v2489 = vsel %vm405, %v2457, 0.0
      %v2490 = vsel %vm405, %v2458, 0.0
      %v2491 = vadd.f32 %v2489, %v2490
      %v2492 = vsel %vm405, %v2459, 0.0
      %v2493 = vadd.f32 %v2491, %v2492
      %v2494 = vsel %vm405, %v2460, 0.0
      %v2495 = vadd.f32 %v2493, %v2494
      %v2496 = vsel %vm405, %v2461, 0.0
      %v2497 = vadd.f32 %v2495, %v2496
      %v2498 = vsel %vm405, %v2462, 0.0
      %v2499 = vadd.f32 %v2497, %v2498
      %v2500 = vsel %vm405, %v2463, 0.0
      %v2501 = vadd.f32 %v2499, %v2500
      %v2502 = vsel %vm405, %v2464, 0.0
      %v2503 = vadd.f32 %v2501, %v2502
      %v2504 = vsel %vm405, %v2465, 0.0
      %v2505 = vadd.f32 %v2503, %v2504
      %v2506 = vsel %vm405, %v2466, 0.0
      %v2507 = vadd.f32 %v2505, %v2506
      %v2508 = vsel %vm405, %v2467, 0.0
      %v2509 = vadd.f32 %v2507, %v2508
      %v2510 = vsel %vm405, %v2468, 0.0
      %v2511 = vadd.f32 %v2509, %v2510
      %v2512 = vsel %vm405, %v2469, 0.0
      %v2513 = vadd.f32 %v2511, %v2512
      %v2514 = vsel %vm405, %v2470, 0.0
      %v2515 = vadd.f32 %v2513, %v2514
      %v2516 = vsel %vm405, %v2471, 0.0
      %v2517 = vadd.f32 %v2515, %v2516
      %v2518 = vsel %vm405, %v2472, 0.0
      %v2519 = vadd.f32 %v2517, %v2518
      %v2520 = vsel %vm405, %v2473, 0.0
      %v2521 = vadd.f32 %v2519, %v2520
      %v2522 = vsel %vm405, %v2474, 0.0
      %v2523 = vadd.f32 %v2521, %v2522
      %v2524 = vsel %vm405, %v2475, 0.0
      %v2525 = vadd.f32 %v2523, %v2524
      %v2526 = vsel %vm405, %v2476, 0.0
      %v2527 = vadd.f32 %v2525, %v2526
      %v2528 = vsel %vm405, %v2477, 0.0
      %v2529 = vadd.f32 %v2527, %v2528
      %v2530 = vsel %vm405, %v2478, 0.0
      %v2531 = vadd.f32 %v2529, %v2530
      %v2532 = vsel %vm405, %v2479, 0.0
      %v2533 = vadd.f32 %v2531, %v2532
      %v2534 = vsel %vm405, %v2480, 0.0
      %v2535 = vadd.f32 %v2533, %v2534
      %v2536 = vsel %vm405, %v2481, 0.0
      %v2537 = vadd.f32 %v2535, %v2536
      %v2538 = vsel %vm405, %v2482, 0.0
      %v2539 = vadd.f32 %v2537, %v2538
      %v2540 = vsel %vm405, %v2483, 0.0
      %v2541 = vadd.f32 %v2539, %v2540
      %v2542 = vsel %vm405, %v2484, 0.0
      %v2543 = vadd.f32 %v2541, %v2542
      %v2544 = vsel %vm405, %v2485, 0.0
      %v2545 = vadd.f32 %v2543, %v2544
      %v2546 = vsel %vm405, %v2486, 0.0
      %v2547 = vadd.f32 %v2545, %v2546
      %v2548 = vsel %vm405, %v2487, 0.0
      %v2549 = vadd.f32 %v2547, %v2548
      %v2550 = vsel %vm405, %v2488, 0.0
      %v2551 = vadd.f32 %v2549, %v2550
      %v2552 = vrot.slane %v2551, 4
      %v2553 = vadd.f32 %v2551, %v2552
      %v2554 = vrot.slane %v2553, 2
      %v2555 = vadd.f32 %v2553, %v2554
      %v2556 = vrot.slane %v2555, 1
      %v2557 = vadd.f32 %v2555, %v2556
      %2558 = vst.msk [vmem:[%s268] sm:$0x1] %vm2455, %v2557
      %p2559 = scmp.lt.s32.totalorder %s18, 1
      %s2560 = scalar_select %p2559, %s18, 1
      %s2561 = smul.addr %s2560, 32
      %s2562 = smul.addr %s2561, 8
      %s2563 = scalar_lea.vmem %s4, %s2562
      %p2564 = scmp.lt.s32.totalorder %s18, 1
      %s2565 = scalar_select %p2564, %s18, 1
      %s2566 = scalar_lea.vmem %s5, %s2565
      %p2567 = scmp.lt.s32.totalorder %s18, 1
      %s2568 = scalar_select %p2567, %s18, 1
      %s2569 = scalar_lea.vmem %s6, %s2568
      // Predicated region
      $region37: #{double_conv.4} parent=35 // pred_check
        %p2570 = pneg %p125
      $region38: #{double_conv.4} parent=35 // pred_check_branch
        %2572 = sbr.rel (%p2570) target = $region40
      $region39: #{double_conv.4} parent=35 // pred_region
        _
      $region40: #{double_conv.4} parent=35 // pred_fallthru
        _
      // Predicated region
      $region41: #{double_conv.4} parent=35 // pred_check
        %p2573 = pneg %p151
      $region42: #{double_conv.4} parent=35 // pred_check_branch
        %2575 = sbr.rel (%p2573) target = $region44
      $region43: #{double_conv.4} parent=35 // pred_region
        _
      $region44: #{double_conv.4} parent=35 // pred_fallthru
        _
      // Predicated region
      $region45: #{double_conv.4} parent=35 // pred_check
        %p2576 = pneg %p177
      $region46: #{double_conv.4} parent=35 // pred_check_branch
        %2578 = sbr.rel (%p2576) target = $region48
      $region47: #{double_conv.4} parent=35 // pred_region
        _
      $region48: #{double_conv.4} parent=35 // pred_fallthru
        _
    $region36: #{double_conv.4} parent=5 // pred_fallthru
      _
    %p2579 = scmp.le.s32.totalorder 2, %s13
    // Predicated region
    $region49: #{double_conv.4} parent=5 // pred_check
      %p2580 = pneg %p2579
    $region50: #{double_conv.4} parent=5 // pred_check_branch
      %2582 = sbr.rel (%p2580) target = $region52
    $region51: #{double_conv.4} parent=5 // pred_region
      %s2583 = ssub.s32 %s13, 2
      // Predicated region
      $region53: #{double_conv.4} parent=51 // pred_check
        %p2584 = pneg %p131
      $region54: #{double_conv.4} parent=51 // pred_check_branch
        %2586 = sbr.rel (%p2584) target = $region56
      $region55: #{double_conv.4} parent=51 // pred_region
        %p2587 = scmp.lt.s32.totalorder %s19, 1
        %s2588 = scalar_select %p2587, %s19, 1
        %s2589 = smul.addr %s2588, 32
        %s2590 = smul.addr %s2589, 8
        %s2591 = scalar_lea.vmem %s4, %s2590
      $region56: #{double_conv.4} parent=51 // pred_fallthru
        _
      // Predicated region
      $region57: #{double_conv.4} parent=51 // pred_check
        %p2592 = pneg %p157
      $region58: #{double_conv.4} parent=51 // pred_check_branch
        %2594 = sbr.rel (%p2592) target = $region60
      $region59: #{double_conv.4} parent=51 // pred_region
        %p2595 = scmp.lt.s32.totalorder %s19, 1
        %s2596 = scalar_select %p2595, %s19, 1
        %s2597 = scalar_lea.vmem %s5, %s2596
      $region60: #{double_conv.4} parent=51 // pred_fallthru
        _
      // Predicated region
      $region61: #{double_conv.4} parent=51 // pred_check
        %p2598 = pneg %p183
      $region62: #{double_conv.4} parent=51 // pred_check_branch
        %2600 = sbr.rel (%p2598) target = $region64
      $region63: #{double_conv.4} parent=51 // pred_region
        %p2601 = scmp.lt.s32.totalorder %s19, 1
        %s2602 = scalar_select %p2601, %s19, 1
        %s2603 = scalar_lea.vmem %s6, %s2602
      $region64: #{double_conv.4} parent=51 // pred_fallthru
        _
    $region52: #{double_conv.4} parent=5 // pred_fallthru
      _
  $region6: #{double_conv.4} parent=0 // loop_footer
    %s17 = sadd.s32 1, %s13
  $region7: #{double_conv.4} parent=0 // loop_footer_branch
    %12 = sbr.rel target = $region3
  $region8: #{double_conv.4} parent=0 // loop_exit
    _

</llo_original>
